<compile_context>
chip_gen: v7x
topology: tpu7x:2x2x1
jax: 0.10.0
libtpu: 0.0.40
codegen_flags: <defaults>
</compile_context>

<pallas_src>
import functools

import jax
import jax.numpy as jnp
from jax import lax
from jax.experimental import pallas as pl
from jax.experimental.pallas import tpu as pltpu  # noqa: F401  (kept for TPU backend)

# ----------------------------- "args" config ---------------------------------
USER = 8
ITEM = 16
LATDIM = 32
HEAD = 4
GCN_LAYER = 2
GT_LAYER = 2
M_RATE = 0.5
IMG_DIM = 64
TXT_DIM = 48
N_NODES = USER + ITEM
N_EDGES = 48                     # decoderAdj nnz
FEAT_DIM = IMG_DIM + TXT_DIM     # packed (img | txt) raw feature dim
LAT2 = 2 * LATDIM                # packed (img | txt) latent dim


# ----------------------------- fused Pallas kernel ----------------------------
def _make_fused_kernel(num_gt):
    """Single kernel for the whole forward pass."""

    def kernel(*refs):
        if num_gt > 0:
            (feats_ref, w_ref, b_ref, ui_ref, iu_ref, cl0_ref, enc_ref,
             q_ref, k_ref, v_ref, grow_ref, gcol_ref, scat_ref, pool_ref,
             modsum_ref, addmat_ref, out_ref) = refs
        else:
            (feats_ref, w_ref, b_ref, ui_ref, iu_ref, cl0_ref, enc_ref,
             modsum_ref, addmat_ref, out_ref) = refs

        dot = lambda a, b: jnp.dot(a, b, preferred_element_type=jnp.float32)

        # ---- modality projections: img|txt packed along lanes (block-diag W) -
        feats_proj = dot(feats_ref[...], w_ref[...]) + b_ref[...]   # (ITEM, 2D)
        # one ui matmul and one iu matmul instead of four
        u_feats = dot(ui_ref[...], feats_proj)                      # (USER, 2D)
        i_feats = dot(iu_ref[...], u_feats)                         # (ITEM, 2D)

        # ---- GCN stack with in-register residual accumulation ----------------
        enc = enc_ref[...]                                          # (N, N)
        cl = cl0_ref[...]                                           # (N, D)
        acc = cl
        for _ in range(GCN_LAYER):
            cl = dot(enc, cl)
            acc = acc + cl

        # ---- graph-transformer layers, chained on VMEM-resident cl -----------
        if num_gt > 0:
            grow = grow_ref[...]   # (E, N) one-hot row gather
            gcol = gcol_ref[...]   # (E, N) one-hot col gather
            scat = scat_ref[...]   # (N, E) scatter (= grow.T) -> index_add_
            pool = pool_ref[...]   # (D, D) block-diag "sum within head"
            for l in range(num_gt):
                row_e = dot(grow, cl)                               # embeds[rows]
                col_e = dot(gcol, cl)                               # embeds[cols]
                qE = dot(row_e, q_ref[l])
                kE = dot(col_e, k_ref[l])
                vE = dot(col_e, v_ref[l])
                # per-head score broadcast back to D lanes (no HEAD-wide tensors)
                att = jnp.clip(dot(qE * kE, pool), -10.0, 10.0)     # (E, D)
                exp_att = jnp.exp(att)
                att_norm = dot(scat, exp_att)                       # (N, D)
                gathered = dot(grow, att_norm)                      # attNorm[rows]
                att = exp_att / (gathered + 1e-8)
                cl = dot(scat, att * vE)                            # (N, D)
                acc = acc + cl

        # ---- modality combine: per-modality L2 normalize, then img_n + txt_n -
        modsum = modsum_ref[...]   # (2D, 2D) block-diag per-modality sum
        addmat = addmat_ref[...]   # (2D, D)  [I; I] -> img_n + txt_n

        def combine(feats):
            ssq = dot(feats * feats, modsum)                        # per-half |.|^2
            inv = lax.rsqrt(jnp.maximum(ssq, 1e-24))                # EUP rsqrt
            return dot(feats * inv, addmat)                         # (rows, D)

        out_ref[pl.ds(0, USER), :] = acc[:USER, :] + M_RATE * combine(u_feats)
        out_ref[pl.ds(USER, ITEM), :] = acc[USER:, :] + M_RATE * combine(i_feats)

    return kernel


def _full_spec(shape):
    # whole array as a single VMEM block (block == full dims satisfies tiling rules)
    return pl.BlockSpec(shape, lambda i, _nd=len(shape): (0,) * _nd)


def _forward_impl(feats_packed, w_block, b_packed, ui_graph, iu_graph, cl0,
                  encoder_adj, q_all, k_all, v_all, pool, modsum, addmat,
                  decoder_rows, decoder_cols, *, num_gt):
    if num_gt > 0:
        grow = jax.nn.one_hot(decoder_rows, N_NODES, dtype=jnp.float32)  # (E, N)
        gcol = jax.nn.one_hot(decoder_cols, N_NODES, dtype=jnp.float32)  # (E, N)
        scat = grow.T                                                    # (N, E)
        inputs = (feats_packed, w_block, b_packed, ui_graph, iu_graph, cl0,
                  encoder_adj, q_all, k_all, v_all, grow, gcol, scat,
                  pool, modsum, addmat)
    else:
        inputs = (feats_packed, w_block, b_packed, ui_graph, iu_graph, cl0,
                  encoder_adj, modsum, addmat)

    out = pl.pallas_call(
        _make_fused_kernel(num_gt),
        out_shape=jax.ShapeDtypeStruct((N_NODES, LATDIM), jnp.float32),
        grid=(1,),
        in_specs=[_full_spec(x.shape) for x in inputs],
        out_specs=_full_spec((N_NODES, LATDIM)),
    )(*inputs)
    return out[:USER], out[USER:]


_fused_forward = jax.jit(_forward_impl, static_argnames=("num_gt",))


# ----------------------------- model (setup + glue) ---------------------------
def xavier(key, shape):
    fan_in, fan_out = shape[0], shape[1]
    bound = jnp.sqrt(6.0 / (fan_in + fan_out))
    return jax.random.uniform(key, shape, jnp.float32, -bound, bound)


def csr_norm_mean(mat):
    # csr_norm(..., mean_flag=True): D_row^{-1/2} @ mat
    rowsum = jnp.sum(mat, axis=1)
    scale = jnp.power(rowsum + 1e-8, -0.5)
    scale = jnp.where(jnp.isinf(scale), 0.0, scale)
    return scale[:, None] * mat


class PallasModel:
    def __init__(self, key, trn_mat, image_feats, text_feats):
        self.ui_graph = csr_norm_mean(trn_mat)            # (USER, ITEM)
        self.iu_graph = csr_norm_mean(trn_mat.T)          # (ITEM, USER)
        self.img_feats = image_feats.astype(jnp.float32)  # (ITEM, IMG_DIM)
        self.txt_feats = text_feats.astype(jnp.float32)   # (ITEM, TXT_DIM)

        keys = jax.random.split(key, 6 + 3 * GT_LAYER)
        self.u_embeds = xavier(keys[0], (USER, LATDIM))
        self.i_embeds = xavier(keys[1], (ITEM, LATDIM))
        self.img_w = xavier(keys[2], (IMG_DIM, LATDIM))
        self.img_b = jax.random.uniform(keys[3], (LATDIM,), jnp.float32, -0.1, 0.1)
        self.txt_w = xavier(keys[4], (TXT_DIM, LATDIM))
        self.txt_b = jax.random.uniform(keys[5], (LATDIM,), jnp.float32, -0.1, 0.1)
        self.gt_params = []
        for l in range(GT_LAYER):
            kq, kk, kv = keys[6 + 3 * l], keys[7 + 3 * l], keys[8 + 3 * l]
            self.gt_params.append((xavier(kq, (LATDIM, LATDIM)),
                                   xavier(kk, (LATDIM, LATDIM)),
                                   xavier(kv, (LATDIM, LATDIM))))

        # ---- precomputed packed / constant operands for the fused kernel ----
        # img|txt features packed along lanes + block-diagonal projection weight
        self.feats_packed = jnp.concatenate([self.img_feats, self.txt_feats], axis=1)
        wb = jnp.zeros((FEAT_DIM, LAT2), jnp.float32)
        wb = wb.at[:IMG_DIM, :LATDIM].set(self.img_w)
        wb = wb.at[IMG_DIM:, LATDIM:].set(self.txt_w)
        self.w_block = wb
        self.b_packed = jnp.concatenate([self.img_b, self.txt_b]).reshape(1, LAT2)

        self.cl0 = jnp.concatenate([self.u_embeds, self.i_embeds], axis=0)  # (N, D)
        self.q_all = jnp.stack([p[0] for p in self.gt_params])              # (L, D, D)
        self.k_all = jnp.stack([p[1] for p in self.gt_params])
        self.v_all = jnp.stack([p[2] for p in self.gt_params])

        # "sum within head" (D, D): pool[d1, d2] = 1 iff same head
        head_id = jnp.arange(LATDIM) // (LATDIM // HEAD)
        self.pool = (head_id[:, None] == head_id[None, :]).astype(jnp.float32)
        # "sum within modality" (2D, 2D) and "add halves" (2D, D)
        mod_id = jnp.arange(LAT2) // LATDIM
        self.modsum = (mod_id[:, None] == mod_id[None, :]).astype(jnp.float32)
        eye = jnp.eye(LATDIM, dtype=jnp.float32)
        self.addmat = jnp.concatenate([eye, eye], axis=0)

    def forward(self, encoder_adj, decoder_rows=None, decoder_cols=None):
        num_gt = GT_LAYER if decoder_rows is not None else 0
        return _fused_forward(self.feats_packed, self.w_block, self.b_packed,
                              self.ui_graph, self.iu_graph, self.cl0, encoder_adj,
                              self.q_all, self.k_all, self.v_all,
                              self.pool, self.modsum, self.addmat,
                              decoder_rows, decoder_cols, num_gt=num_gt)


# ----------------------------- pure-JAX reference -----------------------------
def reference_forward(model, encoder_adj, rows, cols):
    hp = lax.Precision.HIGHEST
    mm = lambda a, b: jnp.matmul(a, b, precision=hp)
    img = mm(model.img_feats, model.img_w) + model.img_b
    txt = mm(model.txt_feats, model.txt_w) + model.txt_b
    img_u = mm(model.ui_graph, img); img_i = mm(model.iu_graph, img_u)
    txt_u = mm(model.ui_graph, txt); txt_i = mm(model.iu_graph, txt_u)
    cl = jnp.concatenate([model.u_embeds, model.i_embeds], axis=0)
    lst = [cl]
    for _ in range(GCN_LAYER):
        lst.append(mm(encoder_adj, lst[-1]))
    for (q, k, v) in model.gt_params:
        emb = lst[-1]
        re_, ce = emb[rows], emb[cols]
        qE = mm(re_, q).reshape(-1, HEAD, LATDIM // HEAD)
        kE = mm(ce, k).reshape(-1, HEAD, LATDIM // HEAD)
        vE = mm(ce, v).reshape(-1, HEAD, LATDIM // HEAD)
        att = jnp.clip(jnp.einsum('ehd,ehd->eh', qE, kE, precision=hp), -10.0, 10.0)
        ea = jnp.exp(att)
        an = jax.ops.segment_sum(ea, rows, num_segments=N_NODES)[rows]
        att = ea / (an + 1e-8)
        res = (att[:, :, None] * vE).reshape(-1, LATDIM)
        lst.append(jax.ops.segment_sum(res, rows, num_segments=N_NODES))
    cl = sum(lst)

    def l2(x):
        n = jnp.sqrt(jnp.sum(x * x, axis=1, keepdims=True))
        return x / jnp.maximum(n, 1e-12)

    u = cl[:USER] + M_RATE * (l2(img_u) + l2(txt_u))
    i = cl[USER:] + M_RATE * (l2(img_i) + l2(txt_i))
    return u, i


# ----------------------------- main -------------------------------------------
if __name__ == "__main__":
    key = jax.random.PRNGKey(0)
    k_trn, k_img, k_txt, k_params, k_enc, k_rows, k_cols = jax.random.split(key, 7)

    # user-item interaction matrix (dense 0/1 stand-in for the scipy csr matrix)
    trn_mat = jax.random.bernoulli(k_trn, 0.3, (USER, ITEM)).astype(jnp.float32)
    image_feats = jax.random.normal(k_img, (ITEM, IMG_DIM), jnp.float32)
    text_feats = jax.random.normal(k_txt, (ITEM, TXT_DIM), jnp.float32)

    model = PallasModel(k_params, trn_mat, image_feats, text_feats)

    # encoderAdj: symmetrically-normalized bipartite adjacency over user+item nodes
    a = jnp.zeros((N_NODES, N_NODES), jnp.float32)
    a = a.at[:USER, USER:].set(trn_mat)
    a = a.at[USER:, :USER].set(trn_mat.T)
    a = a + jnp.eye(N_NODES, dtype=jnp.float32)
    deg = jnp.sum(a, axis=1)
    dinv = jnp.power(deg + 1e-8, -0.5)
    encoder_adj = dinv[:, None] * a * dinv[None, :]

    # decoderAdj as an edge list (what torch sparse ._indices() would give)
    decoder_rows = jax.random.randint(k_rows, (N_EDGES,), 0, N_NODES)
    decoder_cols = jax.random.randint(k_cols, (N_EDGES,), 0, N_NODES)

    u_embeds, i_embeds = model.forward(encoder_adj, decoder_rows, decoder_cols)
    jax.block_until_ready((u_embeds, i_embeds))
    assert u_embeds.shape == (USER, LATDIM) and i_embeds.shape == (ITEM, LATDIM)

    # sanity check against a pure-JAX reference of the torch forward
    u_ref, i_ref = reference_forward(model, encoder_adj, decoder_rows, decoder_cols)
    assert bool(jnp.allclose(u_embeds, u_ref, atol=5e-2, rtol=5e-2))
    assert bool(jnp.allclose(i_embeds, i_ref, atol=5e-2, rtol=5e-2))

    print("KERNEL_OK")
</pallas_src>

<mosaic_0001>
module attributes {stable_mosaic.version = 11 : i64} {
  func.func @kernel(%arg0: i32, %arg1: memref<16x112xf32, #tpu.memory_space<vmem>>, %arg2: memref<112x64xf32, #tpu.memory_space<vmem>>, %arg3: memref<1x64xf32, #tpu.memory_space<vmem>>, %arg4: memref<8x16xf32, #tpu.memory_space<vmem>>, %arg5: memref<16x8xf32, #tpu.memory_space<vmem>>, %arg6: memref<24x32xf32, #tpu.memory_space<vmem>>, %arg7: memref<24x24xf32, #tpu.memory_space<vmem>>, %arg8: memref<2x32x32xf32, #tpu.memory_space<vmem>>, %arg9: memref<2x32x32xf32, #tpu.memory_space<vmem>>, %arg10: memref<2x32x32xf32, #tpu.memory_space<vmem>>, %arg11: memref<48x24xf32, #tpu.memory_space<vmem>>, %arg12: memref<48x24xf32, #tpu.memory_space<vmem>>, %arg13: memref<24x48xf32, #tpu.memory_space<vmem>>, %arg14: memref<32x32xf32, #tpu.memory_space<vmem>>, %arg15: memref<64x64xf32, #tpu.memory_space<vmem>>, %arg16: memref<64x32xf32, #tpu.memory_space<vmem>>, %arg17: memref<24x32xf32, #tpu.memory_space<vmem>>) attributes {dimension_semantics = [#tpu.dimension_semantics<arbitrary>], iteration_bounds = array<i64: 1>, scalar_prefetch = 0 : i64, scratch_operands = 0 : i64, tpu.core_type = #tpu.core_type<tc>, window_params = [{pipeline_mode = #tpu.pipeline_mode<synchronous>, transform_indices = @transform_0, window_bounds = array<i64: 16, 112>}, {pipeline_mode = #tpu.pipeline_mode<synchronous>, transform_indices = @transform_1, window_bounds = array<i64: 112, 64>}, {pipeline_mode = #tpu.pipeline_mode<synchronous>, transform_indices = @transform_2, window_bounds = array<i64: 1, 64>}, {pipeline_mode = #tpu.pipeline_mode<synchronous>, transform_indices = @transform_3, window_bounds = array<i64: 8, 16>}, {pipeline_mode = #tpu.pipeline_mode<synchronous>, transform_indices = @transform_4, window_bounds = array<i64: 16, 8>}, {pipeline_mode = #tpu.pipeline_mode<synchronous>, transform_indices = @transform_5, window_bounds = array<i64: 24, 32>}, {pipeline_mode = #tpu.pipeline_mode<synchronous>, transform_indices = @transform_6, window_bounds = array<i64: 24, 24>}, {pipeline_mode = #tpu.pipeline_mode<synchronous>, transform_indices = @transform_7, window_bounds = array<i64: 2, 32, 32>}, {pipeline_mode = #tpu.pipeline_mode<synchronous>, transform_indices = @transform_8, window_bounds = array<i64: 2, 32, 32>}, {pipeline_mode = #tpu.pipeline_mode<synchronous>, transform_indices = @transform_9, window_bounds = array<i64: 2, 32, 32>}, {pipeline_mode = #tpu.pipeline_mode<synchronous>, transform_indices = @transform_10, window_bounds = array<i64: 48, 24>}, {pipeline_mode = #tpu.pipeline_mode<synchronous>, transform_indices = @transform_11, window_bounds = array<i64: 48, 24>}, {pipeline_mode = #tpu.pipeline_mode<synchronous>, transform_indices = @transform_12, window_bounds = array<i64: 24, 48>}, {pipeline_mode = #tpu.pipeline_mode<synchronous>, transform_indices = @transform_13, window_bounds = array<i64: 32, 32>}, {pipeline_mode = #tpu.pipeline_mode<synchronous>, transform_indices = @transform_14, window_bounds = array<i64: 64, 64>}, {pipeline_mode = #tpu.pipeline_mode<synchronous>, transform_indices = @transform_15, window_bounds = array<i64: 64, 32>}, {pipeline_mode = #tpu.pipeline_mode<synchronous>, transform_indices = @transform_16, window_bounds = array<i64: 24, 32>}]} {
    %c0 = arith.constant 0 : index
    %c0_0 = arith.constant 0 : index
    %0 = vector.load %arg1[%c0, %c0_0] : memref<16x112xf32, #tpu.memory_space<vmem>>, vector<16x112xf32>
    %c0_1 = arith.constant 0 : index
    %c0_2 = arith.constant 0 : index
    %1 = vector.load %arg2[%c0_1, %c0_2] : memref<112x64xf32, #tpu.memory_space<vmem>>, vector<112x64xf32>
    %cst = arith.constant dense<0.000000e+00> : vector<16x64xf32>
    %2 = tpu.matmul %0, %1, %cst {dimension_numbers = #tpu.dot_dimension_numbers<[1], [0], [0], [1], [0, 0, 1, 1], [], []>} : vector<16x112xf32>, vector<112x64xf32>, vector<16x64xf32> -> vector<16x64xf32>
    %c0_3 = arith.constant 0 : index
    %c0_4 = arith.constant 0 : index
    %3 = vector.load %arg3[%c0_3, %c0_4] : memref<1x64xf32, #tpu.memory_space<vmem>>, vector<1x64xf32>
    %4 = vector.broadcast %3 : vector<1x64xf32> to vector<16x64xf32>
    %5 = arith.addf %2, %4 : vector<16x64xf32>
    %c0_5 = arith.constant 0 : index
    %c0_6 = arith.constant 0 : index
    %6 = vector.load %arg4[%c0_5, %c0_6] : memref<8x16xf32, #tpu.memory_space<vmem>>, vector<8x16xf32>
    %cst_7 = arith.constant dense<0.000000e+00> : vector<8x64xf32>
    %7 = tpu.matmul %6, %5, %cst_7 {dimension_numbers = #tpu.dot_dimension_numbers<[1], [0], [0], [1], [0, 0, 1, 1], [], []>} : vector<8x16xf32>, vector<16x64xf32>, vector<8x64xf32> -> vector<8x64xf32>
    %c0_8 = arith.constant 0 : index
    %c0_9 = arith.constant 0 : index
    %8 = vector.load %arg5[%c0_8, %c0_9] : memref<16x8xf32, #tpu.memory_space<vmem>>, vector<16x8xf32>
    %cst_10 = arith.constant dense<0.000000e+00> : vector<16x64xf32>
    %9 = tpu.matmul %8, %7, %cst_10 {dimension_numbers = #tpu.dot_dimension_numbers<[1], [0], [0], [1], [0, 0, 1, 1], [], []>} : vector<16x8xf32>, vector<8x64xf32>, vector<16x64xf32> -> vector<16x64xf32>
    %c0_11 = arith.constant 0 : index
    %c0_12 = arith.constant 0 : index
    %10 = vector.load %arg7[%c0_11, %c0_12] : memref<24x24xf32, #tpu.memory_space<vmem>>, vector<24x24xf32>
    %c0_13 = arith.constant 0 : index
    %c0_14 = arith.constant 0 : index
    %11 = vector.load %arg6[%c0_13, %c0_14] : memref<24x32xf32, #tpu.memory_space<vmem>>, vector<24x32xf32>
    %cst_15 = arith.constant dense<0.000000e+00> : vector<24x32xf32>
    %12 = tpu.matmul %10, %11, %cst_15 {dimension_numbers = #tpu.dot_dimension_numbers<[1], [0], [0], [1], [0, 0, 1, 1], [], []>} : vector<24x24xf32>, vector<24x32xf32>, vector<24x32xf32> -> vector<24x32xf32>
    %13 = arith.addf %11, %12 : vector<24x32xf32>
    %cst_16 = arith.constant dense<0.000000e+00> : vector<24x32xf32>
    %14 = tpu.matmul %10, %12, %cst_16 {dimension_numbers = #tpu.dot_dimension_numbers<[1], [0], [0], [1], [0, 0, 1, 1], [], []>} : vector<24x24xf32>, vector<24x32xf32>, vector<24x32xf32> -> vector<24x32xf32>
    %15 = arith.addf %13, %14 : vector<24x32xf32>
    %c0_17 = arith.constant 0 : index
    %c0_18 = arith.constant 0 : index
    %16 = vector.load %arg11[%c0_17, %c0_18] : memref<48x24xf32, #tpu.memory_space<vmem>>, vector<48x24xf32>
    %c0_19 = arith.constant 0 : index
    %c0_20 = arith.constant 0 : index
    %17 = vector.load %arg12[%c0_19, %c0_20] : memref<48x24xf32, #tpu.memory_space<vmem>>, vector<48x24xf32>
    %c0_21 = arith.constant 0 : index
    %c0_22 = arith.constant 0 : index
    %18 = vector.load %arg13[%c0_21, %c0_22] : memref<24x48xf32, #tpu.memory_space<vmem>>, vector<24x48xf32>
    %c0_23 = arith.constant 0 : index
    %c0_24 = arith.constant 0 : index
    %19 = vector.load %arg14[%c0_23, %c0_24] : memref<32x32xf32, #tpu.memory_space<vmem>>, vector<32x32xf32>
    %cst_25 = arith.constant dense<0.000000e+00> : vector<48x32xf32>
    %20 = tpu.matmul %16, %14, %cst_25 {dimension_numbers = #tpu.dot_dimension_numbers<[1], [0], [0], [1], [0, 0, 1, 1], [], []>} : vector<48x24xf32>, vector<24x32xf32>, vector<48x32xf32> -> vector<48x32xf32>
    %cst_26 = arith.constant dense<0.000000e+00> : vector<48x32xf32>
    %21 = tpu.matmul %17, %14, %cst_26 {dimension_numbers = #tpu.dot_dimension_numbers<[1], [0], [0], [1], [0, 0, 1, 1], [], []>} : vector<48x24xf32>, vector<24x32xf32>, vector<48x32xf32> -> vector<48x32xf32>
    %c0_27 = arith.constant 0 : index
    %c0_28 = arith.constant 0 : index
    %c0_29 = arith.constant 0 : index
    %22 = vector.load %arg8[%c0_27, %c0_28, %c0_29] : memref<2x32x32xf32, #tpu.memory_space<vmem>>, vector<1x32x32xf32>
    %23 = vector.shape_cast %22 : vector<1x32x32xf32> to vector<32x32xf32>
    %cst_30 = arith.constant dense<0.000000e+00> : vector<48x32xf32>
    %24 = tpu.matmul %20, %23, %cst_30 {dimension_numbers = #tpu.dot_dimension_numbers<[1], [0], [0], [1], [0, 0, 1, 1], [], []>} : vector<48x32xf32>, vector<32x32xf32>, vector<48x32xf32> -> vector<48x32xf32>
    %c0_31 = arith.constant 0 : index
    %c0_32 = arith.constant 0 : index
    %c0_33 = arith.constant 0 : index
    %25 = vector.load %arg9[%c0_31, %c0_32, %c0_33] : memref<2x32x32xf32, #tpu.memory_space<vmem>>, vector<1x32x32xf32>
    %26 = vector.shape_cast %25 : vector<1x32x32xf32> to vector<32x32xf32>
    %cst_34 = arith.constant dense<0.000000e+00> : vector<48x32xf32>
    %27 = tpu.matmul %21, %26, %cst_34 {dimension_numbers = #tpu.dot_dimension_numbers<[1], [0], [0], [1], [0, 0, 1, 1], [], []>} : vector<48x32xf32>, vector<32x32xf32>, vector<48x32xf32> -> vector<48x32xf32>
    %c0_35 = arith.constant 0 : index
    %c0_36 = arith.constant 0 : index
    %c0_37 = arith.constant 0 : index
    %28 = vector.load %arg10[%c0_35, %c0_36, %c0_37] : memref<2x32x32xf32, #tpu.memory_space<vmem>>, vector<1x32x32xf32>
    %29 = vector.shape_cast %28 : vector<1x32x32xf32> to vector<32x32xf32>
    %cst_38 = arith.constant dense<0.000000e+00> : vector<48x32xf32>
    %30 = tpu.matmul %21, %29, %cst_38 {dimension_numbers = #tpu.dot_dimension_numbers<[1], [0], [0], [1], [0, 0, 1, 1], [], []>} : vector<48x32xf32>, vector<32x32xf32>, vector<48x32xf32> -> vector<48x32xf32>
    %31 = arith.mulf %24, %27 : vector<48x32xf32>
    %cst_39 = arith.constant dense<0.000000e+00> : vector<48x32xf32>
    %32 = tpu.matmul %31, %19, %cst_39 {dimension_numbers = #tpu.dot_dimension_numbers<[1], [0], [0], [1], [0, 0, 1, 1], [], []>} : vector<48x32xf32>, vector<32x32xf32>, vector<48x32xf32> -> vector<48x32xf32>
    %cst_40 = arith.constant -1.000000e+01 : f32
    %cst_41 = arith.constant 1.000000e+01 : f32
    %33 = vector.broadcast %cst_40 : f32 to vector<48x32xf32>
    %34 = arith.maximumf %33, %32 : vector<48x32xf32>
    %35 = vector.broadcast %cst_41 : f32 to vector<48x32xf32>
    %36 = arith.minimumf %35, %34 : vector<48x32xf32>
    %37 = math.exp %36 : vector<48x32xf32>
    %cst_42 = arith.constant dense<0.000000e+00> : vector<24x32xf32>
    %38 = tpu.matmul %18, %37, %cst_42 {dimension_numbers = #tpu.dot_dimension_numbers<[1], [0], [0], [1], [0, 0, 1, 1], [], []>} : vector<24x48xf32>, vector<48x32xf32>, vector<24x32xf32> -> vector<24x32xf32>
    %cst_43 = arith.constant dense<0.000000e+00> : vector<48x32xf32>
    %39 = tpu.matmul %16, %38, %cst_43 {dimension_numbers = #tpu.dot_dimension_numbers<[1], [0], [0], [1], [0, 0, 1, 1], [], []>} : vector<48x24xf32>, vector<24x32xf32>, vector<48x32xf32> -> vector<48x32xf32>
    %cst_44 = arith.constant 9.99999993E-9 : f32
    %40 = vector.broadcast %cst_44 : f32 to vector<48x32xf32>
    %41 = arith.addf %39, %40 : vector<48x32xf32>
    %42 = arith.divf %37, %41 : vector<48x32xf32>
    %43 = arith.mulf %42, %30 : vector<48x32xf32>
    %cst_45 = arith.constant dense<0.000000e+00> : vector<24x32xf32>
    %44 = tpu.matmul %18, %43, %cst_45 {dimension_numbers = #tpu.dot_dimension_numbers<[1], [0], [0], [1], [0, 0, 1, 1], [], []>} : vector<24x48xf32>, vector<48x32xf32>, vector<24x32xf32> -> vector<24x32xf32>
    %45 = arith.addf %15, %44 : vector<24x32xf32>
    %cst_46 = arith.constant dense<0.000000e+00> : vector<48x32xf32>
    %46 = tpu.matmul %16, %44, %cst_46 {dimension_numbers = #tpu.dot_dimension_numbers<[1], [0], [0], [1], [0, 0, 1, 1], [], []>} : vector<48x24xf32>, vector<24x32xf32>, vector<48x32xf32> -> vector<48x32xf32>
    %cst_47 = arith.constant dense<0.000000e+00> : vector<48x32xf32>
    %47 = tpu.matmul %17, %44, %cst_47 {dimension_numbers = #tpu.dot_dimension_numbers<[1], [0], [0], [1], [0, 0, 1, 1], [], []>} : vector<48x24xf32>, vector<24x32xf32>, vector<48x32xf32> -> vector<48x32xf32>
    %c1 = arith.constant 1 : index
    %c0_48 = arith.constant 0 : index
    %c0_49 = arith.constant 0 : index
    %48 = vector.load %arg8[%c1, %c0_48, %c0_49] : memref<2x32x32xf32, #tpu.memory_space<vmem>>, vector<1x32x32xf32>
    %49 = vector.shape_cast %48 : vector<1x32x32xf32> to vector<32x32xf32>
    %cst_50 = arith.constant dense<0.000000e+00> : vector<48x32xf32>
    %50 = tpu.matmul %46, %49, %cst_50 {dimension_numbers = #tpu.dot_dimension_numbers<[1], [0], [0], [1], [0, 0, 1, 1], [], []>} : vector<48x32xf32>, vector<32x32xf32>, vector<48x32xf32> -> vector<48x32xf32>
    %c1_51 = arith.constant 1 : index
    %c0_52 = arith.constant 0 : index
    %c0_53 = arith.constant 0 : index
    %51 = vector.load %arg9[%c1_51, %c0_52, %c0_53] : memref<2x32x32xf32, #tpu.memory_space<vmem>>, vector<1x32x32xf32>
    %52 = vector.shape_cast %51 : vector<1x32x32xf32> to vector<32x32xf32>
    %cst_54 = arith.constant dense<0.000000e+00> : vector<48x32xf32>
    %53 = tpu.matmul %47, %52, %cst_54 {dimension_numbers = #tpu.dot_dimension_numbers<[1], [0], [0], [1], [0, 0, 1, 1], [], []>} : vector<48x32xf32>, vector<32x32xf32>, vector<48x32xf32> -> vector<48x32xf32>
    %c1_55 = arith.constant 1 : index
    %c0_56 = arith.constant 0 : index
    %c0_57 = arith.constant 0 : index
    %54 = vector.load %arg10[%c1_55, %c0_56, %c0_57] : memref<2x32x32xf32, #tpu.memory_space<vmem>>, vector<1x32x32xf32>
    %55 = vector.shape_cast %54 : vector<1x32x32xf32> to vector<32x32xf32>
    %cst_58 = arith.constant dense<0.000000e+00> : vector<48x32xf32>
    %56 = tpu.matmul %47, %55, %cst_58 {dimension_numbers = #tpu.dot_dimension_numbers<[1], [0], [0], [1], [0, 0, 1, 1], [], []>} : vector<48x32xf32>, vector<32x32xf32>, vector<48x32xf32> -> vector<48x32xf32>
    %57 = arith.mulf %50, %53 : vector<48x32xf32>
    %cst_59 = arith.constant dense<0.000000e+00> : vector<48x32xf32>
    %58 = tpu.matmul %57, %19, %cst_59 {dimension_numbers = #tpu.dot_dimension_numbers<[1], [0], [0], [1], [0, 0, 1, 1], [], []>} : vector<48x32xf32>, vector<32x32xf32>, vector<48x32xf32> -> vector<48x32xf32>
    %cst_60 = arith.constant -1.000000e+01 : f32
    %cst_61 = arith.constant 1.000000e+01 : f32
    %59 = vector.broadcast %cst_60 : f32 to vector<48x32xf32>
    %60 = arith.maximumf %59, %58 : vector<48x32xf32>
    %61 = vector.broadcast %cst_61 : f32 to vector<48x32xf32>
    %62 = arith.minimumf %61, %60 : vector<48x32xf32>
    %63 = math.exp %62 : vector<48x32xf32>
    %cst_62 = arith.constant dense<0.000000e+00> : vector<24x32xf32>
    %64 = tpu.matmul %18, %63, %cst_62 {dimension_numbers = #tpu.dot_dimension_numbers<[1], [0], [0], [1], [0, 0, 1, 1], [], []>} : vector<24x48xf32>, vector<48x32xf32>, vector<24x32xf32> -> vector<24x32xf32>
    %cst_63 = arith.constant dense<0.000000e+00> : vector<48x32xf32>
    %65 = tpu.matmul %16, %64, %cst_63 {dimension_numbers = #tpu.dot_dimension_numbers<[1], [0], [0], [1], [0, 0, 1, 1], [], []>} : vector<48x24xf32>, vector<24x32xf32>, vector<48x32xf32> -> vector<48x32xf32>
    %cst_64 = arith.constant 9.99999993E-9 : f32
    %66 = vector.broadcast %cst_64 : f32 to vector<48x32xf32>
    %67 = arith.addf %65, %66 : vector<48x32xf32>
    %68 = arith.divf %63, %67 : vector<48x32xf32>
    %69 = arith.mulf %68, %56 : vector<48x32xf32>
    %cst_65 = arith.constant dense<0.000000e+00> : vector<24x32xf32>
    %70 = tpu.matmul %18, %69, %cst_65 {dimension_numbers = #tpu.dot_dimension_numbers<[1], [0], [0], [1], [0, 0, 1, 1], [], []>} : vector<24x48xf32>, vector<48x32xf32>, vector<24x32xf32> -> vector<24x32xf32>
    %71 = arith.addf %45, %70 : vector<24x32xf32>
    %c0_66 = arith.constant 0 : index
    %c0_67 = arith.constant 0 : index
    %72 = vector.load %arg15[%c0_66, %c0_67] : memref<64x64xf32, #tpu.memory_space<vmem>>, vector<64x64xf32>
    %c0_68 = arith.constant 0 : index
    %c0_69 = arith.constant 0 : index
    %73 = vector.load %arg16[%c0_68, %c0_69] : memref<64x32xf32, #tpu.memory_space<vmem>>, vector<64x32xf32>
    %74 = vector.extract_strided_slice %71 {offsets = [0, 0], sizes = [8, 32], strides = [1, 1]} : vector<24x32xf32> to vector<8x32xf32>
    %75 = arith.mulf %7, %7 : vector<8x64xf32>
    %cst_70 = arith.constant dense<0.000000e+00> : vector<8x64xf32>
    %76 = tpu.matmul %75, %72, %cst_70 {dimension_numbers = #tpu.dot_dimension_numbers<[1], [0], [0], [1], [0, 0, 1, 1], [], []>} : vector<8x64xf32>, vector<64x64xf32>, vector<8x64xf32> -> vector<8x64xf32>
    %cst_71 = arith.constant 1.000000e-24 : f32
    %77 = vector.broadcast %cst_71 : f32 to vector<8x64xf32>
    %78 = arith.maximumf %76, %77 : vector<8x64xf32>
    %79 = math.rsqrt %78 : vector<8x64xf32>
    %80 = arith.mulf %7, %79 : vector<8x64xf32>
    %cst_72 = arith.constant dense<0.000000e+00> : vector<8x32xf32>
    %81 = tpu.matmul %80, %73, %cst_72 {dimension_numbers = #tpu.dot_dimension_numbers<[1], [0], [0], [1], [0, 0, 1, 1], [], []>} : vector<8x64xf32>, vector<64x32xf32>, vector<8x32xf32> -> vector<8x32xf32>
    %cst_73 = arith.constant 5.000000e-01 : f32
    %82 = vector.broadcast %cst_73 : f32 to vector<8x32xf32>
    %83 = arith.mulf %82, %81 : vector<8x32xf32>
    %84 = arith.addf %74, %83 : vector<8x32xf32>
    %c0_74 = arith.constant 0 : index
    %c0_75 = arith.constant 0 : index
    %85 = vector.load %arg17[%c0_74, %c0_75] : memref<24x32xf32, #tpu.memory_space<vmem>>, vector<8x32xf32>
    tpu.vector_store %arg17[%c0_74, %c0_75], %84 {strides = array<i32>} : memref<24x32xf32, #tpu.memory_space<vmem>>, vector<8x32xf32>,
    %86 = vector.extract_strided_slice %71 {offsets = [8, 0], sizes = [16, 32], strides = [1, 1]} : vector<24x32xf32> to vector<16x32xf32>
    %87 = arith.mulf %9, %9 : vector<16x64xf32>
    %cst_76 = arith.constant dense<0.000000e+00> : vector<16x64xf32>
    %88 = tpu.matmul %87, %72, %cst_76 {dimension_numbers = #tpu.dot_dimension_numbers<[1], [0], [0], [1], [0, 0, 1, 1], [], []>} : vector<16x64xf32>, vector<64x64xf32>, vector<16x64xf32> -> vector<16x64xf32>
    %cst_77 = arith.constant 1.000000e-24 : f32
    %89 = vector.broadcast %cst_77 : f32 to vector<16x64xf32>
    %90 = arith.maximumf %88, %89 : vector<16x64xf32>
    %91 = math.rsqrt %90 : vector<16x64xf32>
    %92 = arith.mulf %9, %91 : vector<16x64xf32>
    %cst_78 = arith.constant dense<0.000000e+00> : vector<16x32xf32>
    %93 = tpu.matmul %92, %73, %cst_78 {dimension_numbers = #tpu.dot_dimension_numbers<[1], [0], [0], [1], [0, 0, 1, 1], [], []>} : vector<16x64xf32>, vector<64x32xf32>, vector<16x32xf32> -> vector<16x32xf32>
    %cst_79 = arith.constant 5.000000e-01 : f32
    %94 = vector.broadcast %cst_79 : f32 to vector<16x32xf32>
    %95 = arith.mulf %94, %93 : vector<16x32xf32>
    %96 = arith.addf %86, %95 : vector<16x32xf32>
    %c8 = arith.constant 8 : index
    %c0_80 = arith.constant 0 : index
    %97 = vector.load %arg17[%c8, %c0_80] : memref<24x32xf32, #tpu.memory_space<vmem>>, vector<16x32xf32>
    tpu.vector_store %arg17[%c8, %c0_80], %96 {strides = array<i32>} : memref<24x32xf32, #tpu.memory_space<vmem>>, vector<16x32xf32>,
    return
  }
  func.func @transform_0(%arg0: i32) -> (i32, i32) {
    %c0_i32 = arith.constant 0 : i32
    %c0_i32_0 = arith.constant 0 : i32
    %c0_i32_1 = arith.constant 0 : i32
    return %c0_i32, %c0_i32_0 : i32, i32
  }
  func.func @transform_1(%arg0: i32) -> (i32, i32) {
    %c0_i32 = arith.constant 0 : i32
    %c0_i32_0 = arith.constant 0 : i32
    %c0_i32_1 = arith.constant 0 : i32
    return %c0_i32, %c0_i32_0 : i32, i32
  }
  func.func @transform_2(%arg0: i32) -> (i32, i32) {
    %c0_i32 = arith.constant 0 : i32
    %c0_i32_0 = arith.constant 0 : i32
    %c0_i32_1 = arith.constant 0 : i32
    return %c0_i32, %c0_i32_0 : i32, i32
  }
  func.func @transform_3(%arg0: i32) -> (i32, i32) {
    %c0_i32 = arith.constant 0 : i32
    %c0_i32_0 = arith.constant 0 : i32
    %c0_i32_1 = arith.constant 0 : i32
    return %c0_i32, %c0_i32_0 : i32, i32
  }
  func.func @transform_4(%arg0: i32) -> (i32, i32) {
    %c0_i32 = arith.constant 0 : i32
    %c0_i32_0 = arith.constant 0 : i32
    %c0_i32_1 = arith.constant 0 : i32
    return %c0_i32, %c0_i32_0 : i32, i32
  }
  func.func @transform_5(%arg0: i32) -> (i32, i32) {
    %c0_i32 = arith.constant 0 : i32
    %c0_i32_0 = arith.constant 0 : i32
    %c0_i32_1 = arith.constant 0 : i32
    return %c0_i32, %c0_i32_0 : i32, i32
  }
  func.func @transform_6(%arg0: i32) -> (i32, i32) {
    %c0_i32 = arith.constant 0 : i32
    %c0_i32_0 = arith.constant 0 : i32
    %c0_i32_1 = arith.constant 0 : i32
    return %c0_i32, %c0_i32_0 : i32, i32
  }
  func.func @transform_7(%arg0: i32) -> (i32, i32, i32) {
    %c0_i32 = arith.constant 0 : i32
    %c0_i32_0 = arith.constant 0 : i32
    %c0_i32_1 = arith.constant 0 : i32
    %c0_i32_2 = arith.constant 0 : i32
    return %c0_i32, %c0_i32_0, %c0_i32_1 : i32, i32, i32
  }
  func.func @transform_8(%arg0: i32) -> (i32, i32, i32) {
    %c0_i32 = arith.constant 0 : i32
    %c0_i32_0 = arith.constant 0 : i32
    %c0_i32_1 = arith.constant 0 : i32
    %c0_i32_2 = arith.constant 0 : i32
    return %c0_i32, %c0_i32_0, %c0_i32_1 : i32, i32, i32
  }
  func.func @transform_9(%arg0: i32) -> (i32, i32, i32) {
    %c0_i32 = arith.constant 0 : i32
    %c0_i32_0 = arith.constant 0 : i32
    %c0_i32_1 = arith.constant 0 : i32
    %c0_i32_2 = arith.constant 0 : i32
    return %c0_i32, %c0_i32_0, %c0_i32_1 : i32, i32, i32
  }
  func.func @transform_10(%arg0: i32) -> (i32, i32) {
    %c0_i32 = arith.constant 0 : i32
    %c0_i32_0 = arith.constant 0 : i32
    %c0_i32_1 = arith.constant 0 : i32
    return %c0_i32, %c0_i32_0 : i32, i32
  }
  func.func @transform_11(%arg0: i32) -> (i32, i32) {
    %c0_i32 = arith.constant 0 : i32
    %c0_i32_0 = arith.constant 0 : i32
    %c0_i32_1 = arith.constant 0 : i32
    return %c0_i32, %c0_i32_0 : i32, i32
  }
  func.func @transform_12(%arg0: i32) -> (i32, i32) {
    %c0_i32 = arith.constant 0 : i32
    %c0_i32_0 = arith.constant 0 : i32
    %c0_i32_1 = arith.constant 0 : i32
    return %c0_i32, %c0_i32_0 : i32, i32
  }
  func.func @transform_13(%arg0: i32) -> (i32, i32) {
    %c0_i32 = arith.constant 0 : i32
    %c0_i32_0 = arith.constant 0 : i32
    %c0_i32_1 = arith.constant 0 : i32
    return %c0_i32, %c0_i32_0 : i32, i32
  }
  func.func @transform_14(%arg0: i32) -> (i32, i32) {
    %c0_i32 = arith.constant 0 : i32
    %c0_i32_0 = arith.constant 0 : i32
    %c0_i32_1 = arith.constant 0 : i32
    return %c0_i32, %c0_i32_0 : i32, i32
  }
  func.func @transform_15(%arg0: i32) -> (i32, i32) {
    %c0_i32 = arith.constant 0 : i32
    %c0_i32_0 = arith.constant 0 : i32
    %c0_i32_1 = arith.constant 0 : i32
    return %c0_i32, %c0_i32_0 : i32, i32
  }
  func.func @transform_16(%arg0: i32) -> (i32, i32) {
    %c0_i32 = arith.constant 0 : i32
    %c0_i32_0 = arith.constant 0 : i32
    %c0_i32_1 = arith.constant 0 : i32
    return %c0_i32, %c0_i32_0 : i32, i32
  }
}

</mosaic_0001>

<llo_original>
// kernel: _forward_impl.1
$region0: #{_forward_impl.1}
  #allocation0 [shape = 'u32[]', space=smem, size = 0x4, offset = 0x4, fixed_abs, tag = 'smem constant byte address 0x4 - core index']
  #allocation1 [shape = 'u32[144,128]{1,0:T(1,128)}', space=vmem, size = 0x12000, scoped, tag = 'internal scratch']
  %s0 = inlined_call_operand.hbm [shape: f32[16,112], index: 0, kind: input, shape index: {}]
  %s1 = inlined_call_operand.vmem [shape: f32[112,64], index: 1, kind: input, shape index: {}]
  %s2 = inlined_call_operand.hbm [shape: f32[1,64], index: 2, kind: input, shape index: {}]
  %s3 = inlined_call_operand.vmem [shape: f32[8,16], index: 3, kind: input, shape index: {}]
  %s4 = inlined_call_operand.vmem [shape: f32[16,8], index: 4, kind: input, shape index: {}]
  %s5 = inlined_call_operand.vmem [shape: f32[24,32], index: 5, kind: input, shape index: {}]
  %s6 = inlined_call_operand.vmem [shape: f32[24,24], index: 6, kind: input, shape index: {}]
  %s7 = inlined_call_operand.vmem [shape: f32[2,32,32], index: 7, kind: input, shape index: {}]
  %s8 = inlined_call_operand.vmem [shape: f32[2,32,32], index: 8, kind: input, shape index: {}]
  %s9 = inlined_call_operand.vmem [shape: f32[2,32,32], index: 9, kind: input, shape index: {}]
  %s10 = inlined_call_operand.vmem [shape: f32[48,24], index: 10, kind: input, shape index: {}]
  %s11 = inlined_call_operand.vmem [shape: f32[48,24], index: 11, kind: input, shape index: {}]
  %s12 = inlined_call_operand.vmem [shape: f32[24,48], index: 12, kind: input, shape index: {}]
  %s13 = inlined_call_operand.vmem [shape: f32[32,32], index: 13, kind: input, shape index: {}]
  %s14 = inlined_call_operand.vmem [shape: f32[64,64], index: 14, kind: input, shape index: {}]
  %s15 = inlined_call_operand.vmem [shape: f32[64,32], index: 15, kind: input, shape index: {}]
  %s16 = inlined_call_operand.vmem [shape: f32[24,32], index: 16, kind: output, shape index: {}]
  %s17 = sld [smem:[#allocation0]]
  $region82: #{_forward_impl.1} parent=0
    _
  %s19 = ssub.s32 1, %s17
  %s20 = scalar_select 0, %s19, %s17
  $region1: #{_forward_impl.1} parent=0
    #allocation2 [shape = 'u8[8192]{0}', space=vmem, size = 0x2000, scoped, tag = 'input window, operand 0, single buffered']
    #allocation3 [shape = 's32[1]{0}', space=sflag, size = 0x4, scoped, tag = 'scoped memory for _forward_impl.1']
    #allocation4 [shape = 'u8[512]{0}', space=vmem, size = 0x400, scoped, tag = 'input window, operand 2, single buffered']
    #allocation5 [shape = 's32[1]{0}', space=sflag, size = 0x4, scoped, tag = 'scoped memory for _forward_impl.1']
    %21 = vsyncpa [#allocation3], 0
    %22 = vsyncpa [#allocation5], 0
    // Predicated region
    $region2: #{_forward_impl.1} parent=1 // pred_check
      _
    $region3: #{_forward_impl.1} parent=1 // pred_check_branch
      %24 = sbr.rel (0) target = $region5
    $region4: #{_forward_impl.1} parent=1 // pred_region
      %s26 = ssub.s32 256, 256
      %27 = vsyncadd [#allocation3], %s26
      %s28 = sshll.u32 [#allocation2], 4
      %s29 = int_to_ptr.vmem [resolvable:$true] %s28
      %34 = dma.hbm_to_vmem [thread:$0]  %s0, 256, %s29, [#allocation3], 128, 128, 8
    $region5: #{_forward_impl.1} parent=1 // pred_fallthru
      _
    // Predicated region
    $region6: #{_forward_impl.1} parent=1 // pred_check
      _
    $region7: #{_forward_impl.1} parent=1 // pred_check_branch
      %36 = sbr.rel (0) target = $region9
    $region8: #{_forward_impl.1} parent=1 // pred_region
      _
    $region9: #{_forward_impl.1} parent=1 // pred_fallthru
      _
    // Predicated region
    $region10: #{_forward_impl.1} parent=1 // pred_check
      _
    $region11: #{_forward_impl.1} parent=1 // pred_check_branch
      %38 = sbr.rel (0) target = $region13
    $region12: #{_forward_impl.1} parent=1 // pred_region
      %s40 = ssub.s32 16, 16
      %41 = vsyncadd [#allocation5], %s40
      %s43 = sshll.u32 [#allocation4], 4
      %s44 = int_to_ptr.vmem [resolvable:$true] %s43
      %46 = dma.hbm_to_vmem [thread:$0]  %s2, 16, %s44, [#allocation5]
    $region13: #{_forward_impl.1} parent=1 // pred_fallthru
      _
    // Predicated region
    $region14: #{_forward_impl.1} parent=1 // pred_check
      _
    $region15: #{_forward_impl.1} parent=1 // pred_check_branch
      %48 = sbr.rel (0) target = $region17
    $region16: #{_forward_impl.1} parent=1 // pred_region
      _
    $region17: #{_forward_impl.1} parent=1 // pred_fallthru
      _
    // Predicated region
    $region18: #{_forward_impl.1} parent=1 // pred_check
      _
    $region19: #{_forward_impl.1} parent=1 // pred_check_branch
      %50 = sbr.rel (0) target = $region21
    $region20: #{_forward_impl.1} parent=1 // pred_region
      _
    $region21: #{_forward_impl.1} parent=1 // pred_fallthru
      _
    // Predicated region
    $region22: #{_forward_impl.1} parent=1 // pred_check
      _
    $region23: #{_forward_impl.1} parent=1 // pred_check_branch
      %52 = sbr.rel (0) target = $region25
    $region24: #{_forward_impl.1} parent=1 // pred_region
      _
    $region25: #{_forward_impl.1} parent=1 // pred_fallthru
      _
    // Predicated region
    $region26: #{_forward_impl.1} parent=1 // pred_check
      _
    $region27: #{_forward_impl.1} parent=1 // pred_check_branch
      %54 = sbr.rel (0) target = $region29
    $region28: #{_forward_impl.1} parent=1 // pred_region
      _
    $region29: #{_forward_impl.1} parent=1 // pred_fallthru
      _
    // Predicated region
    $region30: #{_forward_impl.1} parent=1 // pred_check
      _
    $region31: #{_forward_impl.1} parent=1 // pred_check_branch
      %56 = sbr.rel (0) target = $region33
    $region32: #{_forward_impl.1} parent=1 // pred_region
      _
    $region33: #{_forward_impl.1} parent=1 // pred_fallthru
      _
    // Predicated region
    $region34: #{_forward_impl.1} parent=1 // pred_check
      _
    $region35: #{_forward_impl.1} parent=1 // pred_check_branch
      %58 = sbr.rel (0) target = $region37
    $region36: #{_forward_impl.1} parent=1 // pred_region
      _
    $region37: #{_forward_impl.1} parent=1 // pred_fallthru
      _
    // Predicated region
    $region38: #{_forward_impl.1} parent=1 // pred_check
      _
    $region39: #{_forward_impl.1} parent=1 // pred_check_branch
      %60 = sbr.rel (0) target = $region41
    $region40: #{_forward_impl.1} parent=1 // pred_region
      _
    $region41: #{_forward_impl.1} parent=1 // pred_fallthru
      _
    // Predicated region
    $region42: #{_forward_impl.1} parent=1 // pred_check
      _
    $region43: #{_forward_impl.1} parent=1 // pred_check_branch
      %62 = sbr.rel (0) target = $region45
    $region44: #{_forward_impl.1} parent=1 // pred_region
      _
    $region45: #{_forward_impl.1} parent=1 // pred_fallthru
      _
    // Predicated region
    $region46: #{_forward_impl.1} parent=1 // pred_check
      _
    $region47: #{_forward_impl.1} parent=1 // pred_check_branch
      %64 = sbr.rel (0) target = $region49
    $region48: #{_forward_impl.1} parent=1 // pred_region
      _
    $region49: #{_forward_impl.1} parent=1 // pred_fallthru
      _
    // Predicated region
    $region50: #{_forward_impl.1} parent=1 // pred_check
      _
    $region51: #{_forward_impl.1} parent=1 // pred_check_branch
      %66 = sbr.rel (0) target = $region53
    $region52: #{_forward_impl.1} parent=1 // pred_region
      _
    $region53: #{_forward_impl.1} parent=1 // pred_fallthru
      _
    // Predicated region
    $region54: #{_forward_impl.1} parent=1 // pred_check
      _
    $region55: #{_forward_impl.1} parent=1 // pred_check_branch
      %68 = sbr.rel (0) target = $region57
    $region56: #{_forward_impl.1} parent=1 // pred_region
      _
    $region57: #{_forward_impl.1} parent=1 // pred_fallthru
      _
    // Predicated region
    $region58: #{_forward_impl.1} parent=1 // pred_check
      _
    $region59: #{_forward_impl.1} parent=1 // pred_check_branch
      %70 = sbr.rel (0) target = $region61
    $region60: #{_forward_impl.1} parent=1 // pred_region
      _
    $region61: #{_forward_impl.1} parent=1 // pred_fallthru
      _
    // Predicated region
    $region62: #{_forward_impl.1} parent=1 // pred_check
      _
    $region63: #{_forward_impl.1} parent=1 // pred_check_branch
      %72 = sbr.rel (0) target = $region65
    $region64: #{_forward_impl.1} parent=1 // pred_region
      _
    $region65: #{_forward_impl.1} parent=1 // pred_fallthru
      _
    // Predicated region
    $region66: #{_forward_impl.1} parent=1 // pred_check
      _
    $region67: #{_forward_impl.1} parent=1 // pred_check_branch
      %74 = sbr.rel (0) target = $region69
    $region68: #{_forward_impl.1} parent=1 // pred_region
      %75 = dma.done [#allocation3], 256
    $region69: #{_forward_impl.1} parent=1 // pred_fallthru
      _
    // Predicated region
    $region70: #{_forward_impl.1} parent=1 // pred_check
      _
    $region71: #{_forward_impl.1} parent=1 // pred_check_branch
      %77 = sbr.rel (0) target = $region73
    $region72: #{_forward_impl.1} parent=1 // pred_region
      %78 = dma.done [#allocation5], 16
    $region73: #{_forward_impl.1} parent=1 // pred_fallthru
      _
    %v79 = vld [vmem:[#allocation2] sm:$0xff]
    %v80 = vld [vmem:[#allocation2 + $0x8] sm:$0xff]
    %v81 = vld [vmem:[%s1] sm:$0xff]
    %v82 = vld [vmem:[%s1 + $0x8] sm:$0xff]
    %v83 = vld [vmem:[%s1 + $0x10] sm:$0xff]
    %v84 = vld [vmem:[%s1 + $0x18] sm:$0xff]
    %v85 = vld [vmem:[%s1 + $0x20] sm:$0xff]
    %v86 = vld [vmem:[%s1 + $0x28] sm:$0xff]
    %v87 = vld [vmem:[%s1 + $0x30] sm:$0xff]
    %v88 = vld [vmem:[%s1 + $0x38] sm:$0xff]
    %v89 = vld [vmem:[%s1 + $0x40] sm:$0xff]
    %v90 = vld [vmem:[%s1 + $0x48] sm:$0xff]
    %v91 = vld [vmem:[%s1 + $0x50] sm:$0xff]
    %v92 = vld [vmem:[%s1 + $0x58] sm:$0xff]
    %v93 = vld [vmem:[%s1 + $0x60] sm:$0xff]
    %v94 = vld [vmem:[%s1 + $0x68] sm:$0xff]
    %v95 = vld [vmem:[#allocation4] sm:$0x1]
    %v97 = vlaneseq
    %v98 = vshrl.u32 %v97, 7
    %v99 = vsub.s32 0, %v98
    %v100 = vrot.slane %v95, %v99
    %vm102 = vcmask 916480
    %v104 = vsel %vm102, %v79, 0
    %v107 = vsel %vm102, %v80, 0
    %109 = vmatprep.subr.mxu0 0.0
    %110 = vmatpush1.msra.mxu0 %v81
    %111 = vmatprep.subr.mxu0 0.0
    %112 = vmatpush1.msra.mxu0 %v82
    %113 = vmatprep.subr.mxu0 0.0
    %114 = vmatpush1.msra.mxu0 %v83
    %115 = vmatprep.subr.mxu0 0.0
    %116 = vmatpush1.msra.mxu0 %v84
    %117 = vmatprep.subr.mxu0 0.0
    %118 = vmatpush1.msra.mxu0 %v85
    %119 = vmatprep.subr.mxu0 0.0
    %120 = vmatpush1.msra.mxu0 %v86
    %121 = vmatprep.subr.mxu0 0.0
    %122 = vmatpush1.msra.mxu0 %v87
    %123 = vmatprep.subr.mxu0 0.0
    %124 = vmatpush1.msra.mxu0 %v88
    %125 = vmatprep.subr.mxu0 0.0
    %126 = vmatpush1.msra.mxu0 %v89
    %127 = vmatprep.subr.mxu0 0.0
    %128 = vmatpush1.msra.mxu0 %v90
    %129 = vmatprep.subr.mxu0 0.0
    %130 = vmatpush1.msra.mxu0 %v91
    %131 = vmatprep.subr.mxu0 0.0
    %132 = vmatpush1.msra.mxu0 %v92
    %133 = vmatprep.subr.mxu0 0.0
    %134 = vmatpush1.msra.mxu0 %v93
    %135 = vmatprep.subr.mxu0 0.0
    %136 = vmatpush1.msra.mxu0 %v94
    %137 = vmatprep.subr.mxu0 0.0
    %138 = vmatpush1.msra.mxu0 0.0
    %139 = vmatprep.subr.mxu0 0.0
    %140 = vmatpush1.msra.mxu0 0.0
    %141 = vmatprep.subr.mxu0 0.0
    %142 = vmatpush1.msra.mxu0 0.0
    %143 = vmatprep.subr.mxu0 0.0
    %144 = vmatpush1.msra.mxu0 0.0
    %145 = vmatprep.subr.mxu0 0.0
    %146 = vmatpush1.msra.mxu0 0.0
    %147 = vmatprep.subr.mxu0 0.0
    %148 = vmatpush1.msra.mxu0 0.0
    %149 = vmatprep.subr.mxu0 0.0
    %150 = vmatpush1.msra.mxu0 0.0
    %151 = vmatprep.subr.mxu0 0.0
    %152 = vmatpush1.msra.mxu0 0.0
    %153 = vmatprep.subr.mxu0 0.0
    %154 = vmatpush1.msra.mxu0 0.0
    %155 = vmatprep.subr.mxu0 0.0
    %156 = vmatpush1.msra.mxu0 0.0
    %157 = vmatprep.subr.mxu0 0.0
    %158 = vmatpush1.msra.mxu0 0.0
    %159 = vmatprep.subr.mxu0 0.0
    %160 = vmatpush1.msra.mxu0 0.0
    %161 = vmatprep.subr.mxu0 0.0
    %162 = vmatpush1.msra.mxu0 0.0
    %163 = vmatprep.subr.mxu0 0.0
    %164 = vmatpush1.msra.mxu0 0.0
    %165 = vmatprep.subr.mxu0 0.0
    %166 = vmatpush1.msra.mxu0 0.0
    %167 = vmatprep.subr.mxu0 0.0
    %168 = vmatpush1.msra.mxu0 0.0
    %169 = vmatprep.subr.mxu0 0.0
    %170 = vmatpush1.msra.mxu0 0.0
    %171 = vmatprep.subr.mxu0 0.0
    %172 = vmatpush1.msra.mxu0 0.0
    %173 = vmatprep.mubr.f32.mxu0 0.0
    %174 = vmatmul.mubr.f32.gmra.mrb[0].mxu0 %v104
    %v175 = vpop.f32.mrb[0].mxu0
    %v176 = vadd.f32 %v100, %v175
    %v177 = vpop.f32.mrb[0].mxu0
    %178 = vmatprep.mubr.f32.mxu0 0.0
    %179 = vmatmul.mubr.f32.gmra.mrb[0].mxu0 %v107
    %v180 = vpop.f32.mrb[0].mxu0
    %v181 = vadd.f32 %v100, %v180
    %v182 = vpop.f32.mrb[0].mxu0
    %183 = vdwg.mxu0
    %v184 = vld [vmem:[%s3] sm:$0xff]
    %vm185 = vcmask 130048
    %v187 = vsel %vm185, %v184, 0
    %189 = vmatprep.subr.mxu0 0.0
    %190 = vmatpush1.msra.mxu0 %v176
    %191 = vmatprep.subr.mxu0 0.0
    %192 = vmatpush1.msra.mxu0 %v181
    %193 = vmatprep.subr.mxu0 0.0
    %194 = vmatpush1.msra.mxu0 0.0
    %195 = vmatprep.subr.mxu0 0.0
    %196 = vmatpush1.msra.mxu0 0.0
    %197 = vmatprep.subr.mxu0 0.0
    %198 = vmatpush1.msra.mxu0 0.0
    %199 = vmatprep.subr.mxu0 0.0
    %200 = vmatpush1.msra.mxu0 0.0
    %201 = vmatprep.subr.mxu0 0.0
    %202 = vmatpush1.msra.mxu0 0.0
    %203 = vmatprep.subr.mxu0 0.0
    %204 = vmatpush1.msra.mxu0 0.0
    %205 = vmatprep.subr.mxu0 0.0
    %206 = vmatpush1.msra.mxu0 0.0
    %207 = vmatprep.subr.mxu0 0.0
    %208 = vmatpush1.msra.mxu0 0.0
    %209 = vmatprep.subr.mxu0 0.0
    %210 = vmatpush1.msra.mxu0 0.0
    %211 = vmatprep.subr.mxu0 0.0
    %212 = vmatpush1.msra.mxu0 0.0
    %213 = vmatprep.subr.mxu0 0.0
    %214 = vmatpush1.msra.mxu0 0.0
    %215 = vmatprep.subr.mxu0 0.0
    %216 = vmatpush1.msra.mxu0 0.0
    %217 = vmatprep.subr.mxu0 0.0
    %218 = vmatpush1.msra.mxu0 0.0
    %219 = vmatprep.subr.mxu0 0.0
    %220 = vmatpush1.msra.mxu0 0.0
    %221 = vmatprep.subr.mxu0 0.0
    %222 = vmatpush1.msra.mxu0 0.0
    %223 = vmatprep.subr.mxu0 0.0
    %224 = vmatpush1.msra.mxu0 0.0
    %225 = vmatprep.subr.mxu0 0.0
    %226 = vmatpush1.msra.mxu0 0.0
    %227 = vmatprep.subr.mxu0 0.0
    %228 = vmatpush1.msra.mxu0 0.0
    %229 = vmatprep.subr.mxu0 0.0
    %230 = vmatpush1.msra.mxu0 0.0
    %231 = vmatprep.subr.mxu0 0.0
    %232 = vmatpush1.msra.mxu0 0.0
    %233 = vmatprep.subr.mxu0 0.0
    %234 = vmatpush1.msra.mxu0 0.0
    %235 = vmatprep.subr.mxu0 0.0
    %236 = vmatpush1.msra.mxu0 0.0
    %237 = vmatprep.subr.mxu0 0.0
    %238 = vmatpush1.msra.mxu0 0.0
    %239 = vmatprep.subr.mxu0 0.0
    %240 = vmatpush1.msra.mxu0 0.0
    %241 = vmatprep.subr.mxu0 0.0
    %242 = vmatpush1.msra.mxu0 0.0
    %243 = vmatprep.subr.mxu0 0.0
    %244 = vmatpush1.msra.mxu0 0.0
    %245 = vmatprep.subr.mxu0 0.0
    %246 = vmatpush1.msra.mxu0 0.0
    %247 = vmatprep.subr.mxu0 0.0
    %248 = vmatpush1.msra.mxu0 0.0
    %249 = vmatprep.subr.mxu0 0.0
    %250 = vmatpush1.msra.mxu0 0.0
    %251 = vmatprep.subr.mxu0 0.0
    %252 = vmatpush1.msra.mxu0 0.0
    %253 = vmatprep.mubr.f32.mxu0 0.0
    %254 = vmatmul.mubr.f32.gmra.mrb[0].mxu0 %v187
    %v255 = vpop.f32.mrb[0].mxu0
    %v256 = vadd.f32 0.0, %v255
    %v257 = vpop.f32.mrb[0].mxu0
    %258 = vdwg.mxu0
    %v259 = vld [vmem:[%s4] sm:$0xff]
    %v260 = vld [vmem:[%s4 + $0x8] sm:$0xff]
    %vm261 = vcmask 64512
    %v263 = vsel %vm261, %v259, 0
    %v266 = vsel %vm261, %v260, 0
    %268 = vmatprep.subr.mxu0 0.0
    %269 = vmatpush1.msra.mxu0 %v256
    %270 = vmatprep.subr.mxu0 0.0
    %271 = vmatpush1.msra.mxu0 0.0
    %272 = vmatprep.subr.mxu0 0.0
    %273 = vmatpush1.msra.mxu0 0.0
    %274 = vmatprep.subr.mxu0 0.0
    %275 = vmatpush1.msra.mxu0 0.0
    %276 = vmatprep.subr.mxu0 0.0
    %277 = vmatpush1.msra.mxu0 0.0
    %278 = vmatprep.subr.mxu0 0.0
    %279 = vmatpush1.msra.mxu0 0.0
    %280 = vmatprep.subr.mxu0 0.0
    %281 = vmatpush1.msra.mxu0 0.0
    %282 = vmatprep.subr.mxu0 0.0
    %283 = vmatpush1.msra.mxu0 0.0
    %284 = vmatprep.subr.mxu0 0.0
    %285 = vmatpush1.msra.mxu0 0.0
    %286 = vmatprep.subr.mxu0 0.0
    %287 = vmatpush1.msra.mxu0 0.0
    %288 = vmatprep.subr.mxu0 0.0
    %289 = vmatpush1.msra.mxu0 0.0
    %290 = vmatprep.subr.mxu0 0.0
    %291 = vmatpush1.msra.mxu0 0.0
    %292 = vmatprep.subr.mxu0 0.0
    %293 = vmatpush1.msra.mxu0 0.0
    %294 = vmatprep.subr.mxu0 0.0
    %295 = vmatpush1.msra.mxu0 0.0
    %296 = vmatprep.subr.mxu0 0.0
    %297 = vmatpush1.msra.mxu0 0.0
    %298 = vmatprep.subr.mxu0 0.0
    %299 = vmatpush1.msra.mxu0 0.0
    %300 = vmatprep.subr.mxu0 0.0
    %301 = vmatpush1.msra.mxu0 0.0
    %302 = vmatprep.subr.mxu0 0.0
    %303 = vmatpush1.msra.mxu0 0.0
    %304 = vmatprep.subr.mxu0 0.0
    %305 = vmatpush1.msra.mxu0 0.0
    %306 = vmatprep.subr.mxu0 0.0
    %307 = vmatpush1.msra.mxu0 0.0
    %308 = vmatprep.subr.mxu0 0.0
    %309 = vmatpush1.msra.mxu0 0.0
    %310 = vmatprep.subr.mxu0 0.0
    %311 = vmatpush1.msra.mxu0 0.0
    %312 = vmatprep.subr.mxu0 0.0
    %313 = vmatpush1.msra.mxu0 0.0
    %314 = vmatprep.subr.mxu0 0.0
    %315 = vmatpush1.msra.mxu0 0.0
    %316 = vmatprep.subr.mxu0 0.0
    %317 = vmatpush1.msra.mxu0 0.0
    %318 = vmatprep.subr.mxu0 0.0
    %319 = vmatpush1.msra.mxu0 0.0
    %320 = vmatprep.subr.mxu0 0.0
    %321 = vmatpush1.msra.mxu0 0.0
    %322 = vmatprep.subr.mxu0 0.0
    %323 = vmatpush1.msra.mxu0 0.0
    %324 = vmatprep.subr.mxu0 0.0
    %325 = vmatpush1.msra.mxu0 0.0
    %326 = vmatprep.subr.mxu0 0.0
    %327 = vmatpush1.msra.mxu0 0.0
    %328 = vmatprep.subr.mxu0 0.0
    %329 = vmatpush1.msra.mxu0 0.0
    %330 = vmatprep.subr.mxu0 0.0
    %331 = vmatpush1.msra.mxu0 0.0
    %332 = vmatprep.mubr.f32.mxu0 0.0
    %333 = vmatmul.mubr.f32.gmra.mrb[0].mxu0 %v263
    %v334 = vpop.f32.mrb[0].mxu0
    %v335 = vadd.f32 0.0, %v334
    %v336 = vpop.f32.mrb[0].mxu0
    %337 = vmatprep.mubr.f32.mxu0 0.0
    %338 = vmatmul.mubr.f32.gmra.mrb[0].mxu0 %v266
    %v339 = vpop.f32.mrb[0].mxu0
    %v340 = vadd.f32 0.0, %v339
    %v341 = vpop.f32.mrb[0].mxu0
    %342 = vdwg.mxu0
    %v343 = vld [vmem:[%s6] sm:$0xff]
    %v344 = vld [vmem:[%s6 + $0x8] sm:$0xff]
    %v345 = vld [vmem:[%s6 + $0x10] sm:$0xff]
    %v346 = vld [vmem:[%s5] sm:$0xff]
    %v347 = vld [vmem:[%s5 + $0x8] sm:$0xff]
    %v348 = vld [vmem:[%s5 + $0x10] sm:$0xff]
    %vm349 = vcmask 195584
    %v351 = vsel %vm349, %v343, 0
    %v354 = vsel %vm349, %v344, 0
    %v357 = vsel %vm349, %v345, 0
    %359 = vmatprep.subr.mxu0 0.0
    %360 = vmatpush1.msra.mxu0 %v346
    %361 = vmatprep.subr.mxu0 0.0
    %362 = vmatpush1.msra.mxu0 %v347
    %363 = vmatprep.subr.mxu0 0.0
    %364 = vmatpush1.msra.mxu0 %v348
    %365 = vmatprep.subr.mxu0 0.0
    %366 = vmatpush1.msra.mxu0 0.0
    %367 = vmatprep.subr.mxu0 0.0
    %368 = vmatpush1.msra.mxu0 0.0
    %369 = vmatprep.subr.mxu0 0.0
    %370 = vmatpush1.msra.mxu0 0.0
    %371 = vmatprep.subr.mxu0 0.0
    %372 = vmatpush1.msra.mxu0 0.0
    %373 = vmatprep.subr.mxu0 0.0
    %374 = vmatpush1.msra.mxu0 0.0
    %375 = vmatprep.subr.mxu0 0.0
    %376 = vmatpush1.msra.mxu0 0.0
    %377 = vmatprep.subr.mxu0 0.0
    %378 = vmatpush1.msra.mxu0 0.0
    %379 = vmatprep.subr.mxu0 0.0
    %380 = vmatpush1.msra.mxu0 0.0
    %381 = vmatprep.subr.mxu0 0.0
    %382 = vmatpush1.msra.mxu0 0.0
    %383 = vmatprep.subr.mxu0 0.0
    %384 = vmatpush1.msra.mxu0 0.0
    %385 = vmatprep.subr.mxu0 0.0
    %386 = vmatpush1.msra.mxu0 0.0
    %387 = vmatprep.subr.mxu0 0.0
    %388 = vmatpush1.msra.mxu0 0.0
    %389 = vmatprep.subr.mxu0 0.0
    %390 = vmatpush1.msra.mxu0 0.0
    %391 = vmatprep.subr.mxu0 0.0
    %392 = vmatpush1.msra.mxu0 0.0
    %393 = vmatprep.subr.mxu0 0.0
    %394 = vmatpush1.msra.mxu0 0.0
    %395 = vmatprep.subr.mxu0 0.0
    %396 = vmatpush1.msra.mxu0 0.0
    %397 = vmatprep.subr.mxu0 0.0
    %398 = vmatpush1.msra.mxu0 0.0
    %399 = vmatprep.subr.mxu0 0.0
    %400 = vmatpush1.msra.mxu0 0.0
    %401 = vmatprep.subr.mxu0 0.0
    %402 = vmatpush1.msra.mxu0 0.0
    %403 = vmatprep.subr.mxu0 0.0
    %404 = vmatpush1.msra.mxu0 0.0
    %405 = vmatprep.subr.mxu0 0.0
    %406 = vmatpush1.msra.mxu0 0.0
    %407 = vmatprep.subr.mxu0 0.0
    %408 = vmatpush1.msra.mxu0 0.0
    %409 = vmatprep.subr.mxu0 0.0
    %410 = vmatpush1.msra.mxu0 0.0
    %411 = vmatprep.subr.mxu0 0.0
    %412 = vmatpush1.msra.mxu0 0.0
    %413 = vmatprep.subr.mxu0 0.0
    %414 = vmatpush1.msra.mxu0 0.0
    %415 = vmatprep.subr.mxu0 0.0
    %416 = vmatpush1.msra.mxu0 0.0
    %417 = vmatprep.subr.mxu0 0.0
    %418 = vmatpush1.msra.mxu0 0.0
    %419 = vmatprep.subr.mxu0 0.0
    %420 = vmatpush1.msra.mxu0 0.0
    %421 = vmatprep.subr.mxu0 0.0
    %422 = vmatpush1.msra.mxu0 0.0
    %423 = vmatprep.mubr.f32.mxu0 0.0
    %424 = vmatmul.mubr.f32.gmra.mrb[0].mxu0 %v351
    %v425 = vpop.f32.mrb[0].mxu0
    %v426 = vadd.f32 0.0, %v425
    %v427 = vpop.f32.mrb[0].mxu0
    %428 = vmatprep.mubr.f32.mxu0 0.0
    %429 = vmatmul.mubr.f32.gmra.mrb[0].mxu0 %v354
    %v430 = vpop.f32.mrb[0].mxu0
    %v431 = vadd.f32 0.0, %v430
    %v432 = vpop.f32.mrb[0].mxu0
    %433 = vmatprep.mubr.f32.mxu0 0.0
    %434 = vmatmul.mubr.f32.gmra.mrb[0].mxu0 %v357
    %v435 = vpop.f32.mrb[0].mxu0
    %v436 = vadd.f32 0.0, %v435
    %v437 = vpop.f32.mrb[0].mxu0
    %438 = vdwg.mxu0
    %v439 = vadd.f32 %v346, %v426
    %v440 = vadd.f32 %v347, %v431
    %v441 = vadd.f32 %v348, %v436
    %442 = vmatprep.subr.mxu0 0.0
    %443 = vmatpush1.msra.mxu0 %v426
    %444 = vmatprep.subr.mxu0 0.0
    %445 = vmatpush1.msra.mxu0 %v431
    %446 = vmatprep.subr.mxu0 0.0
    %447 = vmatpush1.msra.mxu0 %v436
    %448 = vmatprep.subr.mxu0 0.0
    %449 = vmatpush1.msra.mxu0 0.0
    %450 = vmatprep.subr.mxu0 0.0
    %451 = vmatpush1.msra.mxu0 0.0
    %452 = vmatprep.subr.mxu0 0.0
    %453 = vmatpush1.msra.mxu0 0.0
    %454 = vmatprep.subr.mxu0 0.0
    %455 = vmatpush1.msra.mxu0 0.0
    %456 = vmatprep.subr.mxu0 0.0
    %457 = vmatpush1.msra.mxu0 0.0
    %458 = vmatprep.subr.mxu0 0.0
    %459 = vmatpush1.msra.mxu0 0.0
    %460 = vmatprep.subr.mxu0 0.0
    %461 = vmatpush1.msra.mxu0 0.0
    %462 = vmatprep.subr.mxu0 0.0
    %463 = vmatpush1.msra.mxu0 0.0
    %464 = vmatprep.subr.mxu0 0.0
    %465 = vmatpush1.msra.mxu0 0.0
    %466 = vmatprep.subr.mxu0 0.0
    %467 = vmatpush1.msra.mxu0 0.0
    %468 = vmatprep.subr.mxu0 0.0
    %469 = vmatpush1.msra.mxu0 0.0
    %470 = vmatprep.subr.mxu0 0.0
    %471 = vmatpush1.msra.mxu0 0.0
    %472 = vmatprep.subr.mxu0 0.0
    %473 = vmatpush1.msra.mxu0 0.0
    %474 = vmatprep.subr.mxu0 0.0
    %475 = vmatpush1.msra.mxu0 0.0
    %476 = vmatprep.subr.mxu0 0.0
    %477 = vmatpush1.msra.mxu0 0.0
    %478 = vmatprep.subr.mxu0 0.0
    %479 = vmatpush1.msra.mxu0 0.0
    %480 = vmatprep.subr.mxu0 0.0
    %481 = vmatpush1.msra.mxu0 0.0
    %482 = vmatprep.subr.mxu0 0.0
    %483 = vmatpush1.msra.mxu0 0.0
    %484 = vmatprep.subr.mxu0 0.0
    %485 = vmatpush1.msra.mxu0 0.0
    %486 = vmatprep.subr.mxu0 0.0
    %487 = vmatpush1.msra.mxu0 0.0
    %488 = vmatprep.subr.mxu0 0.0
    %489 = vmatpush1.msra.mxu0 0.0
    %490 = vmatprep.subr.mxu0 0.0
    %491 = vmatpush1.msra.mxu0 0.0
    %492 = vmatprep.subr.mxu0 0.0
    %493 = vmatpush1.msra.mxu0 0.0
    %494 = vmatprep.subr.mxu0 0.0
    %495 = vmatpush1.msra.mxu0 0.0
    %496 = vmatprep.subr.mxu0 0.0
    %497 = vmatpush1.msra.mxu0 0.0
    %498 = vmatprep.subr.mxu0 0.0
    %499 = vmatpush1.msra.mxu0 0.0
    %500 = vmatprep.subr.mxu0 0.0
    %501 = vmatpush1.msra.mxu0 0.0
    %502 = vmatprep.subr.mxu0 0.0
    %503 = vmatpush1.msra.mxu0 0.0
    %504 = vmatprep.subr.mxu0 0.0
    %505 = vmatpush1.msra.mxu0 0.0
    %506 = vmatprep.mubr.f32.mxu0 0.0
    %507 = vmatmul.mubr.f32.gmra.mrb[0].mxu0 %v351
    %v508 = vpop.f32.mrb[0].mxu0
    %v509 = vadd.f32 0.0, %v508
    %v510 = vpop.f32.mrb[0].mxu0
    %511 = vmatprep.mubr.f32.mxu0 0.0
    %512 = vmatmul.mubr.f32.gmra.mrb[0].mxu0 %v354
    %v513 = vpop.f32.mrb[0].mxu0
    %v514 = vadd.f32 0.0, %v513
    %v515 = vpop.f32.mrb[0].mxu0
    %516 = vmatprep.mubr.f32.mxu0 0.0
    %517 = vmatmul.mubr.f32.gmra.mrb[0].mxu0 %v357
    %v518 = vpop.f32.mrb[0].mxu0
    %v519 = vadd.f32 0.0, %v518
    %v520 = vpop.f32.mrb[0].mxu0
    %521 = vdwg.mxu0
    %v522 = vadd.f32 %v439, %v509
    %v523 = vadd.f32 %v440, %v514
    %v524 = vadd.f32 %v441, %v519
    %v525 = vld [vmem:[%s10] sm:$0xff]
    %v526 = vld [vmem:[%s10 + $0x8] sm:$0xff]
    %v527 = vld [vmem:[%s10 + $0x10] sm:$0xff]
    %v528 = vld [vmem:[%s10 + $0x18] sm:$0xff]
    %v529 = vld [vmem:[%s10 + $0x20] sm:$0xff]
    %v530 = vld [vmem:[%s10 + $0x28] sm:$0xff]
    %v531 = vld [vmem:[%s11] sm:$0xff]
    %v532 = vld [vmem:[%s11 + $0x8] sm:$0xff]
    %v533 = vld [vmem:[%s11 + $0x10] sm:$0xff]
    %v534 = vld [vmem:[%s11 + $0x18] sm:$0xff]
    %v535 = vld [vmem:[%s11 + $0x20] sm:$0xff]
    %v536 = vld [vmem:[%s11 + $0x28] sm:$0xff]
    %v537 = vld [vmem:[%s12] sm:$0xff]
    %v538 = vld [vmem:[%s12 + $0x8] sm:$0xff]
    %v539 = vld [vmem:[%s12 + $0x10] sm:$0xff]
    %v540 = vld [vmem:[%s13] sm:$0xff]
    %v541 = vld [vmem:[%s13 + $0x8] sm:$0xff]
    %v542 = vld [vmem:[%s13 + $0x10] sm:$0xff]
    %v543 = vld [vmem:[%s13 + $0x18] sm:$0xff]
    %v545 = vsel %vm349, %v525, 0
    %v548 = vsel %vm349, %v526, 0
    %v551 = vsel %vm349, %v527, 0
    %v554 = vsel %vm349, %v528, 0
    %v557 = vsel %vm349, %v529, 0
    %v560 = vsel %vm349, %v530, 0
    %562 = vmatprep.subr.mxu0 0.0
    %563 = vmatpush1.msra.mxu0 %v509
    %564 = vmatprep.subr.mxu0 0.0
    %565 = vmatpush1.msra.mxu0 %v514
    %566 = vmatprep.subr.mxu0 0.0
    %567 = vmatpush1.msra.mxu0 %v519
    %568 = vmatprep.subr.mxu0 0.0
    %569 = vmatpush1.msra.mxu0 0.0
    %570 = vmatprep.subr.mxu0 0.0
    %571 = vmatpush1.msra.mxu0 0.0
    %572 = vmatprep.subr.mxu0 0.0
    %573 = vmatpush1.msra.mxu0 0.0
    %574 = vmatprep.subr.mxu0 0.0
    %575 = vmatpush1.msra.mxu0 0.0
    %576 = vmatprep.subr.mxu0 0.0
    %577 = vmatpush1.msra.mxu0 0.0
    %578 = vmatprep.subr.mxu0 0.0
    %579 = vmatpush1.msra.mxu0 0.0
    %580 = vmatprep.subr.mxu0 0.0
    %581 = vmatpush1.msra.mxu0 0.0
    %582 = vmatprep.subr.mxu0 0.0
    %583 = vmatpush1.msra.mxu0 0.0
    %584 = vmatprep.subr.mxu0 0.0
    %585 = vmatpush1.msra.mxu0 0.0
    %586 = vmatprep.subr.mxu0 0.0
    %587 = vmatpush1.msra.mxu0 0.0
    %588 = vmatprep.subr.mxu0 0.0
    %589 = vmatpush1.msra.mxu0 0.0
    %590 = vmatprep.subr.mxu0 0.0
    %591 = vmatpush1.msra.mxu0 0.0
    %592 = vmatprep.subr.mxu0 0.0
    %593 = vmatpush1.msra.mxu0 0.0
    %594 = vmatprep.subr.mxu0 0.0
    %595 = vmatpush1.msra.mxu0 0.0
    %596 = vmatprep.subr.mxu0 0.0
    %597 = vmatpush1.msra.mxu0 0.0
    %598 = vmatprep.subr.mxu0 0.0
    %599 = vmatpush1.msra.mxu0 0.0
    %600 = vmatprep.subr.mxu0 0.0
    %601 = vmatpush1.msra.mxu0 0.0
    %602 = vmatprep.subr.mxu0 0.0
    %603 = vmatpush1.msra.mxu0 0.0
    %604 = vmatprep.subr.mxu0 0.0
    %605 = vmatpush1.msra.mxu0 0.0
    %606 = vmatprep.subr.mxu0 0.0
    %607 = vmatpush1.msra.mxu0 0.0
    %608 = vmatprep.subr.mxu0 0.0
    %609 = vmatpush1.msra.mxu0 0.0
    %610 = vmatprep.subr.mxu0 0.0
    %611 = vmatpush1.msra.mxu0 0.0
    %612 = vmatprep.subr.mxu0 0.0
    %613 = vmatpush1.msra.mxu0 0.0
    %614 = vmatprep.subr.mxu0 0.0
    %615 = vmatpush1.msra.mxu0 0.0
    %616 = vmatprep.subr.mxu0 0.0
    %617 = vmatpush1.msra.mxu0 0.0
    %618 = vmatprep.subr.mxu0 0.0
    %619 = vmatpush1.msra.mxu0 0.0
    %620 = vmatprep.subr.mxu0 0.0
    %621 = vmatpush1.msra.mxu0 0.0
    %622 = vmatprep.subr.mxu0 0.0
    %623 = vmatpush1.msra.mxu0 0.0
    %624 = vmatprep.subr.mxu0 0.0
    %625 = vmatpush1.msra.mxu0 0.0
    %626 = vmatprep.mubr.f32.mxu0 0.0
    %627 = vmatmul.mubr.f32.gmra.mrb[0].mxu0 %v545
    %v628 = vpop.f32.mrb[0].mxu0
    %v629 = vadd.f32 0.0, %v628
    %v630 = vpop.f32.mrb[0].mxu0
    %631 = vmatprep.mubr.f32.mxu0 0.0
    %632 = vmatmul.mubr.f32.gmra.mrb[0].mxu0 %v548
    %v633 = vpop.f32.mrb[0].mxu0
    %v634 = vadd.f32 0.0, %v633
    %v635 = vpop.f32.mrb[0].mxu0
    %636 = vmatprep.mubr.f32.mxu0 0.0
    %637 = vmatmul.mubr.f32.gmra.mrb[0].mxu0 %v551
    %v638 = vpop.f32.mrb[0].mxu0
    %v639 = vadd.f32 0.0, %v638
    %v640 = vpop.f32.mrb[0].mxu0
    %641 = vmatprep.mubr.f32.mxu0 0.0
    %642 = vmatmul.mubr.f32.gmra.mrb[0].mxu0 %v554
    %v643 = vpop.f32.mrb[0].mxu0
    %v644 = vadd.f32 0.0, %v643
    %v645 = vpop.f32.mrb[0].mxu0
    %646 = vmatprep.mubr.f32.mxu0 0.0
    %647 = vmatmul.mubr.f32.gmra.mrb[0].mxu0 %v557
    %v648 = vpop.f32.mrb[0].mxu0
    %v649 = vadd.f32 0.0, %v648
    %v650 = vpop.f32.mrb[0].mxu0
    %651 = vmatprep.mubr.f32.mxu0 0.0
    %652 = vmatmul.mubr.f32.gmra.mrb[0].mxu0 %v560
    %v653 = vpop.f32.mrb[0].mxu0
    %v654 = vadd.f32 0.0, %v653
    %v655 = vpop.f32.mrb[0].mxu0
    %656 = vdwg.mxu0
    %v658 = vsel %vm349, %v531, 0
    %v661 = vsel %vm349, %v532, 0
    %v664 = vsel %vm349, %v533, 0
    %v667 = vsel %vm349, %v534, 0
    %v670 = vsel %vm349, %v535, 0
    %v673 = vsel %vm349, %v536, 0
    %675 = vmatprep.subr.mxu0 0.0
    %676 = vmatpush1.msra.mxu0 %v509
    %677 = vmatprep.subr.mxu0 0.0
    %678 = vmatpush1.msra.mxu0 %v514
    %679 = vmatprep.subr.mxu0 0.0
    %680 = vmatpush1.msra.mxu0 %v519
    %681 = vmatprep.subr.mxu0 0.0
    %682 = vmatpush1.msra.mxu0 0.0
    %683 = vmatprep.subr.mxu0 0.0
    %684 = vmatpush1.msra.mxu0 0.0
    %685 = vmatprep.subr.mxu0 0.0
    %686 = vmatpush1.msra.mxu0 0.0
    %687 = vmatprep.subr.mxu0 0.0
    %688 = vmatpush1.msra.mxu0 0.0
    %689 = vmatprep.subr.mxu0 0.0
    %690 = vmatpush1.msra.mxu0 0.0
    %691 = vmatprep.subr.mxu0 0.0
    %692 = vmatpush1.msra.mxu0 0.0
    %693 = vmatprep.subr.mxu0 0.0
    %694 = vmatpush1.msra.mxu0 0.0
    %695 = vmatprep.subr.mxu0 0.0
    %696 = vmatpush1.msra.mxu0 0.0
    %697 = vmatprep.subr.mxu0 0.0
    %698 = vmatpush1.msra.mxu0 0.0
    %699 = vmatprep.subr.mxu0 0.0
    %700 = vmatpush1.msra.mxu0 0.0
    %701 = vmatprep.subr.mxu0 0.0
    %702 = vmatpush1.msra.mxu0 0.0
    %703 = vmatprep.subr.mxu0 0.0
    %704 = vmatpush1.msra.mxu0 0.0
    %705 = vmatprep.subr.mxu0 0.0
    %706 = vmatpush1.msra.mxu0 0.0
    %707 = vmatprep.subr.mxu0 0.0
    %708 = vmatpush1.msra.mxu0 0.0
    %709 = vmatprep.subr.mxu0 0.0
    %710 = vmatpush1.msra.mxu0 0.0
    %711 = vmatprep.subr.mxu0 0.0
    %712 = vmatpush1.msra.mxu0 0.0
    %713 = vmatprep.subr.mxu0 0.0
    %714 = vmatpush1.msra.mxu0 0.0
    %715 = vmatprep.subr.mxu0 0.0
    %716 = vmatpush1.msra.mxu0 0.0
    %717 = vmatprep.subr.mxu0 0.0
    %718 = vmatpush1.msra.mxu0 0.0
    %719 = vmatprep.subr.mxu0 0.0
    %720 = vmatpush1.msra.mxu0 0.0
    %721 = vmatprep.subr.mxu0 0.0
    %722 = vmatpush1.msra.mxu0 0.0
    %723 = vmatprep.subr.mxu0 0.0
    %724 = vmatpush1.msra.mxu0 0.0
    %725 = vmatprep.subr.mxu0 0.0
    %726 = vmatpush1.msra.mxu0 0.0
    %727 = vmatprep.subr.mxu0 0.0
    %728 = vmatpush1.msra.mxu0 0.0
    %729 = vmatprep.subr.mxu0 0.0
    %730 = vmatpush1.msra.mxu0 0.0
    %731 = vmatprep.subr.mxu0 0.0
    %732 = vmatpush1.msra.mxu0 0.0
    %733 = vmatprep.subr.mxu0 0.0
    %734 = vmatpush1.msra.mxu0 0.0
    %735 = vmatprep.subr.mxu0 0.0
    %736 = vmatpush1.msra.mxu0 0.0
    %737 = vmatprep.subr.mxu0 0.0
    %738 = vmatpush1.msra.mxu0 0.0
    %739 = vmatprep.mubr.f32.mxu0 0.0
    %740 = vmatmul.mubr.f32.gmra.mrb[0].mxu0 %v658
    %v741 = vpop.f32.mrb[0].mxu0
    %v742 = vadd.f32 0.0, %v741
    %v743 = vpop.f32.mrb[0].mxu0
    %744 = vmatprep.mubr.f32.mxu0 0.0
    %745 = vmatmul.mubr.f32.gmra.mrb[0].mxu0 %v661
    %v746 = vpop.f32.mrb[0].mxu0
    %v747 = vadd.f32 0.0, %v746
    %v748 = vpop.f32.mrb[0].mxu0
    %749 = vmatprep.mubr.f32.mxu0 0.0
    %750 = vmatmul.mubr.f32.gmra.mrb[0].mxu0 %v664
    %v751 = vpop.f32.mrb[0].mxu0
    %v752 = vadd.f32 0.0, %v751
    %v753 = vpop.f32.mrb[0].mxu0
    %754 = vmatprep.mubr.f32.mxu0 0.0
    %755 = vmatmul.mubr.f32.gmra.mrb[0].mxu0 %v667
    %v756 = vpop.f32.mrb[0].mxu0
    %v757 = vadd.f32 0.0, %v756
    %v758 = vpop.f32.mrb[0].mxu0
    %759 = vmatprep.mubr.f32.mxu0 0.0
    %760 = vmatmul.mubr.f32.gmra.mrb[0].mxu0 %v670
    %v761 = vpop.f32.mrb[0].mxu0
    %v762 = vadd.f32 0.0, %v761
    %v763 = vpop.f32.mrb[0].mxu0
    %764 = vmatprep.mubr.f32.mxu0 0.0
    %765 = vmatmul.mubr.f32.gmra.mrb[0].mxu0 %v673
    %v766 = vpop.f32.mrb[0].mxu0
    %v767 = vadd.f32 0.0, %v766
    %v768 = vpop.f32.mrb[0].mxu0
    %769 = vdwg.mxu0
    %v770 = vld [vmem:[%s7] sm:$0xff]
    %v771 = vld [vmem:[%s7 + $0x8] sm:$0xff]
    %v772 = vld [vmem:[%s7 + $0x10] sm:$0xff]
    %v773 = vld [vmem:[%s7 + $0x18] sm:$0xff]
    %vm774 = vcmask 261120
    %v776 = vsel %vm774, %v629, 0
    %v779 = vsel %vm774, %v634, 0
    %v782 = vsel %vm774, %v639, 0
    %v785 = vsel %vm774, %v644, 0
    %v788 = vsel %vm774, %v649, 0
    %v791 = vsel %vm774, %v654, 0
    %793 = vmatprep.subr.mxu0 0.0
    %794 = vmatpush1.msra.mxu0 %v770
    %795 = vmatprep.subr.mxu0 0.0
    %796 = vmatpush1.msra.mxu0 %v771
    %797 = vmatprep.subr.mxu0 0.0
    %798 = vmatpush1.msra.mxu0 %v772
    %799 = vmatprep.subr.mxu0 0.0
    %800 = vmatpush1.msra.mxu0 %v773
    %801 = vmatprep.subr.mxu0 0.0
    %802 = vmatpush1.msra.mxu0 0.0
    %803 = vmatprep.subr.mxu0 0.0
    %804 = vmatpush1.msra.mxu0 0.0
    %805 = vmatprep.subr.mxu0 0.0
    %806 = vmatpush1.msra.mxu0 0.0
    %807 = vmatprep.subr.mxu0 0.0
    %808 = vmatpush1.msra.mxu0 0.0
    %809 = vmatprep.subr.mxu0 0.0
    %810 = vmatpush1.msra.mxu0 0.0
    %811 = vmatprep.subr.mxu0 0.0
    %812 = vmatpush1.msra.mxu0 0.0
    %813 = vmatprep.subr.mxu0 0.0
    %814 = vmatpush1.msra.mxu0 0.0
    %815 = vmatprep.subr.mxu0 0.0
    %816 = vmatpush1.msra.mxu0 0.0
    %817 = vmatprep.subr.mxu0 0.0
    %818 = vmatpush1.msra.mxu0 0.0
    %819 = vmatprep.subr.mxu0 0.0
    %820 = vmatpush1.msra.mxu0 0.0
    %821 = vmatprep.subr.mxu0 0.0
    %822 = vmatpush1.msra.mxu0 0.0
    %823 = vmatprep.subr.mxu0 0.0
    %824 = vmatpush1.msra.mxu0 0.0
    %825 = vmatprep.subr.mxu0 0.0
    %826 = vmatpush1.msra.mxu0 0.0
    %827 = vmatprep.subr.mxu0 0.0
    %828 = vmatpush1.msra.mxu0 0.0
    %829 = vmatprep.subr.mxu0 0.0
    %830 = vmatpush1.msra.mxu0 0.0
    %831 = vmatprep.subr.mxu0 0.0
    %832 = vmatpush1.msra.mxu0 0.0
    %833 = vmatprep.subr.mxu0 0.0
    %834 = vmatpush1.msra.mxu0 0.0
    %835 = vmatprep.subr.mxu0 0.0
    %836 = vmatpush1.msra.mxu0 0.0
    %837 = vmatprep.subr.mxu0 0.0
    %838 = vmatpush1.msra.mxu0 0.0
    %839 = vmatprep.subr.mxu0 0.0
    %840 = vmatpush1.msra.mxu0 0.0
    %841 = vmatprep.subr.mxu0 0.0
    %842 = vmatpush1.msra.mxu0 0.0
    %843 = vmatprep.subr.mxu0 0.0
    %844 = vmatpush1.msra.mxu0 0.0
    %845 = vmatprep.subr.mxu0 0.0
    %846 = vmatpush1.msra.mxu0 0.0
    %847 = vmatprep.subr.mxu0 0.0
    %848 = vmatpush1.msra.mxu0 0.0
    %849 = vmatprep.subr.mxu0 0.0
    %850 = vmatpush1.msra.mxu0 0.0
    %851 = vmatprep.subr.mxu0 0.0
    %852 = vmatpush1.msra.mxu0 0.0
    %853 = vmatprep.subr.mxu0 0.0
    %854 = vmatpush1.msra.mxu0 0.0
    %855 = vmatprep.subr.mxu0 0.0
    %856 = vmatpush1.msra.mxu0 0.0
    %857 = vmatprep.mubr.f32.mxu0 0.0
    %858 = vmatmul.mubr.f32.gmra.mrb[0].mxu0 %v776
    %v859 = vpop.f32.mrb[0].mxu0
    %v860 = vadd.f32 0.0, %v859
    %v861 = vpop.f32.mrb[0].mxu0
    %862 = vmatprep.mubr.f32.mxu0 0.0
    %863 = vmatmul.mubr.f32.gmra.mrb[0].mxu0 %v779
    %v864 = vpop.f32.mrb[0].mxu0
    %v865 = vadd.f32 0.0, %v864
    %v866 = vpop.f32.mrb[0].mxu0
    %867 = vmatprep.mubr.f32.mxu0 0.0
    %868 = vmatmul.mubr.f32.gmra.mrb[0].mxu0 %v782
    %v869 = vpop.f32.mrb[0].mxu0
    %v870 = vadd.f32 0.0, %v869
    %v871 = vpop.f32.mrb[0].mxu0
    %872 = vmatprep.mubr.f32.mxu0 0.0
    %873 = vmatmul.mubr.f32.gmra.mrb[0].mxu0 %v785
    %v874 = vpop.f32.mrb[0].mxu0
    %v875 = vadd.f32 0.0, %v874
    %v876 = vpop.f32.mrb[0].mxu0
    %877 = vmatprep.mubr.f32.mxu0 0.0
    %878 = vmatmul.mubr.f32.gmra.mrb[0].mxu0 %v788
    %v879 = vpop.f32.mrb[0].mxu0
    %v880 = vadd.f32 0.0, %v879
    %v881 = vpop.f32.mrb[0].mxu0
    %882 = vmatprep.mubr.f32.mxu0 0.0
    %883 = vmatmul.mubr.f32.gmra.mrb[0].mxu0 %v791
    %v884 = vpop.f32.mrb[0].mxu0
    %v885 = vadd.f32 0.0, %v884
    %v886 = vpop.f32.mrb[0].mxu0
    %887 = vdwg.mxu0
    %v888 = vld [vmem:[%s8] sm:$0xff]
    %v889 = vld [vmem:[%s8 + $0x8] sm:$0xff]
    %v890 = vld [vmem:[%s8 + $0x10] sm:$0xff]
    %v891 = vld [vmem:[%s8 + $0x18] sm:$0xff]
    %v893 = vsel %vm774, %v742, 0
    %v896 = vsel %vm774, %v747, 0
    %v899 = vsel %vm774, %v752, 0
    %v902 = vsel %vm774, %v757, 0
    %v905 = vsel %vm774, %v762, 0
    %v908 = vsel %vm774, %v767, 0
    %910 = vmatprep.subr.mxu0 0.0
    %911 = vmatpush1.msra.mxu0 %v888
    %912 = vmatprep.subr.mxu0 0.0
    %913 = vmatpush1.msra.mxu0 %v889
    %914 = vmatprep.subr.mxu0 0.0
    %915 = vmatpush1.msra.mxu0 %v890
    %916 = vmatprep.subr.mxu0 0.0
    %917 = vmatpush1.msra.mxu0 %v891
    %918 = vmatprep.subr.mxu0 0.0
    %919 = vmatpush1.msra.mxu0 0.0
    %920 = vmatprep.subr.mxu0 0.0
    %921 = vmatpush1.msra.mxu0 0.0
    %922 = vmatprep.subr.mxu0 0.0
    %923 = vmatpush1.msra.mxu0 0.0
    %924 = vmatprep.subr.mxu0 0.0
    %925 = vmatpush1.msra.mxu0 0.0
    %926 = vmatprep.subr.mxu0 0.0
    %927 = vmatpush1.msra.mxu0 0.0
    %928 = vmatprep.subr.mxu0 0.0
    %929 = vmatpush1.msra.mxu0 0.0
    %930 = vmatprep.subr.mxu0 0.0
    %931 = vmatpush1.msra.mxu0 0.0
    %932 = vmatprep.subr.mxu0 0.0
    %933 = vmatpush1.msra.mxu0 0.0
    %934 = vmatprep.subr.mxu0 0.0
    %935 = vmatpush1.msra.mxu0 0.0
    %936 = vmatprep.subr.mxu0 0.0
    %937 = vmatpush1.msra.mxu0 0.0
    %938 = vmatprep.subr.mxu0 0.0
    %939 = vmatpush1.msra.mxu0 0.0
    %940 = vmatprep.subr.mxu0 0.0
    %941 = vmatpush1.msra.mxu0 0.0
    %942 = vmatprep.subr.mxu0 0.0
    %943 = vmatpush1.msra.mxu0 0.0
    %944 = vmatprep.subr.mxu0 0.0
    %945 = vmatpush1.msra.mxu0 0.0
    %946 = vmatprep.subr.mxu0 0.0
    %947 = vmatpush1.msra.mxu0 0.0
    %948 = vmatprep.subr.mxu0 0.0
    %949 = vmatpush1.msra.mxu0 0.0
    %950 = vmatprep.subr.mxu0 0.0
    %951 = vmatpush1.msra.mxu0 0.0
    %952 = vmatprep.subr.mxu0 0.0
    %953 = vmatpush1.msra.mxu0 0.0
    %954 = vmatprep.subr.mxu0 0.0
    %955 = vmatpush1.msra.mxu0 0.0
    %956 = vmatprep.subr.mxu0 0.0
    %957 = vmatpush1.msra.mxu0 0.0
    %958 = vmatprep.subr.mxu0 0.0
    %959 = vmatpush1.msra.mxu0 0.0
    %960 = vmatprep.subr.mxu0 0.0
    %961 = vmatpush1.msra.mxu0 0.0
    %962 = vmatprep.subr.mxu0 0.0
    %963 = vmatpush1.msra.mxu0 0.0
    %964 = vmatprep.subr.mxu0 0.0
    %965 = vmatpush1.msra.mxu0 0.0
    %966 = vmatprep.subr.mxu0 0.0
    %967 = vmatpush1.msra.mxu0 0.0
    %968 = vmatprep.subr.mxu0 0.0
    %969 = vmatpush1.msra.mxu0 0.0
    %970 = vmatprep.subr.mxu0 0.0
    %971 = vmatpush1.msra.mxu0 0.0
    %972 = vmatprep.subr.mxu0 0.0
    %973 = vmatpush1.msra.mxu0 0.0
    %974 = vmatprep.mubr.f32.mxu0 0.0
    %975 = vmatmul.mubr.f32.gmra.mrb[0].mxu0 %v893
    %v976 = vpop.f32.mrb[0].mxu0
    %v977 = vadd.f32 0.0, %v976
    %v978 = vpop.f32.mrb[0].mxu0
    %979 = vmatprep.mubr.f32.mxu0 0.0
    %980 = vmatmul.mubr.f32.gmra.mrb[0].mxu0 %v896
    %v981 = vpop.f32.mrb[0].mxu0
    %v982 = vadd.f32 0.0, %v981
    %v983 = vpop.f32.mrb[0].mxu0
    %984 = vmatprep.mubr.f32.mxu0 0.0
    %985 = vmatmul.mubr.f32.gmra.mrb[0].mxu0 %v899
    %v986 = vpop.f32.mrb[0].mxu0
    %v987 = vadd.f32 0.0, %v986
    %v988 = vpop.f32.mrb[0].mxu0
    %989 = vmatprep.mubr.f32.mxu0 0.0
    %990 = vmatmul.mubr.f32.gmra.mrb[0].mxu0 %v902
    %v991 = vpop.f32.mrb[0].mxu0
    %v992 = vadd.f32 0.0, %v991
    %v993 = vpop.f32.mrb[0].mxu0
    %994 = vmatprep.mubr.f32.mxu0 0.0
    %995 = vmatmul.mubr.f32.gmra.mrb[0].mxu0 %v905
    %v996 = vpop.f32.mrb[0].mxu0
    %v997 = vadd.f32 0.0, %v996
    %v998 = vpop.f32.mrb[0].mxu0
    %999 = vmatprep.mubr.f32.mxu0 0.0
    %1000 = vmatmul.mubr.f32.gmra.mrb[0].mxu0 %v908
    %v1001 = vpop.f32.mrb[0].mxu0
    %v1002 = vadd.f32 0.0, %v1001
    %v1003 = vpop.f32.mrb[0].mxu0
    %1004 = vdwg.mxu0
    %v1005 = vld [vmem:[%s9] sm:$0xff]
    %v1006 = vld [vmem:[%s9 + $0x8] sm:$0xff]
    %v1007 = vld [vmem:[%s9 + $0x10] sm:$0xff]
    %v1008 = vld [vmem:[%s9 + $0x18] sm:$0xff]
    %1009 = vmatprep.subr.mxu0 0.0
    %1010 = vmatpush1.msra.mxu0 %v1005
    %1011 = vmatprep.subr.mxu0 0.0
    %1012 = vmatpush1.msra.mxu0 %v1006
    %1013 = vmatprep.subr.mxu0 0.0
    %1014 = vmatpush1.msra.mxu0 %v1007
    %1015 = vmatprep.subr.mxu0 0.0
    %1016 = vmatpush1.msra.mxu0 %v1008
    %1017 = vmatprep.subr.mxu0 0.0
    %1018 = vmatpush1.msra.mxu0 0.0
    %1019 = vmatprep.subr.mxu0 0.0
    %1020 = vmatpush1.msra.mxu0 0.0
    %1021 = vmatprep.subr.mxu0 0.0
    %1022 = vmatpush1.msra.mxu0 0.0
    %1023 = vmatprep.subr.mxu0 0.0
    %1024 = vmatpush1.msra.mxu0 0.0
    %1025 = vmatprep.subr.mxu0 0.0
    %1026 = vmatpush1.msra.mxu0 0.0
    %1027 = vmatprep.subr.mxu0 0.0
    %1028 = vmatpush1.msra.mxu0 0.0
    %1029 = vmatprep.subr.mxu0 0.0
    %1030 = vmatpush1.msra.mxu0 0.0
    %1031 = vmatprep.subr.mxu0 0.0
    %1032 = vmatpush1.msra.mxu0 0.0
    %1033 = vmatprep.subr.mxu0 0.0
    %1034 = vmatpush1.msra.mxu0 0.0
    %1035 = vmatprep.subr.mxu0 0.0
    %1036 = vmatpush1.msra.mxu0 0.0
    %1037 = vmatprep.subr.mxu0 0.0
    %1038 = vmatpush1.msra.mxu0 0.0
    %1039 = vmatprep.subr.mxu0 0.0
    %1040 = vmatpush1.msra.mxu0 0.0
    %1041 = vmatprep.subr.mxu0 0.0
    %1042 = vmatpush1.msra.mxu0 0.0
    %1043 = vmatprep.subr.mxu0 0.0
    %1044 = vmatpush1.msra.mxu0 0.0
    %1045 = vmatprep.subr.mxu0 0.0
    %1046 = vmatpush1.msra.mxu0 0.0
    %1047 = vmatprep.subr.mxu0 0.0
    %1048 = vmatpush1.msra.mxu0 0.0
    %1049 = vmatprep.subr.mxu0 0.0
    %1050 = vmatpush1.msra.mxu0 0.0
    %1051 = vmatprep.subr.mxu0 0.0
    %1052 = vmatpush1.msra.mxu0 0.0
    %1053 = vmatprep.subr.mxu0 0.0
    %1054 = vmatpush1.msra.mxu0 0.0
    %1055 = vmatprep.subr.mxu0 0.0
    %1056 = vmatpush1.msra.mxu0 0.0
    %1057 = vmatprep.subr.mxu0 0.0
    %1058 = vmatpush1.msra.mxu0 0.0
    %1059 = vmatprep.subr.mxu0 0.0
    %1060 = vmatpush1.msra.mxu0 0.0
    %1061 = vmatprep.subr.mxu0 0.0
    %1062 = vmatpush1.msra.mxu0 0.0
    %1063 = vmatprep.subr.mxu0 0.0
    %1064 = vmatpush1.msra.mxu0 0.0
    %1065 = vmatprep.subr.mxu0 0.0
    %1066 = vmatpush1.msra.mxu0 0.0
    %1067 = vmatprep.subr.mxu0 0.0
    %1068 = vmatpush1.msra.mxu0 0.0
    %1069 = vmatprep.subr.mxu0 0.0
    %1070 = vmatpush1.msra.mxu0 0.0
    %1071 = vmatprep.subr.mxu0 0.0
    %1072 = vmatpush1.msra.mxu0 0.0
    %1073 = vmatprep.mubr.f32.mxu0 0.0
    %1074 = vmatmul.mubr.f32.gmra.mrb[0].mxu0 %v893
    %v1075 = vpop.f32.mrb[0].mxu0
    %v1076 = vadd.f32 0.0, %v1075
    %v1077 = vpop.f32.mrb[0].mxu0
    %1078 = vmatprep.mubr.f32.mxu0 0.0
    %1079 = vmatmul.mubr.f32.gmra.mrb[0].mxu0 %v896
    %v1080 = vpop.f32.mrb[0].mxu0
    %v1081 = vadd.f32 0.0, %v1080
    %v1082 = vpop.f32.mrb[0].mxu0
    %1083 = vmatprep.mubr.f32.mxu0 0.0
    %1084 = vmatmul.mubr.f32.gmra.mrb[0].mxu0 %v899
    %v1085 = vpop.f32.mrb[0].mxu0
    %v1086 = vadd.f32 0.0, %v1085
    %v1087 = vpop.f32.mrb[0].mxu0
    %1088 = vmatprep.mubr.f32.mxu0 0.0
    %1089 = vmatmul.mubr.f32.gmra.mrb[0].mxu0 %v902
    %v1090 = vpop.f32.mrb[0].mxu0
    %v1091 = vadd.f32 0.0, %v1090
    %v1092 = vpop.f32.mrb[0].mxu0
    %1093 = vmatprep.mubr.f32.mxu0 0.0
    %1094 = vmatmul.mubr.f32.gmra.mrb[0].mxu0 %v905
    %v1095 = vpop.f32.mrb[0].mxu0
    %v1096 = vadd.f32 0.0, %v1095
    %v1097 = vpop.f32.mrb[0].mxu0
    %1098 = vmatprep.mubr.f32.mxu0 0.0
    %1099 = vmatmul.mubr.f32.gmra.mrb[0].mxu0 %v908
    %v1100 = vpop.f32.mrb[0].mxu0
    %v1101 = vadd.f32 0.0, %v1100
    %v1102 = vpop.f32.mrb[0].mxu0
    %1103 = vdwg.mxu0
    %v1104 = vmul.f32 %v860, %v977
    %v1105 = vmul.f32 %v865, %v982
    %v1106 = vmul.f32 %v870, %v987
    %v1107 = vmul.f32 %v875, %v992
    %v1108 = vmul.f32 %v880, %v997
    %v1109 = vmul.f32 %v885, %v1002
    %v1111 = vsel %vm774, %v1104, 0
    %v1114 = vsel %vm774, %v1105, 0
    %v1117 = vsel %vm774, %v1106, 0
    %v1120 = vsel %vm774, %v1107, 0
    %v1123 = vsel %vm774, %v1108, 0
    %v1126 = vsel %vm774, %v1109, 0
    %1128 = vmatprep.subr.mxu0 0.0
    %1129 = vmatpush1.msra.mxu0 %v540
    %1130 = vmatprep.subr.mxu0 0.0
    %1131 = vmatpush1.msra.mxu0 %v541
    %1132 = vmatprep.subr.mxu0 0.0
    %1133 = vmatpush1.msra.mxu0 %v542
    %1134 = vmatprep.subr.mxu0 0.0
    %1135 = vmatpush1.msra.mxu0 %v543
    %1136 = vmatprep.subr.mxu0 0.0
    %1137 = vmatpush1.msra.mxu0 0.0
    %1138 = vmatprep.subr.mxu0 0.0
    %1139 = vmatpush1.msra.mxu0 0.0
    %1140 = vmatprep.subr.mxu0 0.0
    %1141 = vmatpush1.msra.mxu0 0.0
    %1142 = vmatprep.subr.mxu0 0.0
    %1143 = vmatpush1.msra.mxu0 0.0
    %1144 = vmatprep.subr.mxu0 0.0
    %1145 = vmatpush1.msra.mxu0 0.0
    %1146 = vmatprep.subr.mxu0 0.0
    %1147 = vmatpush1.msra.mxu0 0.0
    %1148 = vmatprep.subr.mxu0 0.0
    %1149 = vmatpush1.msra.mxu0 0.0
    %1150 = vmatprep.subr.mxu0 0.0
    %1151 = vmatpush1.msra.mxu0 0.0
    %1152 = vmatprep.subr.mxu0 0.0
    %1153 = vmatpush1.msra.mxu0 0.0
    %1154 = vmatprep.subr.mxu0 0.0
    %1155 = vmatpush1.msra.mxu0 0.0
    %1156 = vmatprep.subr.mxu0 0.0
    %1157 = vmatpush1.msra.mxu0 0.0
    %1158 = vmatprep.subr.mxu0 0.0
    %1159 = vmatpush1.msra.mxu0 0.0
    %1160 = vmatprep.subr.mxu0 0.0
    %1161 = vmatpush1.msra.mxu0 0.0
    %1162 = vmatprep.subr.mxu0 0.0
    %1163 = vmatpush1.msra.mxu0 0.0
    %1164 = vmatprep.subr.mxu0 0.0
    %1165 = vmatpush1.msra.mxu0 0.0
    %1166 = vmatprep.subr.mxu0 0.0
    %1167 = vmatpush1.msra.mxu0 0.0
    %1168 = vmatprep.subr.mxu0 0.0
    %1169 = vmatpush1.msra.mxu0 0.0
    %1170 = vmatprep.subr.mxu0 0.0
    %1171 = vmatpush1.msra.mxu0 0.0
    %1172 = vmatprep.subr.mxu0 0.0
    %1173 = vmatpush1.msra.mxu0 0.0
    %1174 = vmatprep.subr.mxu0 0.0
    %1175 = vmatpush1.msra.mxu0 0.0
    %1176 = vmatprep.subr.mxu0 0.0
    %1177 = vmatpush1.msra.mxu0 0.0
    %1178 = vmatprep.subr.mxu0 0.0
    %1179 = vmatpush1.msra.mxu0 0.0
    %1180 = vmatprep.subr.mxu0 0.0
    %1181 = vmatpush1.msra.mxu0 0.0
    %1182 = vmatprep.subr.mxu0 0.0
    %1183 = vmatpush1.msra.mxu0 0.0
    %1184 = vmatprep.subr.mxu0 0.0
    %1185 = vmatpush1.msra.mxu0 0.0
    %1186 = vmatprep.subr.mxu0 0.0
    %1187 = vmatpush1.msra.mxu0 0.0
    %1188 = vmatprep.subr.mxu0 0.0
    %1189 = vmatpush1.msra.mxu0 0.0
    %1190 = vmatprep.subr.mxu0 0.0
    %1191 = vmatpush1.msra.mxu0 0.0
    %1192 = vmatprep.mubr.f32.mxu0 0.0
    %1193 = vmatmul.mubr.f32.gmra.mrb[0].mxu0 %v1111
    %v1194 = vpop.f32.mrb[0].mxu0
    %v1195 = vadd.f32 0.0, %v1194
    %v1196 = vpop.f32.mrb[0].mxu0
    %1197 = vmatprep.mubr.f32.mxu0 0.0
    %1198 = vmatmul.mubr.f32.gmra.mrb[0].mxu0 %v1114
    %v1199 = vpop.f32.mrb[0].mxu0
    %v1200 = vadd.f32 0.0, %v1199
    %v1201 = vpop.f32.mrb[0].mxu0
    %1202 = vmatprep.mubr.f32.mxu0 0.0
    %1203 = vmatmul.mubr.f32.gmra.mrb[0].mxu0 %v1117
    %v1204 = vpop.f32.mrb[0].mxu0
    %v1205 = vadd.f32 0.0, %v1204
    %v1206 = vpop.f32.mrb[0].mxu0
    %1207 = vmatprep.mubr.f32.mxu0 0.0
    %1208 = vmatmul.mubr.f32.gmra.mrb[0].mxu0 %v1120
    %v1209 = vpop.f32.mrb[0].mxu0
    %v1210 = vadd.f32 0.0, %v1209
    %v1211 = vpop.f32.mrb[0].mxu0
    %1212 = vmatprep.mubr.f32.mxu0 0.0
    %1213 = vmatmul.mubr.f32.gmra.mrb[0].mxu0 %v1123
    %v1214 = vpop.f32.mrb[0].mxu0
    %v1215 = vadd.f32 0.0, %v1214
    %v1216 = vpop.f32.mrb[0].mxu0
    %1217 = vmatprep.mubr.f32.mxu0 0.0
    %1218 = vmatmul.mubr.f32.gmra.mrb[0].mxu0 %v1126
    %v1219 = vpop.f32.mrb[0].mxu0
    %v1220 = vadd.f32 0.0, %v1219
    %v1221 = vpop.f32.mrb[0].mxu0
    %1222 = vdwg.mxu0
    %v1223 = vmax.f32 %v1195, -10.0
    %v1224 = vmax.f32 %v1200, -10.0
    %v1225 = vmax.f32 %v1205, -10.0
    %v1226 = vmax.f32 %v1210, -10.0
    %v1227 = vmax.f32 %v1215, -10.0
    %v1228 = vmax.f32 %v1220, -10.0
    %v1229 = vmin.f32 %v1223, 10.0
    %v1230 = vmin.f32 %v1224, 10.0
    %v1231 = vmin.f32 %v1225, 10.0
    %v1232 = vmin.f32 %v1226, 10.0
    %v1233 = vmin.f32 %v1227, 10.0
    %v1234 = vmin.f32 %v1228, 10.0
    %v1235 = vmul.f32 %v1229, 1.442695
    %v1236 = vpow.pop %v1235
    %v1237 = vmul.f32 %v1230, 1.442695
    %v1238 = vpow.pop %v1237
    %v1239 = vmul.f32 %v1231, 1.442695
    %v1240 = vpow.pop %v1239
    %v1241 = vmul.f32 %v1232, 1.442695
    %v1242 = vpow.pop %v1241
    %v1243 = vmul.f32 %v1233, 1.442695
    %v1244 = vpow.pop %v1243
    %v1245 = vmul.f32 %v1234, 1.442695
    %v1246 = vpow.pop %v1245
    %vm1247 = vcmask 392192
    %v1249 = vsel %vm1247, %v537, 0
    %v1252 = vsel %vm1247, %v538, 0
    %v1255 = vsel %vm1247, %v539, 0
    %1257 = vmatprep.subr.mxu0 0.0
    %1258 = vmatpush1.msra.mxu0 %v1236
    %1259 = vmatprep.subr.mxu0 0.0
    %1260 = vmatpush1.msra.mxu0 %v1238
    %1261 = vmatprep.subr.mxu0 0.0
    %1262 = vmatpush1.msra.mxu0 %v1240
    %1263 = vmatprep.subr.mxu0 0.0
    %1264 = vmatpush1.msra.mxu0 %v1242
    %1265 = vmatprep.subr.mxu0 0.0
    %1266 = vmatpush1.msra.mxu0 %v1244
    %1267 = vmatprep.subr.mxu0 0.0
    %1268 = vmatpush1.msra.mxu0 %v1246
    %1269 = vmatprep.subr.mxu0 0.0
    %1270 = vmatpush1.msra.mxu0 0.0
    %1271 = vmatprep.subr.mxu0 0.0
    %1272 = vmatpush1.msra.mxu0 0.0
    %1273 = vmatprep.subr.mxu0 0.0
    %1274 = vmatpush1.msra.mxu0 0.0
    %1275 = vmatprep.subr.mxu0 0.0
    %1276 = vmatpush1.msra.mxu0 0.0
    %1277 = vmatprep.subr.mxu0 0.0
    %1278 = vmatpush1.msra.mxu0 0.0
    %1279 = vmatprep.subr.mxu0 0.0
    %1280 = vmatpush1.msra.mxu0 0.0
    %1281 = vmatprep.subr.mxu0 0.0
    %1282 = vmatpush1.msra.mxu0 0.0
    %1283 = vmatprep.subr.mxu0 0.0
    %1284 = vmatpush1.msra.mxu0 0.0
    %1285 = vmatprep.subr.mxu0 0.0
    %1286 = vmatpush1.msra.mxu0 0.0
    %1287 = vmatprep.subr.mxu0 0.0
    %1288 = vmatpush1.msra.mxu0 0.0
    %1289 = vmatprep.subr.mxu0 0.0
    %1290 = vmatpush1.msra.mxu0 0.0
    %1291 = vmatprep.subr.mxu0 0.0
    %1292 = vmatpush1.msra.mxu0 0.0
    %1293 = vmatprep.subr.mxu0 0.0
    %1294 = vmatpush1.msra.mxu0 0.0
    %1295 = vmatprep.subr.mxu0 0.0
    %1296 = vmatpush1.msra.mxu0 0.0
    %1297 = vmatprep.subr.mxu0 0.0
    %1298 = vmatpush1.msra.mxu0 0.0
    %1299 = vmatprep.subr.mxu0 0.0
    %1300 = vmatpush1.msra.mxu0 0.0
    %1301 = vmatprep.subr.mxu0 0.0
    %1302 = vmatpush1.msra.mxu0 0.0
    %1303 = vmatprep.subr.mxu0 0.0
    %1304 = vmatpush1.msra.mxu0 0.0
    %1305 = vmatprep.subr.mxu0 0.0
    %1306 = vmatpush1.msra.mxu0 0.0
    %1307 = vmatprep.subr.mxu0 0.0
    %1308 = vmatpush1.msra.mxu0 0.0
    %1309 = vmatprep.subr.mxu0 0.0
    %1310 = vmatpush1.msra.mxu0 0.0
    %1311 = vmatprep.subr.mxu0 0.0
    %1312 = vmatpush1.msra.mxu0 0.0
    %1313 = vmatprep.subr.mxu0 0.0
    %1314 = vmatpush1.msra.mxu0 0.0
    %1315 = vmatprep.subr.mxu0 0.0
    %1316 = vmatpush1.msra.mxu0 0.0
    %1317 = vmatprep.subr.mxu0 0.0
    %1318 = vmatpush1.msra.mxu0 0.0
    %1319 = vmatprep.subr.mxu0 0.0
    %1320 = vmatpush1.msra.mxu0 0.0
    %1321 = vmatprep.mubr.f32.mxu0 0.0
    %1322 = vmatmul.mubr.f32.gmra.mrb[0].mxu0 %v1249
    %v1323 = vpop.f32.mrb[0].mxu0
    %v1324 = vadd.f32 0.0, %v1323
    %v1325 = vpop.f32.mrb[0].mxu0
    %1326 = vmatprep.mubr.f32.mxu0 0.0
    %1327 = vmatmul.mubr.f32.gmra.mrb[0].mxu0 %v1252
    %v1328 = vpop.f32.mrb[0].mxu0
    %v1329 = vadd.f32 0.0, %v1328
    %v1330 = vpop.f32.mrb[0].mxu0
    %1331 = vmatprep.mubr.f32.mxu0 0.0
    %1332 = vmatmul.mubr.f32.gmra.mrb[0].mxu0 %v1255
    %v1333 = vpop.f32.mrb[0].mxu0
    %v1334 = vadd.f32 0.0, %v1333
    %v1335 = vpop.f32.mrb[0].mxu0
    %1336 = vdwg.mxu0
    %1337 = vmatprep.subr.mxu0 0.0
    %1338 = vmatpush1.msra.mxu0 %v1324
    %1339 = vmatprep.subr.mxu0 0.0
    %1340 = vmatpush1.msra.mxu0 %v1329
    %1341 = vmatprep.subr.mxu0 0.0
    %1342 = vmatpush1.msra.mxu0 %v1334
    %1343 = vmatprep.subr.mxu0 0.0
    %1344 = vmatpush1.msra.mxu0 0.0
    %1345 = vmatprep.subr.mxu0 0.0
    %1346 = vmatpush1.msra.mxu0 0.0
    %1347 = vmatprep.subr.mxu0 0.0
    %1348 = vmatpush1.msra.mxu0 0.0
    %1349 = vmatprep.subr.mxu0 0.0
    %1350 = vmatpush1.msra.mxu0 0.0
    %1351 = vmatprep.subr.mxu0 0.0
    %1352 = vmatpush1.msra.mxu0 0.0
    %1353 = vmatprep.subr.mxu0 0.0
    %1354 = vmatpush1.msra.mxu0 0.0
    %1355 = vmatprep.subr.mxu0 0.0
    %1356 = vmatpush1.msra.mxu0 0.0
    %1357 = vmatprep.subr.mxu0 0.0
    %1358 = vmatpush1.msra.mxu0 0.0
    %1359 = vmatprep.subr.mxu0 0.0
    %1360 = vmatpush1.msra.mxu0 0.0
    %1361 = vmatprep.subr.mxu0 0.0
    %1362 = vmatpush1.msra.mxu0 0.0
    %1363 = vmatprep.subr.mxu0 0.0
    %1364 = vmatpush1.msra.mxu0 0.0
    %1365 = vmatprep.subr.mxu0 0.0
    %1366 = vmatpush1.msra.mxu0 0.0
    %1367 = vmatprep.subr.mxu0 0.0
    %1368 = vmatpush1.msra.mxu0 0.0
    %1369 = vmatprep.subr.mxu0 0.0
    %1370 = vmatpush1.msra.mxu0 0.0
    %1371 = vmatprep.subr.mxu0 0.0
    %1372 = vmatpush1.msra.mxu0 0.0
    %1373 = vmatprep.subr.mxu0 0.0
    %1374 = vmatpush1.msra.mxu0 0.0
    %1375 = vmatprep.subr.mxu0 0.0
    %1376 = vmatpush1.msra.mxu0 0.0
    %1377 = vmatprep.subr.mxu0 0.0
    %1378 = vmatpush1.msra.mxu0 0.0
    %1379 = vmatprep.subr.mxu0 0.0
    %1380 = vmatpush1.msra.mxu0 0.0
    %1381 = vmatprep.subr.mxu0 0.0
    %1382 = vmatpush1.msra.mxu0 0.0
    %1383 = vmatprep.subr.mxu0 0.0
    %1384 = vmatpush1.msra.mxu0 0.0
    %1385 = vmatprep.subr.mxu0 0.0
    %1386 = vmatpush1.msra.mxu0 0.0
    %1387 = vmatprep.subr.mxu0 0.0
    %1388 = vmatpush1.msra.mxu0 0.0
    %1389 = vmatprep.subr.mxu0 0.0
    %1390 = vmatpush1.msra.mxu0 0.0
    %1391 = vmatprep.subr.mxu0 0.0
    %1392 = vmatpush1.msra.mxu0 0.0
    %1393 = vmatprep.subr.mxu0 0.0
    %1394 = vmatpush1.msra.mxu0 0.0
    %1395 = vmatprep.subr.mxu0 0.0
    %1396 = vmatpush1.msra.mxu0 0.0
    %1397 = vmatprep.subr.mxu0 0.0
    %1398 = vmatpush1.msra.mxu0 0.0
    %1399 = vmatprep.subr.mxu0 0.0
    %1400 = vmatpush1.msra.mxu0 0.0
    %1401 = vmatprep.mubr.f32.mxu0 0.0
    %1402 = vmatmul.mubr.f32.gmra.mrb[0].mxu0 %v545
    %v1403 = vpop.f32.mrb[0].mxu0
    %v1404 = vadd.f32 1e-08, %v1403
    %v1405 = vpop.f32.mrb[0].mxu0
    %1406 = vmatprep.mubr.f32.mxu0 0.0
    %1407 = vmatmul.mubr.f32.gmra.mrb[0].mxu0 %v548
    %v1408 = vpop.f32.mrb[0].mxu0
    %v1409 = vadd.f32 1e-08, %v1408
    %v1410 = vpop.f32.mrb[0].mxu0
    %1411 = vmatprep.mubr.f32.mxu0 0.0
    %1412 = vmatmul.mubr.f32.gmra.mrb[0].mxu0 %v551
    %v1413 = vpop.f32.mrb[0].mxu0
    %v1414 = vadd.f32 1e-08, %v1413
    %v1415 = vpop.f32.mrb[0].mxu0
    %1416 = vmatprep.mubr.f32.mxu0 0.0
    %1417 = vmatmul.mubr.f32.gmra.mrb[0].mxu0 %v554
    %v1418 = vpop.f32.mrb[0].mxu0
    %v1419 = vadd.f32 1e-08, %v1418
    %v1420 = vpop.f32.mrb[0].mxu0
    %1421 = vmatprep.mubr.f32.mxu0 0.0
    %1422 = vmatmul.mubr.f32.gmra.mrb[0].mxu0 %v557
    %v1423 = vpop.f32.mrb[0].mxu0
    %v1424 = vadd.f32 1e-08, %v1423
    %v1425 = vpop.f32.mrb[0].mxu0
    %1426 = vmatprep.mubr.f32.mxu0 0.0
    %1427 = vmatmul.mubr.f32.gmra.mrb[0].mxu0 %v560
    %v1428 = vpop.f32.mrb[0].mxu0
    %v1429 = vadd.f32 1e-08, %v1428
    %v1430 = vpop.f32.mrb[0].mxu0
    %1431 = vdwg.mxu0
    %v1432 = vrcp.pop %v1404
    %v1433 = vmul.f32 %v1236, %v1432
    %v1434 = vrcp.pop %v1409
    %v1435 = vmul.f32 %v1238, %v1434
    %v1436 = vrcp.pop %v1414
    %v1437 = vmul.f32 %v1240, %v1436
    %v1438 = vrcp.pop %v1419
    %v1439 = vmul.f32 %v1242, %v1438
    %v1440 = vrcp.pop %v1424
    %v1441 = vmul.f32 %v1244, %v1440
    %v1442 = vrcp.pop %v1429
    %v1443 = vmul.f32 %v1246, %v1442
    %v1444 = vmul.f32 %v1433, %v1076
    %v1445 = vmul.f32 %v1435, %v1081
    %v1446 = vmul.f32 %v1437, %v1086
    %v1447 = vmul.f32 %v1439, %v1091
    %v1448 = vmul.f32 %v1441, %v1096
    %v1449 = vmul.f32 %v1443, %v1101
    %1450 = vmatprep.subr.mxu0 0.0
    %1451 = vmatpush1.msra.mxu0 %v1444
    %1452 = vmatprep.subr.mxu0 0.0
    %1453 = vmatpush1.msra.mxu0 %v1445
    %1454 = vmatprep.subr.mxu0 0.0
    %1455 = vmatpush1.msra.mxu0 %v1446
    %1456 = vmatprep.subr.mxu0 0.0
    %1457 = vmatpush1.msra.mxu0 %v1447
    %1458 = vmatprep.subr.mxu0 0.0
    %1459 = vmatpush1.msra.mxu0 %v1448
    %1460 = vmatprep.subr.mxu0 0.0
    %1461 = vmatpush1.msra.mxu0 %v1449
    %1462 = vmatprep.subr.mxu0 0.0
    %1463 = vmatpush1.msra.mxu0 0.0
    %1464 = vmatprep.subr.mxu0 0.0
    %1465 = vmatpush1.msra.mxu0 0.0
    %1466 = vmatprep.subr.mxu0 0.0
    %1467 = vmatpush1.msra.mxu0 0.0
    %1468 = vmatprep.subr.mxu0 0.0
    %1469 = vmatpush1.msra.mxu0 0.0
    %1470 = vmatprep.subr.mxu0 0.0
    %1471 = vmatpush1.msra.mxu0 0.0
    %1472 = vmatprep.subr.mxu0 0.0
    %1473 = vmatpush1.msra.mxu0 0.0
    %1474 = vmatprep.subr.mxu0 0.0
    %1475 = vmatpush1.msra.mxu0 0.0
    %1476 = vmatprep.subr.mxu0 0.0
    %1477 = vmatpush1.msra.mxu0 0.0
    %1478 = vmatprep.subr.mxu0 0.0
    %1479 = vmatpush1.msra.mxu0 0.0
    %1480 = vmatprep.subr.mxu0 0.0
    %1481 = vmatpush1.msra.mxu0 0.0
    %1482 = vmatprep.subr.mxu0 0.0
    %1483 = vmatpush1.msra.mxu0 0.0
    %1484 = vmatprep.subr.mxu0 0.0
    %1485 = vmatpush1.msra.mxu0 0.0
    %1486 = vmatprep.subr.mxu0 0.0
    %1487 = vmatpush1.msra.mxu0 0.0
    %1488 = vmatprep.subr.mxu0 0.0
    %1489 = vmatpush1.msra.mxu0 0.0
    %1490 = vmatprep.subr.mxu0 0.0
    %1491 = vmatpush1.msra.mxu0 0.0
    %1492 = vmatprep.subr.mxu0 0.0
    %1493 = vmatpush1.msra.mxu0 0.0
    %1494 = vmatprep.subr.mxu0 0.0
    %1495 = vmatpush1.msra.mxu0 0.0
    %1496 = vmatprep.subr.mxu0 0.0
    %1497 = vmatpush1.msra.mxu0 0.0
    %1498 = vmatprep.subr.mxu0 0.0
    %1499 = vmatpush1.msra.mxu0 0.0
    %1500 = vmatprep.subr.mxu0 0.0
    %1501 = vmatpush1.msra.mxu0 0.0
    %1502 = vmatprep.subr.mxu0 0.0
    %1503 = vmatpush1.msra.mxu0 0.0
    %1504 = vmatprep.subr.mxu0 0.0
    %1505 = vmatpush1.msra.mxu0 0.0
    %1506 = vmatprep.subr.mxu0 0.0
    %1507 = vmatpush1.msra.mxu0 0.0
    %1508 = vmatprep.subr.mxu0 0.0
    %1509 = vmatpush1.msra.mxu0 0.0
    %1510 = vmatprep.subr.mxu0 0.0
    %1511 = vmatpush1.msra.mxu0 0.0
    %1512 = vmatprep.subr.mxu0 0.0
    %1513 = vmatpush1.msra.mxu0 0.0
    %1514 = vmatprep.mubr.f32.mxu0 0.0
    %1515 = vmatmul.mubr.f32.gmra.mrb[0].mxu0 %v1249
    %v1516 = vpop.f32.mrb[0].mxu0
    %v1517 = vadd.f32 0.0, %v1516
    %v1518 = vpop.f32.mrb[0].mxu0
    %1519 = vmatprep.mubr.f32.mxu0 0.0
    %1520 = vmatmul.mubr.f32.gmra.mrb[0].mxu0 %v1252
    %v1521 = vpop.f32.mrb[0].mxu0
    %v1522 = vadd.f32 0.0, %v1521
    %v1523 = vpop.f32.mrb[0].mxu0
    %1524 = vmatprep.mubr.f32.mxu0 0.0
    %1525 = vmatmul.mubr.f32.gmra.mrb[0].mxu0 %v1255
    %v1526 = vpop.f32.mrb[0].mxu0
    %v1527 = vadd.f32 0.0, %v1526
    %v1528 = vpop.f32.mrb[0].mxu0
    %1529 = vdwg.mxu0
    %v1530 = vadd.f32 %v522, %v1517
    %v1531 = vadd.f32 %v523, %v1522
    %v1532 = vadd.f32 %v524, %v1527
    %1533 = vmatprep.subr.mxu0 0.0
    %1534 = vmatpush1.msra.mxu0 %v1517
    %1535 = vmatprep.subr.mxu0 0.0
    %1536 = vmatpush1.msra.mxu0 %v1522
    %1537 = vmatprep.subr.mxu0 0.0
    %1538 = vmatpush1.msra.mxu0 %v1527
    %1539 = vmatprep.subr.mxu0 0.0
    %1540 = vmatpush1.msra.mxu0 0.0
    %1541 = vmatprep.subr.mxu0 0.0
    %1542 = vmatpush1.msra.mxu0 0.0
    %1543 = vmatprep.subr.mxu0 0.0
    %1544 = vmatpush1.msra.mxu0 0.0
    %1545 = vmatprep.subr.mxu0 0.0
    %1546 = vmatpush1.msra.mxu0 0.0
    %1547 = vmatprep.subr.mxu0 0.0
    %1548 = vmatpush1.msra.mxu0 0.0
    %1549 = vmatprep.subr.mxu0 0.0
    %1550 = vmatpush1.msra.mxu0 0.0
    %1551 = vmatprep.subr.mxu0 0.0
    %1552 = vmatpush1.msra.mxu0 0.0
    %1553 = vmatprep.subr.mxu0 0.0
    %1554 = vmatpush1.msra.mxu0 0.0
    %1555 = vmatprep.subr.mxu0 0.0
    %1556 = vmatpush1.msra.mxu0 0.0
    %1557 = vmatprep.subr.mxu0 0.0
    %1558 = vmatpush1.msra.mxu0 0.0
    %1559 = vmatprep.subr.mxu0 0.0
    %1560 = vmatpush1.msra.mxu0 0.0
    %1561 = vmatprep.subr.mxu0 0.0
    %1562 = vmatpush1.msra.mxu0 0.0
    %1563 = vmatprep.subr.mxu0 0.0
    %1564 = vmatpush1.msra.mxu0 0.0
    %1565 = vmatprep.subr.mxu0 0.0
    %1566 = vmatpush1.msra.mxu0 0.0
    %1567 = vmatprep.subr.mxu0 0.0
    %1568 = vmatpush1.msra.mxu0 0.0
    %1569 = vmatprep.subr.mxu0 0.0
    %1570 = vmatpush1.msra.mxu0 0.0
    %1571 = vmatprep.subr.mxu0 0.0
    %1572 = vmatpush1.msra.mxu0 0.0
    %1573 = vmatprep.subr.mxu0 0.0
    %1574 = vmatpush1.msra.mxu0 0.0
    %1575 = vmatprep.subr.mxu0 0.0
    %1576 = vmatpush1.msra.mxu0 0.0
    %1577 = vmatprep.subr.mxu0 0.0
    %1578 = vmatpush1.msra.mxu0 0.0
    %1579 = vmatprep.subr.mxu0 0.0
    %1580 = vmatpush1.msra.mxu0 0.0
    %1581 = vmatprep.subr.mxu0 0.0
    %1582 = vmatpush1.msra.mxu0 0.0
    %1583 = vmatprep.subr.mxu0 0.0
    %1584 = vmatpush1.msra.mxu0 0.0
    %1585 = vmatprep.subr.mxu0 0.0
    %1586 = vmatpush1.msra.mxu0 0.0
    %1587 = vmatprep.subr.mxu0 0.0
    %1588 = vmatpush1.msra.mxu0 0.0
    %1589 = vmatprep.subr.mxu0 0.0
    %1590 = vmatpush1.msra.mxu0 0.0
    %1591 = vmatprep.subr.mxu0 0.0
    %1592 = vmatpush1.msra.mxu0 0.0
    %1593 = vmatprep.subr.mxu0 0.0
    %1594 = vmatpush1.msra.mxu0 0.0
    %1595 = vmatprep.subr.mxu0 0.0
    %1596 = vmatpush1.msra.mxu0 0.0
    %1597 = vmatprep.mubr.f32.mxu0 0.0
    %1598 = vmatmul.mubr.f32.gmra.mrb[0].mxu0 %v545
    %v1599 = vpop.f32.mrb[0].mxu0
    %v1600 = vadd.f32 0.0, %v1599
    %v1601 = vpop.f32.mrb[0].mxu0
    %1602 = vmatprep.mubr.f32.mxu0 0.0
    %1603 = vmatmul.mubr.f32.gmra.mrb[0].mxu0 %v548
    %v1604 = vpop.f32.mrb[0].mxu0
    %v1605 = vadd.f32 0.0, %v1604
    %v1606 = vpop.f32.mrb[0].mxu0
    %1607 = vmatprep.mubr.f32.mxu0 0.0
    %1608 = vmatmul.mubr.f32.gmra.mrb[0].mxu0 %v551
    %v1609 = vpop.f32.mrb[0].mxu0
    %v1610 = vadd.f32 0.0, %v1609
    %v1611 = vpop.f32.mrb[0].mxu0
    %1612 = vmatprep.mubr.f32.mxu0 0.0
    %1613 = vmatmul.mubr.f32.gmra.mrb[0].mxu0 %v554
    %v1614 = vpop.f32.mrb[0].mxu0
    %v1615 = vadd.f32 0.0, %v1614
    %v1616 = vpop.f32.mrb[0].mxu0
    %1617 = vmatprep.mubr.f32.mxu0 0.0
    %1618 = vmatmul.mubr.f32.gmra.mrb[0].mxu0 %v557
    %v1619 = vpop.f32.mrb[0].mxu0
    %v1620 = vadd.f32 0.0, %v1619
    %v1621 = vpop.f32.mrb[0].mxu0
    %1622 = vmatprep.mubr.f32.mxu0 0.0
    %1623 = vmatmul.mubr.f32.gmra.mrb[0].mxu0 %v560
    %v1624 = vpop.f32.mrb[0].mxu0
    %v1625 = vadd.f32 0.0, %v1624
    %v1626 = vpop.f32.mrb[0].mxu0
    %1627 = vdwg.mxu0
    %1628 = vmatprep.subr.mxu0 0.0
    %1629 = vmatpush1.msra.mxu0 %v1517
    %1630 = vmatprep.subr.mxu0 0.0
    %1631 = vmatpush1.msra.mxu0 %v1522
    %1632 = vmatprep.subr.mxu0 0.0
    %1633 = vmatpush1.msra.mxu0 %v1527
    %1634 = vmatprep.subr.mxu0 0.0
    %1635 = vmatpush1.msra.mxu0 0.0
    %1636 = vmatprep.subr.mxu0 0.0
    %1637 = vmatpush1.msra.mxu0 0.0
    %1638 = vmatprep.subr.mxu0 0.0
    %1639 = vmatpush1.msra.mxu0 0.0
    %1640 = vmatprep.subr.mxu0 0.0
    %1641 = vmatpush1.msra.mxu0 0.0
    %1642 = vmatprep.subr.mxu0 0.0
    %1643 = vmatpush1.msra.mxu0 0.0
    %1644 = vmatprep.subr.mxu0 0.0
    %1645 = vmatpush1.msra.mxu0 0.0
    %1646 = vmatprep.subr.mxu0 0.0
    %1647 = vmatpush1.msra.mxu0 0.0
    %1648 = vmatprep.subr.mxu0 0.0
    %1649 = vmatpush1.msra.mxu0 0.0
    %1650 = vmatprep.subr.mxu0 0.0
    %1651 = vmatpush1.msra.mxu0 0.0
    %1652 = vmatprep.subr.mxu0 0.0
    %1653 = vmatpush1.msra.mxu0 0.0
    %1654 = vmatprep.subr.mxu0 0.0
    %1655 = vmatpush1.msra.mxu0 0.0
    %1656 = vmatprep.subr.mxu0 0.0
    %1657 = vmatpush1.msra.mxu0 0.0
    %1658 = vmatprep.subr.mxu0 0.0
    %1659 = vmatpush1.msra.mxu0 0.0
    %1660 = vmatprep.subr.mxu0 0.0
    %1661 = vmatpush1.msra.mxu0 0.0
    %1662 = vmatprep.subr.mxu0 0.0
    %1663 = vmatpush1.msra.mxu0 0.0
    %1664 = vmatprep.subr.mxu0 0.0
    %1665 = vmatpush1.msra.mxu0 0.0
    %1666 = vmatprep.subr.mxu0 0.0
    %1667 = vmatpush1.msra.mxu0 0.0
    %1668 = vmatprep.subr.mxu0 0.0
    %1669 = vmatpush1.msra.mxu0 0.0
    %1670 = vmatprep.subr.mxu0 0.0
    %1671 = vmatpush1.msra.mxu0 0.0
    %1672 = vmatprep.subr.mxu0 0.0
    %1673 = vmatpush1.msra.mxu0 0.0
    %1674 = vmatprep.subr.mxu0 0.0
    %1675 = vmatpush1.msra.mxu0 0.0
    %1676 = vmatprep.subr.mxu0 0.0
    %1677 = vmatpush1.msra.mxu0 0.0
    %1678 = vmatprep.subr.mxu0 0.0
    %1679 = vmatpush1.msra.mxu0 0.0
    %1680 = vmatprep.subr.mxu0 0.0
    %1681 = vmatpush1.msra.mxu0 0.0
    %1682 = vmatprep.subr.mxu0 0.0
    %1683 = vmatpush1.msra.mxu0 0.0
    %1684 = vmatprep.subr.mxu0 0.0
    %1685 = vmatpush1.msra.mxu0 0.0
    %1686 = vmatprep.subr.mxu0 0.0
    %1687 = vmatpush1.msra.mxu0 0.0
    %1688 = vmatprep.subr.mxu0 0.0
    %1689 = vmatpush1.msra.mxu0 0.0
    %1690 = vmatprep.subr.mxu0 0.0
    %1691 = vmatpush1.msra.mxu0 0.0
    %1692 = vmatprep.mubr.f32.mxu0 0.0
    %1693 = vmatmul.mubr.f32.gmra.mrb[0].mxu0 %v658
    %v1694 = vpop.f32.mrb[0].mxu0
    %v1695 = vadd.f32 0.0, %v1694
    %v1696 = vpop.f32.mrb[0].mxu0
    %1697 = vmatprep.mubr.f32.mxu0 0.0
    %1698 = vmatmul.mubr.f32.gmra.mrb[0].mxu0 %v661
    %v1699 = vpop.f32.mrb[0].mxu0
    %v1700 = vadd.f32 0.0, %v1699
    %v1701 = vpop.f32.mrb[0].mxu0
    %1702 = vmatprep.mubr.f32.mxu0 0.0
    %1703 = vmatmul.mubr.f32.gmra.mrb[0].mxu0 %v664
    %v1704 = vpop.f32.mrb[0].mxu0
    %v1705 = vadd.f32 0.0, %v1704
    %v1706 = vpop.f32.mrb[0].mxu0
    %1707 = vmatprep.mubr.f32.mxu0 0.0
    %1708 = vmatmul.mubr.f32.gmra.mrb[0].mxu0 %v667
    %v1709 = vpop.f32.mrb[0].mxu0
    %v1710 = vadd.f32 0.0, %v1709
    %v1711 = vpop.f32.mrb[0].mxu0
    %1712 = vmatprep.mubr.f32.mxu0 0.0
    %1713 = vmatmul.mubr.f32.gmra.mrb[0].mxu0 %v670
    %v1714 = vpop.f32.mrb[0].mxu0
    %v1715 = vadd.f32 0.0, %v1714
    %v1716 = vpop.f32.mrb[0].mxu0
    %1717 = vmatprep.mubr.f32.mxu0 0.0
    %1718 = vmatmul.mubr.f32.gmra.mrb[0].mxu0 %v673
    %v1719 = vpop.f32.mrb[0].mxu0
    %v1720 = vadd.f32 0.0, %v1719
    %v1721 = vpop.f32.mrb[0].mxu0
    %1722 = vdwg.mxu0
    %s1723 = scalar_lea.vmem %s7, 32
    %v1724 = vld [vmem:[%s1723] sm:$0xff]
    %v1725 = vld [vmem:[%s1723 + $0x8] sm:$0xff]
    %v1726 = vld [vmem:[%s1723 + $0x10] sm:$0xff]
    %v1727 = vld [vmem:[%s1723 + $0x18] sm:$0xff]
    %v1729 = vsel %vm774, %v1600, 0
    %v1732 = vsel %vm774, %v1605, 0
    %v1735 = vsel %vm774, %v1610, 0
    %v1738 = vsel %vm774, %v1615, 0
    %v1741 = vsel %vm774, %v1620, 0
    %v1744 = vsel %vm774, %v1625, 0
    %1746 = vmatprep.subr.mxu0 0.0
    %1747 = vmatpush1.msra.mxu0 %v1724
    %1748 = vmatprep.subr.mxu0 0.0
    %1749 = vmatpush1.msra.mxu0 %v1725
    %1750 = vmatprep.subr.mxu0 0.0
    %1751 = vmatpush1.msra.mxu0 %v1726
    %1752 = vmatprep.subr.mxu0 0.0
    %1753 = vmatpush1.msra.mxu0 %v1727
    %1754 = vmatprep.subr.mxu0 0.0
    %1755 = vmatpush1.msra.mxu0 0.0
    %1756 = vmatprep.subr.mxu0 0.0
    %1757 = vmatpush1.msra.mxu0 0.0
    %1758 = vmatprep.subr.mxu0 0.0
    %1759 = vmatpush1.msra.mxu0 0.0
    %1760 = vmatprep.subr.mxu0 0.0
    %1761 = vmatpush1.msra.mxu0 0.0
    %1762 = vmatprep.subr.mxu0 0.0
    %1763 = vmatpush1.msra.mxu0 0.0
    %1764 = vmatprep.subr.mxu0 0.0
    %1765 = vmatpush1.msra.mxu0 0.0
    %1766 = vmatprep.subr.mxu0 0.0
    %1767 = vmatpush1.msra.mxu0 0.0
    %1768 = vmatprep.subr.mxu0 0.0
    %1769 = vmatpush1.msra.mxu0 0.0
    %1770 = vmatprep.subr.mxu0 0.0
    %1771 = vmatpush1.msra.mxu0 0.0
    %1772 = vmatprep.subr.mxu0 0.0
    %1773 = vmatpush1.msra.mxu0 0.0
    %1774 = vmatprep.subr.mxu0 0.0
    %1775 = vmatpush1.msra.mxu0 0.0
    %1776 = vmatprep.subr.mxu0 0.0
    %1777 = vmatpush1.msra.mxu0 0.0
    %1778 = vmatprep.subr.mxu0 0.0
    %1779 = vmatpush1.msra.mxu0 0.0
    %1780 = vmatprep.subr.mxu0 0.0
    %1781 = vmatpush1.msra.mxu0 0.0
    %1782 = vmatprep.subr.mxu0 0.0
    %1783 = vmatpush1.msra.mxu0 0.0
    %1784 = vmatprep.subr.mxu0 0.0
    %1785 = vmatpush1.msra.mxu0 0.0
    %1786 = vmatprep.subr.mxu0 0.0
    %1787 = vmatpush1.msra.mxu0 0.0
    %1788 = vmatprep.subr.mxu0 0.0
    %1789 = vmatpush1.msra.mxu0 0.0
    %1790 = vmatprep.subr.mxu0 0.0
    %1791 = vmatpush1.msra.mxu0 0.0
    %1792 = vmatprep.subr.mxu0 0.0
    %1793 = vmatpush1.msra.mxu0 0.0
    %1794 = vmatprep.subr.mxu0 0.0
    %1795 = vmatpush1.msra.mxu0 0.0
    %1796 = vmatprep.subr.mxu0 0.0
    %1797 = vmatpush1.msra.mxu0 0.0
    %1798 = vmatprep.subr.mxu0 0.0
    %1799 = vmatpush1.msra.mxu0 0.0
    %1800 = vmatprep.subr.mxu0 0.0
    %1801 = vmatpush1.msra.mxu0 0.0
    %1802 = vmatprep.subr.mxu0 0.0
    %1803 = vmatpush1.msra.mxu0 0.0
    %1804 = vmatprep.subr.mxu0 0.0
    %1805 = vmatpush1.msra.mxu0 0.0
    %1806 = vmatprep.subr.mxu0 0.0
    %1807 = vmatpush1.msra.mxu0 0.0
    %1808 = vmatprep.subr.mxu0 0.0
    %1809 = vmatpush1.msra.mxu0 0.0
    %1810 = vmatprep.mubr.f32.mxu0 0.0
    %1811 = vmatmul.mubr.f32.gmra.mrb[0].mxu0 %v1729
    %v1812 = vpop.f32.mrb[0].mxu0
    %v1813 = vadd.f32 0.0, %v1812
    %v1814 = vpop.f32.mrb[0].mxu0
    %1815 = vmatprep.mubr.f32.mxu0 0.0
    %1816 = vmatmul.mubr.f32.gmra.mrb[0].mxu0 %v1732
    %v1817 = vpop.f32.mrb[0].mxu0
    %v1818 = vadd.f32 0.0, %v1817
    %v1819 = vpop.f32.mrb[0].mxu0
    %1820 = vmatprep.mubr.f32.mxu0 0.0
    %1821 = vmatmul.mubr.f32.gmra.mrb[0].mxu0 %v1735
    %v1822 = vpop.f32.mrb[0].mxu0
    %v1823 = vadd.f32 0.0, %v1822
    %v1824 = vpop.f32.mrb[0].mxu0
    %1825 = vmatprep.mubr.f32.mxu0 0.0
    %1826 = vmatmul.mubr.f32.gmra.mrb[0].mxu0 %v1738
    %v1827 = vpop.f32.mrb[0].mxu0
    %v1828 = vadd.f32 0.0, %v1827
    %v1829 = vpop.f32.mrb[0].mxu0
    %1830 = vmatprep.mubr.f32.mxu0 0.0
    %1831 = vmatmul.mubr.f32.gmra.mrb[0].mxu0 %v1741
    %v1832 = vpop.f32.mrb[0].mxu0
    %v1833 = vadd.f32 0.0, %v1832
    %v1834 = vpop.f32.mrb[0].mxu0
    %1835 = vmatprep.mubr.f32.mxu0 0.0
    %1836 = vmatmul.mubr.f32.gmra.mrb[0].mxu0 %v1744
    %v1837 = vpop.f32.mrb[0].mxu0
    %v1838 = vadd.f32 0.0, %v1837
    %v1839 = vpop.f32.mrb[0].mxu0
    %1840 = vdwg.mxu0
    %s1841 = scalar_lea.vmem %s8, 32
    %v1842 = vld [vmem:[%s1841] sm:$0xff]
    %v1843 = vld [vmem:[%s1841 + $0x8] sm:$0xff]
    %v1844 = vld [vmem:[%s1841 + $0x10] sm:$0xff]
    %v1845 = vld [vmem:[%s1841 + $0x18] sm:$0xff]
    %v1847 = vsel %vm774, %v1695, 0
    %v1850 = vsel %vm774, %v1700, 0
    %v1853 = vsel %vm774, %v1705, 0
    %v1856 = vsel %vm774, %v1710, 0
    %v1859 = vsel %vm774, %v1715, 0
    %v1862 = vsel %vm774, %v1720, 0
    %1864 = vmatprep.subr.mxu0 0.0
    %1865 = vmatpush1.msra.mxu0 %v1842
    %1866 = vmatprep.subr.mxu0 0.0
    %1867 = vmatpush1.msra.mxu0 %v1843
    %1868 = vmatprep.subr.mxu0 0.0
    %1869 = vmatpush1.msra.mxu0 %v1844
    %1870 = vmatprep.subr.mxu0 0.0
    %1871 = vmatpush1.msra.mxu0 %v1845
    %1872 = vmatprep.subr.mxu0 0.0
    %1873 = vmatpush1.msra.mxu0 0.0
    %1874 = vmatprep.subr.mxu0 0.0
    %1875 = vmatpush1.msra.mxu0 0.0
    %1876 = vmatprep.subr.mxu0 0.0
    %1877 = vmatpush1.msra.mxu0 0.0
    %1878 = vmatprep.subr.mxu0 0.0
    %1879 = vmatpush1.msra.mxu0 0.0
    %1880 = vmatprep.subr.mxu0 0.0
    %1881 = vmatpush1.msra.mxu0 0.0
    %1882 = vmatprep.subr.mxu0 0.0
    %1883 = vmatpush1.msra.mxu0 0.0
    %1884 = vmatprep.subr.mxu0 0.0
    %1885 = vmatpush1.msra.mxu0 0.0
    %1886 = vmatprep.subr.mxu0 0.0
    %1887 = vmatpush1.msra.mxu0 0.0
    %1888 = vmatprep.subr.mxu0 0.0
    %1889 = vmatpush1.msra.mxu0 0.0
    %1890 = vmatprep.subr.mxu0 0.0
    %1891 = vmatpush1.msra.mxu0 0.0
    %1892 = vmatprep.subr.mxu0 0.0
    %1893 = vmatpush1.msra.mxu0 0.0
    %1894 = vmatprep.subr.mxu0 0.0
    %1895 = vmatpush1.msra.mxu0 0.0
    %1896 = vmatprep.subr.mxu0 0.0
    %1897 = vmatpush1.msra.mxu0 0.0
    %1898 = vmatprep.subr.mxu0 0.0
    %1899 = vmatpush1.msra.mxu0 0.0
    %1900 = vmatprep.subr.mxu0 0.0
    %1901 = vmatpush1.msra.mxu0 0.0
    %1902 = vmatprep.subr.mxu0 0.0
    %1903 = vmatpush1.msra.mxu0 0.0
    %1904 = vmatprep.subr.mxu0 0.0
    %1905 = vmatpush1.msra.mxu0 0.0
    %1906 = vmatprep.subr.mxu0 0.0
    %1907 = vmatpush1.msra.mxu0 0.0
    %1908 = vmatprep.subr.mxu0 0.0
    %1909 = vmatpush1.msra.mxu0 0.0
    %1910 = vmatprep.subr.mxu0 0.0
    %1911 = vmatpush1.msra.mxu0 0.0
    %1912 = vmatprep.subr.mxu0 0.0
    %1913 = vmatpush1.msra.mxu0 0.0
    %1914 = vmatprep.subr.mxu0 0.0
    %1915 = vmatpush1.msra.mxu0 0.0
    %1916 = vmatprep.subr.mxu0 0.0
    %1917 = vmatpush1.msra.mxu0 0.0
    %1918 = vmatprep.subr.mxu0 0.0
    %1919 = vmatpush1.msra.mxu0 0.0
    %1920 = vmatprep.subr.mxu0 0.0
    %1921 = vmatpush1.msra.mxu0 0.0
    %1922 = vmatprep.subr.mxu0 0.0
    %1923 = vmatpush1.msra.mxu0 0.0
    %1924 = vmatprep.subr.mxu0 0.0
    %1925 = vmatpush1.msra.mxu0 0.0
    %1926 = vmatprep.subr.mxu0 0.0
    %1927 = vmatpush1.msra.mxu0 0.0
    %1928 = vmatprep.mubr.f32.mxu0 0.0
    %1929 = vmatmul.mubr.f32.gmra.mrb[0].mxu0 %v1847
    %v1930 = vpop.f32.mrb[0].mxu0
    %v1931 = vadd.f32 0.0, %v1930
    %v1932 = vpop.f32.mrb[0].mxu0
    %1933 = vmatprep.mubr.f32.mxu0 0.0
    %1934 = vmatmul.mubr.f32.gmra.mrb[0].mxu0 %v1850
    %v1935 = vpop.f32.mrb[0].mxu0
    %v1936 = vadd.f32 0.0, %v1935
    %v1937 = vpop.f32.mrb[0].mxu0
    %1938 = vmatprep.mubr.f32.mxu0 0.0
    %1939 = vmatmul.mubr.f32.gmra.mrb[0].mxu0 %v1853
    %v1940 = vpop.f32.mrb[0].mxu0
    %v1941 = vadd.f32 0.0, %v1940
    %v1942 = vpop.f32.mrb[0].mxu0
    %1943 = vmatprep.mubr.f32.mxu0 0.0
    %1944 = vmatmul.mubr.f32.gmra.mrb[0].mxu0 %v1856
    %v1945 = vpop.f32.mrb[0].mxu0
    %v1946 = vadd.f32 0.0, %v1945
    %v1947 = vpop.f32.mrb[0].mxu0
    %1948 = vmatprep.mubr.f32.mxu0 0.0
    %1949 = vmatmul.mubr.f32.gmra.mrb[0].mxu0 %v1859
    %v1950 = vpop.f32.mrb[0].mxu0
    %v1951 = vadd.f32 0.0, %v1950
    %v1952 = vpop.f32.mrb[0].mxu0
    %1953 = vmatprep.mubr.f32.mxu0 0.0
    %1954 = vmatmul.mubr.f32.gmra.mrb[0].mxu0 %v1862
    %v1955 = vpop.f32.mrb[0].mxu0
    %v1956 = vadd.f32 0.0, %v1955
    %v1957 = vpop.f32.mrb[0].mxu0
    %1958 = vdwg.mxu0
    %s1959 = scalar_lea.vmem %s9, 32
    %v1960 = vld [vmem:[%s1959] sm:$0xff]
    %v1961 = vld [vmem:[%s1959 + $0x8] sm:$0xff]
    %v1962 = vld [vmem:[%s1959 + $0x10] sm:$0xff]
    %v1963 = vld [vmem:[%s1959 + $0x18] sm:$0xff]
    %1964 = vmatprep.subr.mxu0 0.0
    %1965 = vmatpush1.msra.mxu0 %v1960
    %1966 = vmatprep.subr.mxu0 0.0
    %1967 = vmatpush1.msra.mxu0 %v1961
    %1968 = vmatprep.subr.mxu0 0.0
    %1969 = vmatpush1.msra.mxu0 %v1962
    %1970 = vmatprep.subr.mxu0 0.0
    %1971 = vmatpush1.msra.mxu0 %v1963
    %1972 = vmatprep.subr.mxu0 0.0
    %1973 = vmatpush1.msra.mxu0 0.0
    %1974 = vmatprep.subr.mxu0 0.0
    %1975 = vmatpush1.msra.mxu0 0.0
    %1976 = vmatprep.subr.mxu0 0.0
    %1977 = vmatpush1.msra.mxu0 0.0
    %1978 = vmatprep.subr.mxu0 0.0
    %1979 = vmatpush1.msra.mxu0 0.0
    %1980 = vmatprep.subr.mxu0 0.0
    %1981 = vmatpush1.msra.mxu0 0.0
    %1982 = vmatprep.subr.mxu0 0.0
    %1983 = vmatpush1.msra.mxu0 0.0
    %1984 = vmatprep.subr.mxu0 0.0
    %1985 = vmatpush1.msra.mxu0 0.0
    %1986 = vmatprep.subr.mxu0 0.0
    %1987 = vmatpush1.msra.mxu0 0.0
    %1988 = vmatprep.subr.mxu0 0.0
    %1989 = vmatpush1.msra.mxu0 0.0
    %1990 = vmatprep.subr.mxu0 0.0
    %1991 = vmatpush1.msra.mxu0 0.0
    %1992 = vmatprep.subr.mxu0 0.0
    %1993 = vmatpush1.msra.mxu0 0.0
    %1994 = vmatprep.subr.mxu0 0.0
    %1995 = vmatpush1.msra.mxu0 0.0
    %1996 = vmatprep.subr.mxu0 0.0
    %1997 = vmatpush1.msra.mxu0 0.0
    %1998 = vmatprep.subr.mxu0 0.0
    %1999 = vmatpush1.msra.mxu0 0.0
    %2000 = vmatprep.subr.mxu0 0.0
    %2001 = vmatpush1.msra.mxu0 0.0
    %2002 = vmatprep.subr.mxu0 0.0
    %2003 = vmatpush1.msra.mxu0 0.0
    %2004 = vmatprep.subr.mxu0 0.0
    %2005 = vmatpush1.msra.mxu0 0.0
    %2006 = vmatprep.subr.mxu0 0.0
    %2007 = vmatpush1.msra.mxu0 0.0
    %2008 = vmatprep.subr.mxu0 0.0
    %2009 = vmatpush1.msra.mxu0 0.0
    %2010 = vmatprep.subr.mxu0 0.0
    %2011 = vmatpush1.msra.mxu0 0.0
    %2012 = vmatprep.subr.mxu0 0.0
    %2013 = vmatpush1.msra.mxu0 0.0
    %2014 = vmatprep.subr.mxu0 0.0
    %2015 = vmatpush1.msra.mxu0 0.0
    %2016 = vmatprep.subr.mxu0 0.0
    %2017 = vmatpush1.msra.mxu0 0.0
    %2018 = vmatprep.subr.mxu0 0.0
    %2019 = vmatpush1.msra.mxu0 0.0
    %2020 = vmatprep.subr.mxu0 0.0
    %2021 = vmatpush1.msra.mxu0 0.0
    %2022 = vmatprep.subr.mxu0 0.0
    %2023 = vmatpush1.msra.mxu0 0.0
    %2024 = vmatprep.subr.mxu0 0.0
    %2025 = vmatpush1.msra.mxu0 0.0
    %2026 = vmatprep.subr.mxu0 0.0
    %2027 = vmatpush1.msra.mxu0 0.0
    %2028 = vmatprep.mubr.f32.mxu0 0.0
    %2029 = vmatmul.mubr.f32.gmra.mrb[0].mxu0 %v1847
    %v2030 = vpop.f32.mrb[0].mxu0
    %v2031 = vadd.f32 0.0, %v2030
    %v2032 = vpop.f32.mrb[0].mxu0
    %2033 = vmatprep.mubr.f32.mxu0 0.0
    %2034 = vmatmul.mubr.f32.gmra.mrb[0].mxu0 %v1850
    %v2035 = vpop.f32.mrb[0].mxu0
    %v2036 = vadd.f32 0.0, %v2035
    %v2037 = vpop.f32.mrb[0].mxu0
    %2038 = vmatprep.mubr.f32.mxu0 0.0
    %2039 = vmatmul.mubr.f32.gmra.mrb[0].mxu0 %v1853
    %v2040 = vpop.f32.mrb[0].mxu0
    %v2041 = vadd.f32 0.0, %v2040
    %v2042 = vpop.f32.mrb[0].mxu0
    %2043 = vmatprep.mubr.f32.mxu0 0.0
    %2044 = vmatmul.mubr.f32.gmra.mrb[0].mxu0 %v1856
    %v2045 = vpop.f32.mrb[0].mxu0
    %v2046 = vadd.f32 0.0, %v2045
    %v2047 = vpop.f32.mrb[0].mxu0
    %2048 = vmatprep.mubr.f32.mxu0 0.0
    %2049 = vmatmul.mubr.f32.gmra.mrb[0].mxu0 %v1859
    %v2050 = vpop.f32.mrb[0].mxu0
    %v2051 = vadd.f32 0.0, %v2050
    %v2052 = vpop.f32.mrb[0].mxu0
    %2053 = vmatprep.mubr.f32.mxu0 0.0
    %2054 = vmatmul.mubr.f32.gmra.mrb[0].mxu0 %v1862
    %v2055 = vpop.f32.mrb[0].mxu0
    %v2056 = vadd.f32 0.0, %v2055
    %v2057 = vpop.f32.mrb[0].mxu0
    %2058 = vdwg.mxu0
    %v2059 = vmul.f32 %v1813, %v1931
    %v2060 = vmul.f32 %v1818, %v1936
    %v2061 = vmul.f32 %v1823, %v1941
    %v2062 = vmul.f32 %v1828, %v1946
    %v2063 = vmul.f32 %v1833, %v1951
    %v2064 = vmul.f32 %v1838, %v1956
    %v2066 = vsel %vm774, %v2059, 0
    %v2069 = vsel %vm774, %v2060, 0
    %v2072 = vsel %vm774, %v2061, 0
    %v2075 = vsel %vm774, %v2062, 0
    %v2078 = vsel %vm774, %v2063, 0
    %v2081 = vsel %vm774, %v2064, 0
    %2083 = vmatprep.subr.mxu0 0.0
    %2084 = vmatpush1.msra.mxu0 %v540
    %2085 = vmatprep.subr.mxu0 0.0
    %2086 = vmatpush1.msra.mxu0 %v541
    %2087 = vmatprep.subr.mxu0 0.0
    %2088 = vmatpush1.msra.mxu0 %v542
    %2089 = vmatprep.subr.mxu0 0.0
    %2090 = vmatpush1.msra.mxu0 %v543
    %2091 = vmatprep.subr.mxu0 0.0
    %2092 = vmatpush1.msra.mxu0 0.0
    %2093 = vmatprep.subr.mxu0 0.0
    %2094 = vmatpush1.msra.mxu0 0.0
    %2095 = vmatprep.subr.mxu0 0.0
    %2096 = vmatpush1.msra.mxu0 0.0
    %2097 = vmatprep.subr.mxu0 0.0
    %2098 = vmatpush1.msra.mxu0 0.0
    %2099 = vmatprep.subr.mxu0 0.0
    %2100 = vmatpush1.msra.mxu0 0.0
    %2101 = vmatprep.subr.mxu0 0.0
    %2102 = vmatpush1.msra.mxu0 0.0
    %2103 = vmatprep.subr.mxu0 0.0
    %2104 = vmatpush1.msra.mxu0 0.0
    %2105 = vmatprep.subr.mxu0 0.0
    %2106 = vmatpush1.msra.mxu0 0.0
    %2107 = vmatprep.subr.mxu0 0.0
    %2108 = vmatpush1.msra.mxu0 0.0
    %2109 = vmatprep.subr.mxu0 0.0
    %2110 = vmatpush1.msra.mxu0 0.0
    %2111 = vmatprep.subr.mxu0 0.0
    %2112 = vmatpush1.msra.mxu0 0.0
    %2113 = vmatprep.subr.mxu0 0.0
    %2114 = vmatpush1.msra.mxu0 0.0
    %2115 = vmatprep.subr.mxu0 0.0
    %2116 = vmatpush1.msra.mxu0 0.0
    %2117 = vmatprep.subr.mxu0 0.0
    %2118 = vmatpush1.msra.mxu0 0.0
    %2119 = vmatprep.subr.mxu0 0.0
    %2120 = vmatpush1.msra.mxu0 0.0
    %2121 = vmatprep.subr.mxu0 0.0
    %2122 = vmatpush1.msra.mxu0 0.0
    %2123 = vmatprep.subr.mxu0 0.0
    %2124 = vmatpush1.msra.mxu0 0.0
    %2125 = vmatprep.subr.mxu0 0.0
    %2126 = vmatpush1.msra.mxu0 0.0
    %2127 = vmatprep.subr.mxu0 0.0
    %2128 = vmatpush1.msra.mxu0 0.0
    %2129 = vmatprep.subr.mxu0 0.0
    %2130 = vmatpush1.msra.mxu0 0.0
    %2131 = vmatprep.subr.mxu0 0.0
    %2132 = vmatpush1.msra.mxu0 0.0
    %2133 = vmatprep.subr.mxu0 0.0
    %2134 = vmatpush1.msra.mxu0 0.0
    %2135 = vmatprep.subr.mxu0 0.0
    %2136 = vmatpush1.msra.mxu0 0.0
    %2137 = vmatprep.subr.mxu0 0.0
    %2138 = vmatpush1.msra.mxu0 0.0
    %2139 = vmatprep.subr.mxu0 0.0
    %2140 = vmatpush1.msra.mxu0 0.0
    %2141 = vmatprep.subr.mxu0 0.0
    %2142 = vmatpush1.msra.mxu0 0.0
    %2143 = vmatprep.subr.mxu0 0.0
    %2144 = vmatpush1.msra.mxu0 0.0
    %2145 = vmatprep.subr.mxu0 0.0
    %2146 = vmatpush1.msra.mxu0 0.0
    %2147 = vmatprep.mubr.f32.mxu0 0.0
    %2148 = vmatmul.mubr.f32.gmra.mrb[0].mxu0 %v2066
    %v2149 = vpop.f32.mrb[0].mxu0
    %v2150 = vadd.f32 0.0, %v2149
    %v2151 = vpop.f32.mrb[0].mxu0
    %2152 = vmatprep.mubr.f32.mxu0 0.0
    %2153 = vmatmul.mubr.f32.gmra.mrb[0].mxu0 %v2069
    %v2154 = vpop.f32.mrb[0].mxu0
    %v2155 = vadd.f32 0.0, %v2154
    %v2156 = vpop.f32.mrb[0].mxu0
    %2157 = vmatprep.mubr.f32.mxu0 0.0
    %2158 = vmatmul.mubr.f32.gmra.mrb[0].mxu0 %v2072
    %v2159 = vpop.f32.mrb[0].mxu0
    %v2160 = vadd.f32 0.0, %v2159
    %v2161 = vpop.f32.mrb[0].mxu0
    %2162 = vmatprep.mubr.f32.mxu0 0.0
    %2163 = vmatmul.mubr.f32.gmra.mrb[0].mxu0 %v2075
    %v2164 = vpop.f32.mrb[0].mxu0
    %v2165 = vadd.f32 0.0, %v2164
    %v2166 = vpop.f32.mrb[0].mxu0
    %2167 = vmatprep.mubr.f32.mxu0 0.0
    %2168 = vmatmul.mubr.f32.gmra.mrb[0].mxu0 %v2078
    %v2169 = vpop.f32.mrb[0].mxu0
    %v2170 = vadd.f32 0.0, %v2169
    %v2171 = vpop.f32.mrb[0].mxu0
    %2172 = vmatprep.mubr.f32.mxu0 0.0
    %2173 = vmatmul.mubr.f32.gmra.mrb[0].mxu0 %v2081
    %v2174 = vpop.f32.mrb[0].mxu0
    %v2175 = vadd.f32 0.0, %v2174
    %v2176 = vpop.f32.mrb[0].mxu0
    %2177 = vdwg.mxu0
    %v2178 = vmax.f32 %v2150, -10.0
    %v2179 = vmax.f32 %v2155, -10.0
    %v2180 = vmax.f32 %v2160, -10.0
    %v2181 = vmax.f32 %v2165, -10.0
    %v2182 = vmax.f32 %v2170, -10.0
    %v2183 = vmax.f32 %v2175, -10.0
    %v2184 = vmin.f32 %v2178, 10.0
    %v2185 = vmin.f32 %v2179, 10.0
    %v2186 = vmin.f32 %v2180, 10.0
    %v2187 = vmin.f32 %v2181, 10.0
    %v2188 = vmin.f32 %v2182, 10.0
    %v2189 = vmin.f32 %v2183, 10.0
    %v2190 = vmul.f32 %v2184, 1.442695
    %v2191 = vpow.pop %v2190
    %v2192 = vmul.f32 %v2185, 1.442695
    %v2193 = vpow.pop %v2192
    %v2194 = vmul.f32 %v2186, 1.442695
    %v2195 = vpow.pop %v2194
    %v2196 = vmul.f32 %v2187, 1.442695
    %v2197 = vpow.pop %v2196
    %v2198 = vmul.f32 %v2188, 1.442695
    %v2199 = vpow.pop %v2198
    %v2200 = vmul.f32 %v2189, 1.442695
    %v2201 = vpow.pop %v2200
    %2202 = vmatprep.subr.mxu0 0.0
    %2203 = vmatpush1.msra.mxu0 %v2191
    %2204 = vmatprep.subr.mxu0 0.0
    %2205 = vmatpush1.msra.mxu0 %v2193
    %2206 = vmatprep.subr.mxu0 0.0
    %2207 = vmatpush1.msra.mxu0 %v2195
    %2208 = vmatprep.subr.mxu0 0.0
    %2209 = vmatpush1.msra.mxu0 %v2197
    %2210 = vmatprep.subr.mxu0 0.0
    %2211 = vmatpush1.msra.mxu0 %v2199
    %2212 = vmatprep.subr.mxu0 0.0
    %2213 = vmatpush1.msra.mxu0 %v2201
    %2214 = vmatprep.subr.mxu0 0.0
    %2215 = vmatpush1.msra.mxu0 0.0
    %2216 = vmatprep.subr.mxu0 0.0
    %2217 = vmatpush1.msra.mxu0 0.0
    %2218 = vmatprep.subr.mxu0 0.0
    %2219 = vmatpush1.msra.mxu0 0.0
    %2220 = vmatprep.subr.mxu0 0.0
    %2221 = vmatpush1.msra.mxu0 0.0
    %2222 = vmatprep.subr.mxu0 0.0
    %2223 = vmatpush1.msra.mxu0 0.0
    %2224 = vmatprep.subr.mxu0 0.0
    %2225 = vmatpush1.msra.mxu0 0.0
    %2226 = vmatprep.subr.mxu0 0.0
    %2227 = vmatpush1.msra.mxu0 0.0
    %2228 = vmatprep.subr.mxu0 0.0
    %2229 = vmatpush1.msra.mxu0 0.0
    %2230 = vmatprep.subr.mxu0 0.0
    %2231 = vmatpush1.msra.mxu0 0.0
    %2232 = vmatprep.subr.mxu0 0.0
    %2233 = vmatpush1.msra.mxu0 0.0
    %2234 = vmatprep.subr.mxu0 0.0
    %2235 = vmatpush1.msra.mxu0 0.0
    %2236 = vmatprep.subr.mxu0 0.0
    %2237 = vmatpush1.msra.mxu0 0.0
    %2238 = vmatprep.subr.mxu0 0.0
    %2239 = vmatpush1.msra.mxu0 0.0
    %2240 = vmatprep.subr.mxu0 0.0
    %2241 = vmatpush1.msra.mxu0 0.0
    %2242 = vmatprep.subr.mxu0 0.0
    %2243 = vmatpush1.msra.mxu0 0.0
    %2244 = vmatprep.subr.mxu0 0.0
    %2245 = vmatpush1.msra.mxu0 0.0
    %2246 = vmatprep.subr.mxu0 0.0
    %2247 = vmatpush1.msra.mxu0 0.0
    %2248 = vmatprep.subr.mxu0 0.0
    %2249 = vmatpush1.msra.mxu0 0.0
    %2250 = vmatprep.subr.mxu0 0.0
    %2251 = vmatpush1.msra.mxu0 0.0
    %2252 = vmatprep.subr.mxu0 0.0
    %2253 = vmatpush1.msra.mxu0 0.0
    %2254 = vmatprep.subr.mxu0 0.0
    %2255 = vmatpush1.msra.mxu0 0.0
    %2256 = vmatprep.subr.mxu0 0.0
    %2257 = vmatpush1.msra.mxu0 0.0
    %2258 = vmatprep.subr.mxu0 0.0
    %2259 = vmatpush1.msra.mxu0 0.0
    %2260 = vmatprep.subr.mxu0 0.0
    %2261 = vmatpush1.msra.mxu0 0.0
    %2262 = vmatprep.subr.mxu0 0.0
    %2263 = vmatpush1.msra.mxu0 0.0
    %2264 = vmatprep.subr.mxu0 0.0
    %2265 = vmatpush1.msra.mxu0 0.0
    %2266 = vmatprep.mubr.f32.mxu0 0.0
    %2267 = vmatmul.mubr.f32.gmra.mrb[0].mxu0 %v1249
    %v2268 = vpop.f32.mrb[0].mxu0
    %v2269 = vadd.f32 0.0, %v2268
    %v2270 = vpop.f32.mrb[0].mxu0
    %2271 = vmatprep.mubr.f32.mxu0 0.0
    %2272 = vmatmul.mubr.f32.gmra.mrb[0].mxu0 %v1252
    %v2273 = vpop.f32.mrb[0].mxu0
    %v2274 = vadd.f32 0.0, %v2273
    %v2275 = vpop.f32.mrb[0].mxu0
    %2276 = vmatprep.mubr.f32.mxu0 0.0
    %2277 = vmatmul.mubr.f32.gmra.mrb[0].mxu0 %v1255
    %v2278 = vpop.f32.mrb[0].mxu0
    %v2279 = vadd.f32 0.0, %v2278
    %v2280 = vpop.f32.mrb[0].mxu0
    %2281 = vdwg.mxu0
    %2282 = vmatprep.subr.mxu0 0.0
    %2283 = vmatpush1.msra.mxu0 %v2269
    %2284 = vmatprep.subr.mxu0 0.0
    %2285 = vmatpush1.msra.mxu0 %v2274
    %2286 = vmatprep.subr.mxu0 0.0
    %2287 = vmatpush1.msra.mxu0 %v2279
    %2288 = vmatprep.subr.mxu0 0.0
    %2289 = vmatpush1.msra.mxu0 0.0
    %2290 = vmatprep.subr.mxu0 0.0
    %2291 = vmatpush1.msra.mxu0 0.0
    %2292 = vmatprep.subr.mxu0 0.0
    %2293 = vmatpush1.msra.mxu0 0.0
    %2294 = vmatprep.subr.mxu0 0.0
    %2295 = vmatpush1.msra.mxu0 0.0
    %2296 = vmatprep.subr.mxu0 0.0
    %2297 = vmatpush1.msra.mxu0 0.0
    %2298 = vmatprep.subr.mxu0 0.0
    %2299 = vmatpush1.msra.mxu0 0.0
    %2300 = vmatprep.subr.mxu0 0.0
    %2301 = vmatpush1.msra.mxu0 0.0
    %2302 = vmatprep.subr.mxu0 0.0
    %2303 = vmatpush1.msra.mxu0 0.0
    %2304 = vmatprep.subr.mxu0 0.0
    %2305 = vmatpush1.msra.mxu0 0.0
    %2306 = vmatprep.subr.mxu0 0.0
    %2307 = vmatpush1.msra.mxu0 0.0
    %2308 = vmatprep.subr.mxu0 0.0
    %2309 = vmatpush1.msra.mxu0 0.0
    %2310 = vmatprep.subr.mxu0 0.0
    %2311 = vmatpush1.msra.mxu0 0.0
    %2312 = vmatprep.subr.mxu0 0.0
    %2313 = vmatpush1.msra.mxu0 0.0
    %2314 = vmatprep.subr.mxu0 0.0
    %2315 = vmatpush1.msra.mxu0 0.0
    %2316 = vmatprep.subr.mxu0 0.0
    %2317 = vmatpush1.msra.mxu0 0.0
    %2318 = vmatprep.subr.mxu0 0.0
    %2319 = vmatpush1.msra.mxu0 0.0
    %2320 = vmatprep.subr.mxu0 0.0
    %2321 = vmatpush1.msra.mxu0 0.0
    %2322 = vmatprep.subr.mxu0 0.0
    %2323 = vmatpush1.msra.mxu0 0.0
    %2324 = vmatprep.subr.mxu0 0.0
    %2325 = vmatpush1.msra.mxu0 0.0
    %2326 = vmatprep.subr.mxu0 0.0
    %2327 = vmatpush1.msra.mxu0 0.0
    %2328 = vmatprep.subr.mxu0 0.0
    %2329 = vmatpush1.msra.mxu0 0.0
    %2330 = vmatprep.subr.mxu0 0.0
    %2331 = vmatpush1.msra.mxu0 0.0
    %2332 = vmatprep.subr.mxu0 0.0
    %2333 = vmatpush1.msra.mxu0 0.0
    %2334 = vmatprep.subr.mxu0 0.0
    %2335 = vmatpush1.msra.mxu0 0.0
    %2336 = vmatprep.subr.mxu0 0.0
    %2337 = vmatpush1.msra.mxu0 0.0
    %2338 = vmatprep.subr.mxu0 0.0
    %2339 = vmatpush1.msra.mxu0 0.0
    %2340 = vmatprep.subr.mxu0 0.0
    %2341 = vmatpush1.msra.mxu0 0.0
    %2342 = vmatprep.subr.mxu0 0.0
    %2343 = vmatpush1.msra.mxu0 0.0
    %2344 = vmatprep.subr.mxu0 0.0
    %2345 = vmatpush1.msra.mxu0 0.0
    %2346 = vmatprep.mubr.f32.mxu0 0.0
    %2347 = vmatmul.mubr.f32.gmra.mrb[0].mxu0 %v545
    %v2348 = vpop.f32.mrb[0].mxu0
    %v2349 = vadd.f32 1e-08, %v2348
    %v2350 = vpop.f32.mrb[0].mxu0
    %2351 = vmatprep.mubr.f32.mxu0 0.0
    %2352 = vmatmul.mubr.f32.gmra.mrb[0].mxu0 %v548
    %v2353 = vpop.f32.mrb[0].mxu0
    %v2354 = vadd.f32 1e-08, %v2353
    %v2355 = vpop.f32.mrb[0].mxu0
    %2356 = vmatprep.mubr.f32.mxu0 0.0
    %2357 = vmatmul.mubr.f32.gmra.mrb[0].mxu0 %v551
    %v2358 = vpop.f32.mrb[0].mxu0
    %v2359 = vadd.f32 1e-08, %v2358
    %v2360 = vpop.f32.mrb[0].mxu0
    %2361 = vmatprep.mubr.f32.mxu0 0.0
    %2362 = vmatmul.mubr.f32.gmra.mrb[0].mxu0 %v554
    %v2363 = vpop.f32.mrb[0].mxu0
    %v2364 = vadd.f32 1e-08, %v2363
    %v2365 = vpop.f32.mrb[0].mxu0
    %2366 = vmatprep.mubr.f32.mxu0 0.0
    %2367 = vmatmul.mubr.f32.gmra.mrb[0].mxu0 %v557
    %v2368 = vpop.f32.mrb[0].mxu0
    %v2369 = vadd.f32 1e-08, %v2368
    %v2370 = vpop.f32.mrb[0].mxu0
    %2371 = vmatprep.mubr.f32.mxu0 0.0
    %2372 = vmatmul.mubr.f32.gmra.mrb[0].mxu0 %v560
    %v2373 = vpop.f32.mrb[0].mxu0
    %v2374 = vadd.f32 1e-08, %v2373
    %v2375 = vpop.f32.mrb[0].mxu0
    %2376 = vdwg.mxu0
    %v2377 = vrcp.pop %v2349
    %v2378 = vmul.f32 %v2191, %v2377
    %v2379 = vrcp.pop %v2354
    %v2380 = vmul.f32 %v2193, %v2379
    %v2381 = vrcp.pop %v2359
    %v2382 = vmul.f32 %v2195, %v2381
    %v2383 = vrcp.pop %v2364
    %v2384 = vmul.f32 %v2197, %v2383
    %v2385 = vrcp.pop %v2369
    %v2386 = vmul.f32 %v2199, %v2385
    %v2387 = vrcp.pop %v2374
    %v2388 = vmul.f32 %v2201, %v2387
    %v2389 = vmul.f32 %v2378, %v2031
    %v2390 = vmul.f32 %v2380, %v2036
    %v2391 = vmul.f32 %v2382, %v2041
    %v2392 = vmul.f32 %v2384, %v2046
    %v2393 = vmul.f32 %v2386, %v2051
    %v2394 = vmul.f32 %v2388, %v2056
    %2395 = vmatprep.subr.mxu0 0.0
    %2396 = vmatpush1.msra.mxu0 %v2389
    %2397 = vmatprep.subr.mxu0 0.0
    %2398 = vmatpush1.msra.mxu0 %v2390
    %2399 = vmatprep.subr.mxu0 0.0
    %2400 = vmatpush1.msra.mxu0 %v2391
    %2401 = vmatprep.subr.mxu0 0.0
    %2402 = vmatpush1.msra.mxu0 %v2392
    %2403 = vmatprep.subr.mxu0 0.0
    %2404 = vmatpush1.msra.mxu0 %v2393
    %2405 = vmatprep.subr.mxu0 0.0
    %2406 = vmatpush1.msra.mxu0 %v2394
    %2407 = vmatprep.subr.mxu0 0.0
    %2408 = vmatpush1.msra.mxu0 0.0
    %2409 = vmatprep.subr.mxu0 0.0
    %2410 = vmatpush1.msra.mxu0 0.0
    %2411 = vmatprep.subr.mxu0 0.0
    %2412 = vmatpush1.msra.mxu0 0.0
    %2413 = vmatprep.subr.mxu0 0.0
    %2414 = vmatpush1.msra.mxu0 0.0
    %2415 = vmatprep.subr.mxu0 0.0
    %2416 = vmatpush1.msra.mxu0 0.0
    %2417 = vmatprep.subr.mxu0 0.0
    %2418 = vmatpush1.msra.mxu0 0.0
    %2419 = vmatprep.subr.mxu0 0.0
    %2420 = vmatpush1.msra.mxu0 0.0
    %2421 = vmatprep.subr.mxu0 0.0
    %2422 = vmatpush1.msra.mxu0 0.0
    %2423 = vmatprep.subr.mxu0 0.0
    %2424 = vmatpush1.msra.mxu0 0.0
    %2425 = vmatprep.subr.mxu0 0.0
    %2426 = vmatpush1.msra.mxu0 0.0
    %2427 = vmatprep.subr.mxu0 0.0
    %2428 = vmatpush1.msra.mxu0 0.0
    %2429 = vmatprep.subr.mxu0 0.0
    %2430 = vmatpush1.msra.mxu0 0.0
    %2431 = vmatprep.subr.mxu0 0.0
    %2432 = vmatpush1.msra.mxu0 0.0
    %2433 = vmatprep.subr.mxu0 0.0
    %2434 = vmatpush1.msra.mxu0 0.0
    %2435 = vmatprep.subr.mxu0 0.0
    %2436 = vmatpush1.msra.mxu0 0.0
    %2437 = vmatprep.subr.mxu0 0.0
    %2438 = vmatpush1.msra.mxu0 0.0
    %2439 = vmatprep.subr.mxu0 0.0
    %2440 = vmatpush1.msra.mxu0 0.0
    %2441 = vmatprep.subr.mxu0 0.0
    %2442 = vmatpush1.msra.mxu0 0.0
    %2443 = vmatprep.subr.mxu0 0.0
    %2444 = vmatpush1.msra.mxu0 0.0
    %2445 = vmatprep.subr.mxu0 0.0
    %2446 = vmatpush1.msra.mxu0 0.0
    %2447 = vmatprep.subr.mxu0 0.0
    %2448 = vmatpush1.msra.mxu0 0.0
    %2449 = vmatprep.subr.mxu0 0.0
    %2450 = vmatpush1.msra.mxu0 0.0
    %2451 = vmatprep.subr.mxu0 0.0
    %2452 = vmatpush1.msra.mxu0 0.0
    %2453 = vmatprep.subr.mxu0 0.0
    %2454 = vmatpush1.msra.mxu0 0.0
    %2455 = vmatprep.subr.mxu0 0.0
    %2456 = vmatpush1.msra.mxu0 0.0
    %2457 = vmatprep.subr.mxu0 0.0
    %2458 = vmatpush1.msra.mxu0 0.0
    %2459 = vmatprep.mubr.f32.mxu0 0.0
    %2460 = vmatmul.mubr.f32.gmra.mrb[0].mxu0 %v1249
    %v2461 = vpop.f32.mrb[0].mxu0
    %v2462 = vadd.f32 0.0, %v2461
    %v2463 = vpop.f32.mrb[0].mxu0
    %2464 = vmatprep.mubr.f32.mxu0 0.0
    %2465 = vmatmul.mubr.f32.gmra.mrb[0].mxu0 %v1252
    %v2466 = vpop.f32.mrb[0].mxu0
    %v2467 = vadd.f32 0.0, %v2466
    %v2468 = vpop.f32.mrb[0].mxu0
    %2469 = vmatprep.mubr.f32.mxu0 0.0
    %2470 = vmatmul.mubr.f32.gmra.mrb[0].mxu0 %v1255
    %v2471 = vpop.f32.mrb[0].mxu0
    %v2472 = vadd.f32 0.0, %v2471
    %v2473 = vpop.f32.mrb[0].mxu0
    %2474 = vdwg.mxu0
    %v2475 = vadd.f32 %v1530, %v2462
    %v2476 = vadd.f32 %v1531, %v2467
    %v2477 = vadd.f32 %v1532, %v2472
    %v2478 = vld [vmem:[%s14] sm:$0xff]
    %v2479 = vld [vmem:[%s14 + $0x8] sm:$0xff]
    %v2480 = vld [vmem:[%s14 + $0x10] sm:$0xff]
    %v2481 = vld [vmem:[%s14 + $0x18] sm:$0xff]
    %v2482 = vld [vmem:[%s14 + $0x20] sm:$0xff]
    %v2483 = vld [vmem:[%s14 + $0x28] sm:$0xff]
    %v2484 = vld [vmem:[%s14 + $0x30] sm:$0xff]
    %v2485 = vld [vmem:[%s14 + $0x38] sm:$0xff]
    %v2486 = vld [vmem:[%s15] sm:$0xff]
    %v2487 = vld [vmem:[%s15 + $0x8] sm:$0xff]
    %v2488 = vld [vmem:[%s15 + $0x10] sm:$0xff]
    %v2489 = vld [vmem:[%s15 + $0x18] sm:$0xff]
    %v2490 = vld [vmem:[%s15 + $0x20] sm:$0xff]
    %v2491 = vld [vmem:[%s15 + $0x28] sm:$0xff]
    %v2492 = vld [vmem:[%s15 + $0x30] sm:$0xff]
    %v2493 = vld [vmem:[%s15 + $0x38] sm:$0xff]
    %v2494 = vmul.f32 %v256, %v256
    %vm2495 = vcmask 523264
    %v2497 = vsel %vm2495, %v2494, 0
    %2499 = vmatprep.subr.mxu0 0.0
    %2500 = vmatpush1.msra.mxu0 %v2478
    %2501 = vmatprep.subr.mxu0 0.0
    %2502 = vmatpush1.msra.mxu0 %v2479
    %2503 = vmatprep.subr.mxu0 0.0
    %2504 = vmatpush1.msra.mxu0 %v2480
    %2505 = vmatprep.subr.mxu0 0.0
    %2506 = vmatpush1.msra.mxu0 %v2481
    %2507 = vmatprep.subr.mxu0 0.0
    %2508 = vmatpush1.msra.mxu0 %v2482
    %2509 = vmatprep.subr.mxu0 0.0
    %2510 = vmatpush1.msra.mxu0 %v2483
    %2511 = vmatprep.subr.mxu0 0.0
    %2512 = vmatpush1.msra.mxu0 %v2484
    %2513 = vmatprep.subr.mxu0 0.0
    %2514 = vmatpush1.msra.mxu0 %v2485
    %2515 = vmatprep.subr.mxu0 0.0
    %2516 = vmatpush1.msra.mxu0 0.0
    %2517 = vmatprep.subr.mxu0 0.0
    %2518 = vmatpush1.msra.mxu0 0.0
    %2519 = vmatprep.subr.mxu0 0.0
    %2520 = vmatpush1.msra.mxu0 0.0
    %2521 = vmatprep.subr.mxu0 0.0
    %2522 = vmatpush1.msra.mxu0 0.0
    %2523 = vmatprep.subr.mxu0 0.0
    %2524 = vmatpush1.msra.mxu0 0.0
    %2525 = vmatprep.subr.mxu0 0.0
    %2526 = vmatpush1.msra.mxu0 0.0
    %2527 = vmatprep.subr.mxu0 0.0
    %2528 = vmatpush1.msra.mxu0 0.0
    %2529 = vmatprep.subr.mxu0 0.0
    %2530 = vmatpush1.msra.mxu0 0.0
    %2531 = vmatprep.subr.mxu0 0.0
    %2532 = vmatpush1.msra.mxu0 0.0
    %2533 = vmatprep.subr.mxu0 0.0
    %2534 = vmatpush1.msra.mxu0 0.0
    %2535 = vmatprep.subr.mxu0 0.0
    %2536 = vmatpush1.msra.mxu0 0.0
    %2537 = vmatprep.subr.mxu0 0.0
    %2538 = vmatpush1.msra.mxu0 0.0
    %2539 = vmatprep.subr.mxu0 0.0
    %2540 = vmatpush1.msra.mxu0 0.0
    %2541 = vmatprep.subr.mxu0 0.0
    %2542 = vmatpush1.msra.mxu0 0.0
    %2543 = vmatprep.subr.mxu0 0.0
    %2544 = vmatpush1.msra.mxu0 0.0
    %2545 = vmatprep.subr.mxu0 0.0
    %2546 = vmatpush1.msra.mxu0 0.0
    %2547 = vmatprep.subr.mxu0 0.0
    %2548 = vmatpush1.msra.mxu0 0.0
    %2549 = vmatprep.subr.mxu0 0.0
    %2550 = vmatpush1.msra.mxu0 0.0
    %2551 = vmatprep.subr.mxu0 0.0
    %2552 = vmatpush1.msra.mxu0 0.0
    %2553 = vmatprep.subr.mxu0 0.0
    %2554 = vmatpush1.msra.mxu0 0.0
    %2555 = vmatprep.subr.mxu0 0.0
    %2556 = vmatpush1.msra.mxu0 0.0
    %2557 = vmatprep.subr.mxu0 0.0
    %2558 = vmatpush1.msra.mxu0 0.0
    %2559 = vmatprep.subr.mxu0 0.0
    %2560 = vmatpush1.msra.mxu0 0.0
    %2561 = vmatprep.subr.mxu0 0.0
    %2562 = vmatpush1.msra.mxu0 0.0
    %2563 = vmatprep.mubr.f32.mxu0 0.0
    %2564 = vmatmul.mubr.f32.gmra.mrb[0].mxu0 %v2497
    %v2565 = vpop.f32.mrb[0].mxu0
    %v2566 = vadd.f32 0.0, %v2565
    %v2567 = vpop.f32.mrb[0].mxu0
    %2568 = vdwg.mxu0
    %v2569 = vmax.f32 %v2566, 1e-24
    %v2570 = vrsqrt.pop %v2569
    %v2571 = vmul.f32 %v256, %v2570
    %v2573 = vsel %vm2495, %v2571, 0
    %2575 = vmatprep.subr.mxu0 0.0
    %2576 = vmatpush1.msra.mxu0 %v2486
    %2577 = vmatprep.subr.mxu0 0.0
    %2578 = vmatpush1.msra.mxu0 %v2487
    %2579 = vmatprep.subr.mxu0 0.0
    %2580 = vmatpush1.msra.mxu0 %v2488
    %2581 = vmatprep.subr.mxu0 0.0
    %2582 = vmatpush1.msra.mxu0 %v2489
    %2583 = vmatprep.subr.mxu0 0.0
    %2584 = vmatpush1.msra.mxu0 %v2490
    %2585 = vmatprep.subr.mxu0 0.0
    %2586 = vmatpush1.msra.mxu0 %v2491
    %2587 = vmatprep.subr.mxu0 0.0
    %2588 = vmatpush1.msra.mxu0 %v2492
    %2589 = vmatprep.subr.mxu0 0.0
    %2590 = vmatpush1.msra.mxu0 %v2493
    %2591 = vmatprep.subr.mxu0 0.0
    %2592 = vmatpush1.msra.mxu0 0.0
    %2593 = vmatprep.subr.mxu0 0.0
    %2594 = vmatpush1.msra.mxu0 0.0
    %2595 = vmatprep.subr.mxu0 0.0
    %2596 = vmatpush1.msra.mxu0 0.0
    %2597 = vmatprep.subr.mxu0 0.0
    %2598 = vmatpush1.msra.mxu0 0.0
    %2599 = vmatprep.subr.mxu0 0.0
    %2600 = vmatpush1.msra.mxu0 0.0
    %2601 = vmatprep.subr.mxu0 0.0
    %2602 = vmatpush1.msra.mxu0 0.0
    %2603 = vmatprep.subr.mxu0 0.0
    %2604 = vmatpush1.msra.mxu0 0.0
    %2605 = vmatprep.subr.mxu0 0.0
    %2606 = vmatpush1.msra.mxu0 0.0
    %2607 = vmatprep.subr.mxu0 0.0
    %2608 = vmatpush1.msra.mxu0 0.0
    %2609 = vmatprep.subr.mxu0 0.0
    %2610 = vmatpush1.msra.mxu0 0.0
    %2611 = vmatprep.subr.mxu0 0.0
    %2612 = vmatpush1.msra.mxu0 0.0
    %2613 = vmatprep.subr.mxu0 0.0
    %2614 = vmatpush1.msra.mxu0 0.0
    %2615 = vmatprep.subr.mxu0 0.0
    %2616 = vmatpush1.msra.mxu0 0.0
    %2617 = vmatprep.subr.mxu0 0.0
    %2618 = vmatpush1.msra.mxu0 0.0
    %2619 = vmatprep.subr.mxu0 0.0
    %2620 = vmatpush1.msra.mxu0 0.0
    %2621 = vmatprep.subr.mxu0 0.0
    %2622 = vmatpush1.msra.mxu0 0.0
    %2623 = vmatprep.subr.mxu0 0.0
    %2624 = vmatpush1.msra.mxu0 0.0
    %2625 = vmatprep.subr.mxu0 0.0
    %2626 = vmatpush1.msra.mxu0 0.0
    %2627 = vmatprep.subr.mxu0 0.0
    %2628 = vmatpush1.msra.mxu0 0.0
    %2629 = vmatprep.subr.mxu0 0.0
    %2630 = vmatpush1.msra.mxu0 0.0
    %2631 = vmatprep.subr.mxu0 0.0
    %2632 = vmatpush1.msra.mxu0 0.0
    %2633 = vmatprep.subr.mxu0 0.0
    %2634 = vmatpush1.msra.mxu0 0.0
    %2635 = vmatprep.subr.mxu0 0.0
    %2636 = vmatpush1.msra.mxu0 0.0
    %2637 = vmatprep.subr.mxu0 0.0
    %2638 = vmatpush1.msra.mxu0 0.0
    %2639 = vmatprep.mubr.f32.mxu0 0.0
    %2640 = vmatmul.mubr.f32.gmra.mrb[0].mxu0 %v2573
    %v2641 = vpop.f32.mrb[0].mxu0
    %v2642 = vadd.f32 0.0, %v2641
    %v2643 = vpop.f32.mrb[0].mxu0
    %2644 = vdwg.mxu0
    %v2645 = vmul.f32 %v2642, 0.5
    %v2646 = vadd.f32 %v2475, %v2645
    %2647 = vst.msk [vmem:[%s16] sm:$0xff] %vm774, %v2646
    %v2648 = vmul.f32 %v335, %v335
    %v2649 = vmul.f32 %v340, %v340
    %v2651 = vsel %vm2495, %v2648, 0
    %v2654 = vsel %vm2495, %v2649, 0
    %2656 = vmatprep.subr.mxu0 0.0
    %2657 = vmatpush1.msra.mxu0 %v2478
    %2658 = vmatprep.subr.mxu0 0.0
    %2659 = vmatpush1.msra.mxu0 %v2479
    %2660 = vmatprep.subr.mxu0 0.0
    %2661 = vmatpush1.msra.mxu0 %v2480
    %2662 = vmatprep.subr.mxu0 0.0
    %2663 = vmatpush1.msra.mxu0 %v2481
    %2664 = vmatprep.subr.mxu0 0.0
    %2665 = vmatpush1.msra.mxu0 %v2482
    %2666 = vmatprep.subr.mxu0 0.0
    %2667 = vmatpush1.msra.mxu0 %v2483
    %2668 = vmatprep.subr.mxu0 0.0
    %2669 = vmatpush1.msra.mxu0 %v2484
    %2670 = vmatprep.subr.mxu0 0.0
    %2671 = vmatpush1.msra.mxu0 %v2485
    %2672 = vmatprep.subr.mxu0 0.0
    %2673 = vmatpush1.msra.mxu0 0.0
    %2674 = vmatprep.subr.mxu0 0.0
    %2675 = vmatpush1.msra.mxu0 0.0
    %2676 = vmatprep.subr.mxu0 0.0
    %2677 = vmatpush1.msra.mxu0 0.0
    %2678 = vmatprep.subr.mxu0 0.0
    %2679 = vmatpush1.msra.mxu0 0.0
    %2680 = vmatprep.subr.mxu0 0.0
    %2681 = vmatpush1.msra.mxu0 0.0
    %2682 = vmatprep.subr.mxu0 0.0
    %2683 = vmatpush1.msra.mxu0 0.0
    %2684 = vmatprep.subr.mxu0 0.0
    %2685 = vmatpush1.msra.mxu0 0.0
    %2686 = vmatprep.subr.mxu0 0.0
    %2687 = vmatpush1.msra.mxu0 0.0
    %2688 = vmatprep.subr.mxu0 0.0
    %2689 = vmatpush1.msra.mxu0 0.0
    %2690 = vmatprep.subr.mxu0 0.0
    %2691 = vmatpush1.msra.mxu0 0.0
    %2692 = vmatprep.subr.mxu0 0.0
    %2693 = vmatpush1.msra.mxu0 0.0
    %2694 = vmatprep.subr.mxu0 0.0
    %2695 = vmatpush1.msra.mxu0 0.0
    %2696 = vmatprep.subr.mxu0 0.0
    %2697 = vmatpush1.msra.mxu0 0.0
    %2698 = vmatprep.subr.mxu0 0.0
    %2699 = vmatpush1.msra.mxu0 0.0
    %2700 = vmatprep.subr.mxu0 0.0
    %2701 = vmatpush1.msra.mxu0 0.0
    %2702 = vmatprep.subr.mxu0 0.0
    %2703 = vmatpush1.msra.mxu0 0.0
    %2704 = vmatprep.subr.mxu0 0.0
    %2705 = vmatpush1.msra.mxu0 0.0
    %2706 = vmatprep.subr.mxu0 0.0
    %2707 = vmatpush1.msra.mxu0 0.0
    %2708 = vmatprep.subr.mxu0 0.0
    %2709 = vmatpush1.msra.mxu0 0.0
    %2710 = vmatprep.subr.mxu0 0.0
    %2711 = vmatpush1.msra.mxu0 0.0
    %2712 = vmatprep.subr.mxu0 0.0
    %2713 = vmatpush1.msra.mxu0 0.0
    %2714 = vmatprep.subr.mxu0 0.0
    %2715 = vmatpush1.msra.mxu0 0.0
    %2716 = vmatprep.subr.mxu0 0.0
    %2717 = vmatpush1.msra.mxu0 0.0
    %2718 = vmatprep.subr.mxu0 0.0
    %2719 = vmatpush1.msra.mxu0 0.0
    %2720 = vmatprep.mubr.f32.mxu0 0.0
    %2721 = vmatmul.mubr.f32.gmra.mrb[0].mxu0 %v2651
    %v2722 = vpop.f32.mrb[0].mxu0
    %v2723 = vadd.f32 0.0, %v2722
    %v2724 = vpop.f32.mrb[0].mxu0
    %2725 = vmatprep.mubr.f32.mxu0 0.0
    %2726 = vmatmul.mubr.f32.gmra.mrb[0].mxu0 %v2654
    %v2727 = vpop.f32.mrb[0].mxu0
    %v2728 = vadd.f32 0.0, %v2727
    %v2729 = vpop.f32.mrb[0].mxu0
    %2730 = vdwg.mxu0
    %v2731 = vmax.f32 %v2723, 1e-24
    %v2732 = vmax.f32 %v2728, 1e-24
    %v2733 = vrsqrt.pop %v2731
    %v2734 = vrsqrt.pop %v2732
    %v2735 = vmul.f32 %v335, %v2733
    %v2736 = vmul.f32 %v340, %v2734
    %v2738 = vsel %vm2495, %v2735, 0
    %v2741 = vsel %vm2495, %v2736, 0
    %2743 = vmatprep.subr.mxu0 0.0
    %2744 = vmatpush1.msra.mxu0 %v2486
    %2745 = vmatprep.subr.mxu0 0.0
    %2746 = vmatpush1.msra.mxu0 %v2487
    %2747 = vmatprep.subr.mxu0 0.0
    %2748 = vmatpush1.msra.mxu0 %v2488
    %2749 = vmatprep.subr.mxu0 0.0
    %2750 = vmatpush1.msra.mxu0 %v2489
    %2751 = vmatprep.subr.mxu0 0.0
    %2752 = vmatpush1.msra.mxu0 %v2490
    %2753 = vmatprep.subr.mxu0 0.0
    %2754 = vmatpush1.msra.mxu0 %v2491
    %2755 = vmatprep.subr.mxu0 0.0
    %2756 = vmatpush1.msra.mxu0 %v2492
    %2757 = vmatprep.subr.mxu0 0.0
    %2758 = vmatpush1.msra.mxu0 %v2493
    %2759 = vmatprep.subr.mxu0 0.0
    %2760 = vmatpush1.msra.mxu0 0.0
    %2761 = vmatprep.subr.mxu0 0.0
    %2762 = vmatpush1.msra.mxu0 0.0
    %2763 = vmatprep.subr.mxu0 0.0
    %2764 = vmatpush1.msra.mxu0 0.0
    %2765 = vmatprep.subr.mxu0 0.0
    %2766 = vmatpush1.msra.mxu0 0.0
    %2767 = vmatprep.subr.mxu0 0.0
    %2768 = vmatpush1.msra.mxu0 0.0
    %2769 = vmatprep.subr.mxu0 0.0
    %2770 = vmatpush1.msra.mxu0 0.0
    %2771 = vmatprep.subr.mxu0 0.0
    %2772 = vmatpush1.msra.mxu0 0.0
    %2773 = vmatprep.subr.mxu0 0.0
    %2774 = vmatpush1.msra.mxu0 0.0
    %2775 = vmatprep.subr.mxu0 0.0
    %2776 = vmatpush1.msra.mxu0 0.0
    %2777 = vmatprep.subr.mxu0 0.0
    %2778 = vmatpush1.msra.mxu0 0.0
    %2779 = vmatprep.subr.mxu0 0.0
    %2780 = vmatpush1.msra.mxu0 0.0
    %2781 = vmatprep.subr.mxu0 0.0
    %2782 = vmatpush1.msra.mxu0 0.0
    %2783 = vmatprep.subr.mxu0 0.0
    %2784 = vmatpush1.msra.mxu0 0.0
    %2785 = vmatprep.subr.mxu0 0.0
    %2786 = vmatpush1.msra.mxu0 0.0
    %2787 = vmatprep.subr.mxu0 0.0
    %2788 = vmatpush1.msra.mxu0 0.0
    %2789 = vmatprep.subr.mxu0 0.0
    %2790 = vmatpush1.msra.mxu0 0.0
    %2791 = vmatprep.subr.mxu0 0.0
    %2792 = vmatpush1.msra.mxu0 0.0
    %2793 = vmatprep.subr.mxu0 0.0
    %2794 = vmatpush1.msra.mxu0 0.0
    %2795 = vmatprep.subr.mxu0 0.0
    %2796 = vmatpush1.msra.mxu0 0.0
    %2797 = vmatprep.subr.mxu0 0.0
    %2798 = vmatpush1.msra.mxu0 0.0
    %2799 = vmatprep.subr.mxu0 0.0
    %2800 = vmatpush1.msra.mxu0 0.0
    %2801 = vmatprep.subr.mxu0 0.0
    %2802 = vmatpush1.msra.mxu0 0.0
    %2803 = vmatprep.subr.mxu0 0.0
    %2804 = vmatpush1.msra.mxu0 0.0
    %2805 = vmatprep.subr.mxu0 0.0
    %2806 = vmatpush1.msra.mxu0 0.0
    %2807 = vmatprep.mubr.f32.mxu0 0.0
    %2808 = vmatmul.mubr.f32.gmra.mrb[0].mxu0 %v2738
    %v2809 = vpop.f32.mrb[0].mxu0
    %v2810 = vadd.f32 0.0, %v2809
    %v2811 = vpop.f32.mrb[0].mxu0
    %2812 = vmatprep.mubr.f32.mxu0 0.0
    %2813 = vmatmul.mubr.f32.gmra.mrb[0].mxu0 %v2741
    %v2814 = vpop.f32.mrb[0].mxu0
    %v2815 = vadd.f32 0.0, %v2814
    %v2816 = vpop.f32.mrb[0].mxu0
    %2817 = vdwg.mxu0
    %v2818 = vmul.f32 %v2810, 0.5
    %v2819 = vmul.f32 %v2815, 0.5
    %v2820 = vadd.f32 %v2476, %v2818
    %v2821 = vadd.f32 %v2477, %v2819
    %2822 = vst.msk [vmem:[%s16 + $0x8] sm:$0xff] %vm774, %v2820
    %2823 = vst.msk [vmem:[%s16 + $0x10] sm:$0xff] %vm774, %v2821
    // Predicated region
    $region74: #{_forward_impl.1} parent=1 // pred_check
      _
    $region75: #{_forward_impl.1} parent=1 // pred_check_branch
      %2825 = sbr.rel (0) target = $region77
    $region76: #{_forward_impl.1} parent=1 // pred_region
      _
    $region77: #{_forward_impl.1} parent=1 // pred_fallthru
      _
    // Predicated region
    $region78: #{_forward_impl.1} parent=1 // pred_check
      _
    $region79: #{_forward_impl.1} parent=1 // pred_check_branch
      %2827 = sbr.rel (0) target = $region81
    $region80: #{_forward_impl.1} parent=1 // pred_region
      _
    $region81: #{_forward_impl.1} parent=1 // pred_fallthru
      _
    %2828 = vsyncpa [#allocation3], 1
    %2829 = vsyncpa [#allocation5], 1

</llo_original>
